<compile_context>
chip_gen: v5e
topology: v5e:2x2
jax: 0.10.0
libtpu: 0.0.40
codegen_flags: <defaults>
</compile_context>

<pallas_src>
import functools

import jax
import jax.numpy as jnp
from jax.experimental import pallas as pl
from jax.experimental.pallas import tpu as pltpu


LANE = 128          # lane-dense output-channel padding
TILE_M_CAP = 1024   # max rows per grid step (bounded per-step VMEM)
BN_EPS = 1e-5


def _pad_to(x, mult):
    return ((x + mult - 1) // mult) * mult


def _pick_tile(m, cap=TILE_M_CAP):
    """Largest divisor of m that is <= cap and a multiple of 8; else m (whole block)."""
    if m <= cap:
        return m
    for d in range(cap - cap % 8, 7, -8):
        if m % d == 0:
            return d
    return m


def _vmem_limit_bytes():
    # Generation-aware scoped-VMEM budget (v5e/v6e: 128 MiB phys, v7x: 64 MiB phys).
    try:
        cap = pltpu.get_tpu_info().vmem_capacity_bytes
        return int(min(cap // 2, 64 * 1024 * 1024))
    except Exception:
        return 32 * 1024 * 1024


VMEM_LIMIT = _vmem_limit_bytes()


def _vmem_spec():
    return pl.BlockSpec(memory_space=pltpu.MemorySpace.VMEM)


def _apply_act(y, act, slope=0.2):
    # LeakyReLU slope 0.2 matches nn.LeakyReLU(0.2) in the reference Encoder.
    if act == "none":
        return y
    if act == "relu":
        return jnp.maximum(y, 0.0)
    if act == "leaky_relu":
        return jnp.where(y > 0, y, slope * y)
    if act == "tanh":
        return jnp.tanh(y)
    raise ValueError(act)


# ----------------------------------------------------------------------------- kernel A:
# gridded (phase, M-tile) matmul + fused activation (no BN).
def _mm_act_kernel(a_ref, w_ref, o_ref, *, act):
    y = jnp.dot(a_ref[0], w_ref[0], preferred_element_type=jnp.float32)
    o_ref[0] = _apply_act(y, act).astype(o_ref.dtype)


def phase_matmul_act(a, w, act):
    p, m, k = a.shape
    n = w.shape[-1]
    tm = _pick_tile(m)
    return pl.pallas_call(
        functools.partial(_mm_act_kernel, act=act),
        grid=(p, m // tm),
        in_specs=[pl.BlockSpec((1, tm, k), lambda pi, i: (pi, i, 0)),
                  pl.BlockSpec((1, k, n), lambda pi, i: (pi, 0, 0))],
        out_specs=pl.BlockSpec((1, tm, n), lambda pi, i: (pi, i, 0)),
        out_shape=jax.ShapeDtypeStruct((p, m, n), jnp.bfloat16),
        compiler_params=pltpu.CompilerParams(
            dimension_semantics=("parallel", "parallel"),
            vmem_limit_bytes=VMEM_LIMIT),
        cost_estimate=pl.CostEstimate(
            flops=2 * p * m * k * n,
            transcendentals=(p * m * n if act == "tanh" else 0),
            bytes_accessed=2 * (p * m * k + p * k * n + p * m * n)),
    )(a, w)


# ----------------------------------------------------------------------------- kernel B1:
# BN pass A: gridded matmul writing pre-BN y (bf16) + per-tile partial sum / sum-of-squares.
def _mm_stats_kernel(a_ref, w_ref, y_ref, st_ref):
    y = jnp.dot(a_ref[0], w_ref[0], preferred_element_type=jnp.float32)
    y_ref[0] = y.astype(y_ref.dtype)
    st_ref[0, 0, 0:1, :] = jnp.sum(y, axis=0, keepdims=True)
    st_ref[0, 0, 1:2, :] = jnp.sum(y * y, axis=0, keepdims=True)


def phase_matmul_stats(a, w):
    p, m, k = a.shape
    n = w.shape[-1]
    tm = _pick_tile(m)
    mt = m // tm
    return pl.pallas_call(
        _mm_stats_kernel,
        grid=(p, mt),
        in_specs=[pl.BlockSpec((1, tm, k), lambda pi, i: (pi, i, 0)),
                  pl.BlockSpec((1, k, n), lambda pi, i: (pi, 0, 0))],
        out_specs=(pl.BlockSpec((1, tm, n), lambda pi, i: (pi, i, 0)),
                   pl.BlockSpec((1, 1, 2, n), lambda pi, i: (pi, i, 0, 0))),
        out_shape=(jax.ShapeDtypeStruct((p, m, n), jnp.bfloat16),
                   jax.ShapeDtypeStruct((p, mt, 2, n), jnp.float32)),
        compiler_params=pltpu.CompilerParams(
            dimension_semantics=("parallel", "parallel"),
            vmem_limit_bytes=VMEM_LIMIT),
        cost_estimate=pl.CostEstimate(
            flops=2 * p * m * k * n + 3 * p * m * n,
            transcendentals=0,
            bytes_accessed=2 * (p * m * k + p * k * n + p * m * n) + 4 * p * mt * 2 * n),
    )(a, w)


# ----------------------------------------------------------------------------- kernel B2:
# BN pass B: gridded scale/shift/activation (scale/shift recomputed per tile from tiny sums).
def _bn_act_kernel(y_ref, s1_ref, s2_ref, g_ref, b_ref, o_ref, *, act, inv_n):
    mean = s1_ref[...] * inv_n
    var = jnp.maximum(s2_ref[...] * inv_n - mean * mean, 0.0)
    scale = g_ref[...] * jax.lax.rsqrt(var + BN_EPS)
    shift = b_ref[...] - mean * scale
    y = y_ref[0].astype(jnp.float32)
    o_ref[0] = _apply_act(y * scale + shift, act).astype(o_ref.dtype)


def phase_bn_act(y, s1, s2, gamma, beta, n_rows, act):
    p, m, n = y.shape
    tm = _pick_tile(m)
    return pl.pallas_call(
        functools.partial(_bn_act_kernel, act=act, inv_n=1.0 / n_rows),
        grid=(p, m // tm),
        in_specs=[pl.BlockSpec((1, tm, n), lambda pi, i: (pi, i, 0)),
                  pl.BlockSpec((1, n), lambda pi, i: (0, 0)),
                  pl.BlockSpec((1, n), lambda pi, i: (0, 0)),
                  pl.BlockSpec((1, n), lambda pi, i: (0, 0)),
                  pl.BlockSpec((1, n), lambda pi, i: (0, 0))],
        out_specs=pl.BlockSpec((1, tm, n), lambda pi, i: (pi, i, 0)),
        out_shape=jax.ShapeDtypeStruct((p, m, n), jnp.bfloat16),
        compiler_params=pltpu.CompilerParams(
            dimension_semantics=("parallel", "parallel"),
            vmem_limit_bytes=VMEM_LIMIT),
        cost_estimate=pl.CostEstimate(
            flops=4 * p * m * n,
            transcendentals=(p * m * n if act == "tanh" else 0),
            bytes_accessed=4 * p * m * n),
    )(y, s1, s2, gamma, beta)


def phase_conv(a, w, gamma, beta, act, use_bn):
    """a: (P, M, Kp) bf16, w: (P, Kp, Np) bf16 -> (P, M, Np) bf16, optional fused BN+act."""
    p, m, _ = a.shape
    if not use_bn:
        return phase_matmul_act(a, w, act)
    y, st = phase_matmul_stats(a, w)
    # TODO(synk): E[x^2]-E[x]^2 in f32 can cancel when |mean| >> std; switch to a centered
    #             second pass / Welford merge of the per-tile moments if that regime appears.
    s1 = jnp.sum(st[:, :, 0, :], axis=(0, 1)).reshape(1, -1)
    s2 = jnp.sum(st[:, :, 1, :], axis=(0, 1)).reshape(1, -1)
    return phase_bn_act(y, s1, s2, gamma, beta, n_rows=p * m, act=act)


# ----------------------------------------------------------------------------- kernel C:
# fused fc1 + fc2 + reparameterize (whole-block; M = batch, tiny).
def _encode_heads_kernel(h_ref, w_ref, b_ref, e_ref, mu_ref, lv_ref, z_ref, *, hp):
    y = jnp.dot(h_ref[...], w_ref[...], preferred_element_type=jnp.float32) + b_ref[...]
    mu = y[:, :hp]
    lv = y[:, hp:]
    mu_ref[...] = mu
    lv_ref[...] = lv
    z_ref[...] = mu + e_ref[...] * jnp.exp(0.5 * lv)


def encode_heads(h, wcat, bcat, eps, hp):
    b = h.shape[0]
    shp = jax.ShapeDtypeStruct((b, hp), jnp.float32)
    return pl.pallas_call(
        functools.partial(_encode_heads_kernel, hp=hp),
        out_shape=(shp, shp, shp),
        in_specs=[_vmem_spec()] * 4,
        out_specs=(_vmem_spec(), _vmem_spec(), _vmem_spec()),
        compiler_params=pltpu.CompilerParams(vmem_limit_bytes=VMEM_LIMIT),
    )(h, wcat, bcat, eps)


# ----------------------------------------------------------------------------- kernel D:
# decoder head ConvTranspose2d(hidden, f, k, 1, 0) on a 1x1 input: one matmul with the k*k
# per-pixel weight matrices concatenated along N, BN stats shared across the k*k pixels.
def _dec1x1_kernel(z_ref, w_ref, g_ref, b_ref, o_ref, *, npix, coutp, act, use_bn):
    y = jnp.dot(z_ref[...], w_ref[...], preferred_element_type=jnp.float32)
    if not use_bn:
        o_ref[...] = _apply_act(y, act).astype(o_ref.dtype)
        return
    tot = jnp.zeros((1, coutp), jnp.float32)
    tot2 = jnp.zeros((1, coutp), jnp.float32)
    for pix in range(npix):
        blk = y[:, pix * coutp:(pix + 1) * coutp]
        tot = tot + jnp.sum(blk, axis=0, keepdims=True)
        tot2 = tot2 + jnp.sum(blk * blk, axis=0, keepdims=True)
    inv_n = 1.0 / (npix * y.shape[0])
    mean = tot * inv_n
    var = jnp.maximum(tot2 * inv_n - mean * mean, 0.0)
    scale = g_ref[...] * jax.lax.rsqrt(var + BN_EPS)
    shift = b_ref[...] - mean * scale
    for pix in range(npix):
        blk = y[:, pix * coutp:(pix + 1) * coutp]
        o_ref[:, pix * coutp:(pix + 1) * coutp] = _apply_act(
            blk * scale + shift, act).astype(o_ref.dtype)


def deconv_from_1x1(z, layer):
    # z: (B, hp) bf16 -> (B, k, k, coutp) bf16
    b = z.shape[0]
    k = layer["k"]
    coutp = layer["coutp"]
    npix = k * k
    y = pl.pallas_call(
        functools.partial(_dec1x1_kernel, npix=npix, coutp=coutp,
                          act=layer["act"], use_bn=layer["use_bn"]),
        out_shape=jax.ShapeDtypeStruct((b, npix * coutp), jnp.bfloat16),
        in_specs=[_vmem_spec()] * 4,
        out_specs=_vmem_spec(),
        compiler_params=pltpu.CompilerParams(vmem_limit_bytes=VMEM_LIMIT),
    )(z, layer["wn"], layer["gamma"], layer["beta"])
    return y.reshape(b, k, k, coutp)


# ----------------------------------------------------------------------------- glue (NHWC)
# TODO(synk): im2col / phase tap assembly is still XLA glue (k*k-expanded col in HBM); with the
#             real-cin packing the expansion is now k*k*cin (<=128 here) instead of k*k*128,
#             but at larger sizes the tap accumulation should move into the kernel (grid over
#             taps with an f32 accumulator, or a space-to-depth pre-layout).
def conv2d_nhwc(x, layer):
    cin = layer["cin"]
    x = x[..., :cin]                                   # drop lane padding from the prev layer
    b, h, w, _ = x.shape
    k, stride, pad = layer["k"], layer["stride"], layer["pad"]
    xp = jnp.pad(x, ((0, 0), (pad, pad), (pad, pad), (0, 0))) if pad else x
    ho = (h + 2 * pad - k) // stride + 1
    wo = (w + 2 * pad - k) // stride + 1
    taps = []
    for di in range(k):
        for dj in range(k):
            taps.append(xp[:, di: di + stride * (ho - 1) + 1: stride,
                           dj: dj + stride * (wo - 1) + 1: stride, :])
    kp = layer["kp"]
    if kp > k * k * cin:
        taps.append(jnp.zeros((b, ho, wo, kp - k * k * cin), x.dtype))
    col = jnp.concatenate(taps, axis=-1).reshape(1, b * ho * wo, kp)
    y = phase_conv(col, layer["wm"][None], layer["gamma"], layer["beta"],
                   act=layer["act"], use_bn=layer["use_bn"])[0]
    return y.reshape(b, ho, wo, layer["coutp"])


def deconv_s2(x, layer):
    # ConvTranspose2d(cin, cout, 4, 2, 1): sub-pixel decomposition into 4 output phases,
    # each a stride-1 2x2-tap matmul; BN statistics shared across the 4 phases.
    cin = layer["cin"]
    x = x[..., :cin]
    b, h, w, _ = x.shape
    xp = jnp.pad(x, ((0, 0), (1, 1), (1, 1), (0, 0)))
    kp = layer["kp"]
    phases = []
    for py in range(2):
        for px in range(2):
            taps = [xp[:, py + a: py + a + h, px + bb: px + bb + w, :]
                    for a in range(2) for bb in range(2)]
            if kp > 4 * cin:
                taps.append(jnp.zeros((b, h, w, kp - 4 * cin), x.dtype))
            phases.append(jnp.concatenate(taps, axis=-1).reshape(b * h * w, kp))
    a_mat = jnp.stack(phases, axis=0)                                # (4, B*H*W, Kp)
    y = phase_conv(a_mat, layer["wp"], layer["gamma"], layer["beta"],
                   act=layer["act"], use_bn=layer["use_bn"])         # (4, B*H*W, Np)
    n = y.shape[-1]
    # TODO(synk): phase interleave is still an XLA transpose; a direct output index_map into a
    #             (B,H,2,W,2,N) buffer would pad the minor (2,N) dims 4x in HBM, so keep it.
    return (y.reshape(2, 2, b, h, w, n)
              .transpose(2, 3, 0, 4, 1, 5)
              .reshape(b, 2 * h, 2 * w, n))


# ----------------------------------------------------------------------------- parameters
def init_params(key, image_size, label_size, nf, hidden_size=None, nc=3):
    keys = list(jax.random.split(key, 64))
    kit = iter(keys)

    def nrm(shape, scale=0.1):
        return scale * jax.random.normal(next(kit), shape, jnp.float32)

    # ---- Encoder config (mirrors Encoder.__init__) ----
    enc_cfg = [dict(cin=nc, cout=nf, k=4, stride=2, pad=1, bn=False, act="leaky_relu")]
    s, f = image_size, nf
    while True:
        s = s / 2
        if s > 4:
            enc_cfg.append(dict(cin=f, cout=f * 2, k=4, stride=2, pad=1, bn=True,
                                act="leaky_relu"))
            f = f * 2
        else:
            hidden = int(f) if hidden_size is None else hidden_size
            enc_cfg.append(dict(cin=f, cout=hidden, k=int(s), stride=1, pad=0, bn=False,
                                act="none"))
            break

    enc_layers = []
    for cfg in enc_cfg:
        cin, cout, k = cfg["cin"], cfg["cout"], cfg["k"]
        w = nrm((cout, cin, k, k))                         # torch Conv2d weight layout
        kreal = k * k * cin
        kp = _pad_to(kreal, LANE)
        coutp = _pad_to(cout, LANE)
        wt = jnp.transpose(w, (2, 3, 1, 0)).reshape(kreal, cout)   # (k,k,cin,cout) flat
        wm = (jnp.zeros((kp, coutp), jnp.float32)
                 .at[:kreal, :cout].set(wt).astype(jnp.bfloat16))
        gamma = jnp.zeros((1, coutp), jnp.float32).at[0, :cout].set(1.0)
        beta = jnp.zeros((1, coutp), jnp.float32)
        enc_layers.append(dict(wm=wm, k=k, stride=cfg["stride"], pad=cfg["pad"],
                               act=cfg["act"], use_bn=cfg["bn"], gamma=gamma, beta=beta,
                               cin=cin, cout=cout, coutp=coutp, kp=kp))

    # ---- Decoder config (mirrors Decoder.__init__: built reversed, then flipped) ----
    dec_cfg_rev = [dict(cin=nf, cout=nc, k=4, stride=2, pad=1, bn=False, act="tanh")]
    s, f = image_size, nf
    while True:
        s = s / 2
        if s > 4:
            dec_cfg_rev.append(dict(cin=f * 2, cout=f, k=4, stride=2, pad=1, bn=True,
                                    act="relu"))
            f = f * 2
        else:
            dec_cfg_rev.append(dict(cin=hidden, cout=f, k=int(s), stride=1, pad=0, bn=True,
                                    act="relu"))
            break
    dec_cfg = list(reversed(dec_cfg_rev))

    hp = _pad_to(hidden, LANE)
    dec_layers = []
    for idx, cfg in enumerate(dec_cfg):
        cin, cout, k = cfg["cin"], cfg["cout"], cfg["k"]
        w = nrm((cin, cout, k, k))                         # torch ConvTranspose2d layout
        coutp = _pad_to(cout, LANE)
        gamma = jnp.zeros((1, coutp), jnp.float32).at[0, :cout].set(1.0)
        beta = jnp.zeros((1, coutp), jnp.float32)
        if idx == 0:
            # 1x1 spatial input, stride 1, pad 0 -> k*k per-pixel matrices concatenated on N.
            wn = jnp.zeros((hp, k * k * coutp), jnp.float32)
            for i in range(k):
                for j in range(k):
                    pix = i * k + j
                    wn = wn.at[:cin, pix * coutp: pix * coutp + cout].set(w[:, :, i, j])
            dec_layers.append(dict(kind="from1x1", wn=wn.astype(jnp.bfloat16), k=k,
                                   act=cfg["act"], use_bn=cfg["bn"], gamma=gamma, beta=beta,
                                   cin=cin, cout=cout, coutp=coutp))
        else:
            # stride-2, k=4, pad=1 -> 4 output phases, each with 2x2 non-zero taps.
            kreal = 4 * cin
            kp = _pad_to(kreal, LANE)
            phases = []
            for py in range(2):
                for px in range(2):
                    taps = [w[:, :, 3 - py - 2 * a, 3 - px - 2 * bb]
                            for a in range(2) for bb in range(2)]          # each (cin, cout)
                    wtap = jnp.concatenate(taps, axis=0)                   # (4*cin, cout)
                    phases.append(jnp.zeros((kp, coutp), jnp.float32)
                                     .at[:kreal, :cout].set(wtap))
            wp = jnp.stack(phases, axis=0).astype(jnp.bfloat16)            # (4, kp, coutp)
            dec_layers.append(dict(kind="s2", wp=wp, k=k, act=cfg["act"], use_bn=cfg["bn"],
                                   gamma=gamma, beta=beta, cin=cin, cout=cout,
                                   coutp=coutp, kp=kp))

    # ---- fc1 / fc2 (concatenated for the fused head kernel) ----
    fc1_w, fc1_b = nrm((hidden, hidden)), nrm((hidden,))
    fc2_w, fc2_b = nrm((hidden, hidden)), nrm((hidden,))
    wcat = jnp.zeros((hp, 2 * hp), jnp.float32)
    wcat = wcat.at[:hidden, :hidden].set(fc1_w.T)
    wcat = wcat.at[:hidden, hp:hp + hidden].set(fc2_w.T)
    bcat = jnp.zeros((1, 2 * hp), jnp.float32)
    bcat = bcat.at[0, :hidden].set(fc1_b)
    bcat = bcat.at[0, hp:hp + hidden].set(fc2_b)

    return dict(enc=enc_layers, dec=dec_layers,
                fc_w=wcat.astype(jnp.bfloat16), fc_b=bcat,
                M=nrm((label_size, hidden)),   # present in __init__; unused in forward()
                hidden_size=hidden, hidden_pad=hp)


# ----------------------------------------------------------------------------- forward
# TODO(synk): BatchNorm running_mean/running_var buffers are not tracked (not needed for the
#             forward output); eps is supplied externally (torch draws it via randn_like).
def cnn_vae_forward(params, x, eps):
    b, nc = x.shape[0], x.shape[1]

    # boundary: NCHW -> NHWC once (real channels only), cast to bf16.
    h = jnp.transpose(x, (0, 2, 3, 1)).astype(jnp.bfloat16)

    # Encoder (conv + fused BN/act per layer)
    for layer in params["enc"]:
        h = conv2d_nhwc(h, layer)                 # last layer -> (B, 1, 1, hidden_pad)

    hp = params["hidden_pad"]
    hflat = h.reshape(b, hp)

    # fc1 + fc2 + reparameterize (single fused kernel)
    eps_p = jnp.pad(eps.astype(jnp.float32), ((0, 0), (0, hp - eps.shape[1])))
    mu_p, logvar_p, z_p = encode_heads(hflat, params["fc_w"], params["fc_b"], eps_p, hp)

    # Decoder
    d = z_p.astype(jnp.bfloat16)
    dec = params["dec"]
    d = deconv_from_1x1(d, dec[0])
    for layer in dec[1:]:
        d = deconv_s2(d, layer)

    # boundary: slice real channels, NHWC -> NCHW once, back to f32.
    out = jnp.transpose(d[..., :nc].astype(jnp.float32), (0, 3, 1, 2))
    hid = params["hidden_size"]
    return dict(output=out,
                embedding=z_p[:, :hid],
                vae_mu=mu_p[:, :hid],
                vae_logvar=logvar_p[:, :hid])


# ----------------------------------------------------------------------------- main
if __name__ == "__main__":
    key = jax.random.PRNGKey(0)
    kp_, kx, ke = jax.random.split(key, 3)

    B, nc, image_size, nf, label_size = 2, 3, 16, 4, 6
    params = init_params(kp_, image_size=image_size, label_size=label_size, nf=nf, nc=nc)
    hidden = params["hidden_size"]               # = 2 * nf = 8 for image_size=16

    x = jax.random.normal(kx, (B, nc, image_size, image_size), jnp.float32)
    eps = jax.random.normal(ke, (B, hidden), jnp.float32)

    fwd = jax.jit(lambda xx, ee: cnn_vae_forward(params, xx, ee))
    out = fwd(x, eps)
    jax.block_until_ready(out)

    assert out["output"].shape == (B, nc, image_size, image_size)
    assert out["embedding"].shape == (B, hidden)
    assert out["vae_mu"].shape == (B, hidden)
    assert out["vae_logvar"].shape == (B, hidden)
    assert out["output"].dtype == jnp.float32
    assert bool(jnp.all(jnp.isfinite(out["output"])))

    print("KERNEL_OK")
</pallas_src>

<mosaic_0001>
module attributes {stable_mosaic.version = 11 : i64} {
  func.func @_mm_act_kernel(%arg0: i32, %arg1: i32, %arg2: memref<1x128x128xbf16, #tpu.memory_space<vmem>>, %arg3: memref<1x128x128xbf16, #tpu.memory_space<vmem>>, %arg4: memref<1x128x128xbf16, #tpu.memory_space<vmem>>) attributes {dimension_semantics = [#tpu.dimension_semantics<parallel>, #tpu.dimension_semantics<parallel>], iteration_bounds = array<i64: 1, 1>, scalar_prefetch = 0 : i64, scratch_operands = 0 : i64, tpu.core_type = #tpu.core_type<tc>, window_params = [{transform_indices = @transform_0, window_bounds = array<i64: 1, 128, 128>}, {transform_indices = @transform_1, window_bounds = array<i64: 1, 128, 128>}, {transform_indices = @transform_2, window_bounds = array<i64: 1, 128, 128>}]} {
    %c0 = arith.constant 0 : index
    %c0_0 = arith.constant 0 : index
    %c0_1 = arith.constant 0 : index
    %0 = vector.load %arg2[%c0, %c0_0, %c0_1] : memref<1x128x128xbf16, #tpu.memory_space<vmem>>, vector<1x128x128xbf16>
    %1 = vector.shape_cast %0 : vector<1x128x128xbf16> to vector<128x128xbf16>
    %c0_2 = arith.constant 0 : index
    %c0_3 = arith.constant 0 : index
    %c0_4 = arith.constant 0 : index
    %2 = vector.load %arg3[%c0_2, %c0_3, %c0_4] : memref<1x128x128xbf16, #tpu.memory_space<vmem>>, vector<1x128x128xbf16>
    %3 = vector.shape_cast %2 : vector<1x128x128xbf16> to vector<128x128xbf16>
    %cst = arith.constant dense<0.000000e+00> : vector<128x128xf32>
    %4 = tpu.matmul %1, %3, %cst {dimension_numbers = #tpu.dot_dimension_numbers<[1], [0], [0], [1], [0, 0, 1, 1], [], []>} : vector<128x128xbf16>, vector<128x128xbf16>, vector<128x128xf32> -> vector<128x128xf32>
    %cst_5 = arith.constant 0.000000e+00 : f32
    %5 = vector.broadcast %cst_5 : f32 to vector<128x128xf32>
    %6 = arith.cmpf ogt, %4, %5 : vector<128x128xf32>
    %cst_6 = arith.constant 2.000000e-01 : f32
    %7 = vector.broadcast %cst_6 : f32 to vector<128x128xf32>
    %8 = arith.mulf %7, %4 : vector<128x128xf32>
    %9 = arith.select %6, %4, %8 : vector<128x128xi1>, vector<128x128xf32>
    %10 = arith.truncf %9 : vector<128x128xf32> to vector<128x128xbf16>
    %c0_7 = arith.constant 0 : index
    %c0_8 = arith.constant 0 : index
    %c0_9 = arith.constant 0 : index
    %11 = vector.load %arg4[%c0_7, %c0_8, %c0_9] : memref<1x128x128xbf16, #tpu.memory_space<vmem>>, vector<1x128x128xbf16>
    %12 = vector.shape_cast %11 : vector<1x128x128xbf16> to vector<128x128xbf16>
    %13 = vector.shape_cast %10 : vector<128x128xbf16> to vector<1x128x128xbf16>
    tpu.vector_store %arg4[%c0_7, %c0_8, %c0_9], %13 {strides = array<i32>} : memref<1x128x128xbf16, #tpu.memory_space<vmem>>, vector<1x128x128xbf16>,
    return
  }
  func.func @transform_0(%arg0: i32, %arg1: i32) -> (i32, i32, i32) {
    %c0_i32 = arith.constant 0 : i32
    %c0_i32_0 = arith.constant 0 : i32
    return %arg0, %arg1, %c0_i32 : i32, i32, i32
  }
  func.func @transform_1(%arg0: i32, %arg1: i32) -> (i32, i32, i32) {
    %c0_i32 = arith.constant 0 : i32
    %c0_i32_0 = arith.constant 0 : i32
    %c0_i32_1 = arith.constant 0 : i32
    return %arg0, %c0_i32, %c0_i32_0 : i32, i32, i32
  }
  func.func @transform_2(%arg0: i32, %arg1: i32) -> (i32, i32, i32) {
    %c0_i32 = arith.constant 0 : i32
    %c0_i32_0 = arith.constant 0 : i32
    return %arg0, %arg1, %c0_i32 : i32, i32, i32
  }
}

module attributes {stable_mosaic.version = 11 : i64} {
  func.func @_mm_stats_kernel(%arg0: i32, %arg1: i32, %arg2: memref<1x32x128xbf16, #tpu.memory_space<vmem>>, %arg3: memref<1x128x128xbf16, #tpu.memory_space<vmem>>, %arg4: memref<1x32x128xbf16, #tpu.memory_space<vmem>>, %arg5: memref<1x1x2x128xf32, #tpu.memory_space<vmem>>) attributes {dimension_semantics = [#tpu.dimension_semantics<parallel>, #tpu.dimension_semantics<parallel>], iteration_bounds = array<i64: 1, 1>, scalar_prefetch = 0 : i64, scratch_operands = 0 : i64, tpu.core_type = #tpu.core_type<tc>, window_params = [{transform_indices = @transform_0, window_bounds = array<i64: 1, 32, 128>}, {transform_indices = @transform_1, window_bounds = array<i64: 1, 128, 128>}, {transform_indices = @transform_2, window_bounds = array<i64: 1, 32, 128>}, {transform_indices = @transform_3, window_bounds = array<i64: 1, 1, 2, 128>}]} {
    %c0 = arith.constant 0 : index
    %c0_0 = arith.constant 0 : index
    %c0_1 = arith.constant 0 : index
    %0 = vector.load %arg2[%c0, %c0_0, %c0_1] : memref<1x32x128xbf16, #tpu.memory_space<vmem>>, vector<1x32x128xbf16>
    %1 = vector.shape_cast %0 : vector<1x32x128xbf16> to vector<32x128xbf16>
    %c0_2 = arith.constant 0 : index
    %c0_3 = arith.constant 0 : index
    %c0_4 = arith.constant 0 : index
    %2 = vector.load %arg3[%c0_2, %c0_3, %c0_4] : memref<1x128x128xbf16, #tpu.memory_space<vmem>>, vector<1x128x128xbf16>
    %3 = vector.shape_cast %2 : vector<1x128x128xbf16> to vector<128x128xbf16>
    %cst = arith.constant dense<0.000000e+00> : vector<32x128xf32>
    %4 = tpu.matmul %1, %3, %cst {dimension_numbers = #tpu.dot_dimension_numbers<[1], [0], [0], [1], [0, 0, 1, 1], [], []>} : vector<32x128xbf16>, vector<128x128xbf16>, vector<32x128xf32> -> vector<32x128xf32>
    %5 = arith.truncf %4 : vector<32x128xf32> to vector<32x128xbf16>
    %c0_5 = arith.constant 0 : index
    %c0_6 = arith.constant 0 : index
    %c0_7 = arith.constant 0 : index
    %6 = vector.load %arg4[%c0_5, %c0_6, %c0_7] : memref<1x32x128xbf16, #tpu.memory_space<vmem>>, vector<1x32x128xbf16>
    %7 = vector.shape_cast %6 : vector<1x32x128xbf16> to vector<32x128xbf16>
    %8 = vector.shape_cast %5 : vector<32x128xbf16> to vector<1x32x128xbf16>
    tpu.vector_store %arg4[%c0_5, %c0_6, %c0_7], %8 {strides = array<i32>} : memref<1x32x128xbf16, #tpu.memory_space<vmem>>, vector<1x32x128xbf16>,
    %cst_8 = arith.constant dense<0.000000e+00> : vector<128xf32>
    %9 = vector.multi_reduction <add>, %4, %cst_8 [0] : vector<32x128xf32> to vector<128xf32>
    %10 = vector.shape_cast %9 : vector<128xf32> to vector<1x128xf32>
    %c0_9 = arith.constant 0 : index
    %c0_10 = arith.constant 0 : index
    %c0_11 = arith.constant 0 : index
    %c0_12 = arith.constant 0 : index
    %11 = vector.load %arg5[%c0_9, %c0_10, %c0_11, %c0_12] : memref<1x1x2x128xf32, #tpu.memory_space<vmem>>, vector<1x1x1x128xf32>
    %12 = vector.shape_cast %11 : vector<1x1x1x128xf32> to vector<1x128xf32>
    %13 = vector.shape_cast %10 : vector<1x128xf32> to vector<1x1x1x128xf32>
    tpu.vector_store %arg5[%c0_9, %c0_10, %c0_11, %c0_12], %13 {strides = array<i32>} : memref<1x1x2x128xf32, #tpu.memory_space<vmem>>, vector<1x1x1x128xf32>,
    %14 = arith.mulf %4, %4 : vector<32x128xf32>
    %cst_13 = arith.constant dense<0.000000e+00> : vector<128xf32>
    %15 = vector.multi_reduction <add>, %14, %cst_13 [0] : vector<32x128xf32> to vector<128xf32>
    %16 = vector.shape_cast %15 : vector<128xf32> to vector<1x128xf32>
    %c0_14 = arith.constant 0 : index
    %c0_15 = arith.constant 0 : index
    %c1 = arith.constant 1 : index
    %c0_16 = arith.constant 0 : index
    %17 = vector.load %arg5[%c0_14, %c0_15, %c1, %c0_16] : memref<1x1x2x128xf32, #tpu.memory_space<vmem>>, vector<1x1x1x128xf32>
    %18 = vector.shape_cast %17 : vector<1x1x1x128xf32> to vector<1x128xf32>
    %19 = vector.shape_cast %16 : vector<1x128xf32> to vector<1x1x1x128xf32>
    tpu.vector_store %arg5[%c0_14, %c0_15, %c1, %c0_16], %19 {strides = array<i32>} : memref<1x1x2x128xf32, #tpu.memory_space<vmem>>, vector<1x1x1x128xf32>,
    return
  }
  func.func @transform_0(%arg0: i32, %arg1: i32) -> (i32, i32, i32) {
    %c0_i32 = arith.constant 0 : i32
    %c0_i32_0 = arith.constant 0 : i32
    return %arg0, %arg1, %c0_i32 : i32, i32, i32
  }
  func.func @transform_1(%arg0: i32, %arg1: i32) -> (i32, i32, i32) {
    %c0_i32 = arith.constant 0 : i32
    %c0_i32_0 = arith.constant 0 : i32
    %c0_i32_1 = arith.constant 0 : i32
    return %arg0, %c0_i32, %c0_i32_0 : i32, i32, i32
  }
  func.func @transform_2(%arg0: i32, %arg1: i32) -> (i32, i32, i32) {
    %c0_i32 = arith.constant 0 : i32
    %c0_i32_0 = arith.constant 0 : i32
    return %arg0, %arg1, %c0_i32 : i32, i32, i32
  }
  func.func @transform_3(%arg0: i32, %arg1: i32) -> (i32, i32, i32, i32) {
    %c0_i32 = arith.constant 0 : i32
    %c0_i32_0 = arith.constant 0 : i32
    %c0_i32_1 = arith.constant 0 : i32
    return %arg0, %arg1, %c0_i32, %c0_i32_0 : i32, i32, i32, i32
  }
}

module attributes {stable_mosaic.version = 11 : i64} {
  func.func @_bn_act_kernel(%arg0: i32, %arg1: i32, %arg2: memref<1x32x128xbf16, #tpu.memory_space<vmem>>, %arg3: memref<1x128xf32, #tpu.memory_space<vmem>>, %arg4: memref<1x128xf32, #tpu.memory_space<vmem>>, %arg5: memref<1x128xf32, #tpu.memory_space<vmem>>, %arg6: memref<1x128xf32, #tpu.memory_space<vmem>>, %arg7: memref<1x32x128xbf16, #tpu.memory_space<vmem>>) attributes {dimension_semantics = [#tpu.dimension_semantics<parallel>, #tpu.dimension_semantics<parallel>], iteration_bounds = array<i64: 1, 1>, scalar_prefetch = 0 : i64, scratch_operands = 0 : i64, tpu.core_type = #tpu.core_type<tc>, window_params = [{transform_indices = @transform_0, window_bounds = array<i64: 1, 32, 128>}, {pipeline_mode = #tpu.pipeline_mode<synchronous>, transform_indices = @transform_1, window_bounds = array<i64: 1, 128>}, {pipeline_mode = #tpu.pipeline_mode<synchronous>, transform_indices = @transform_2, window_bounds = array<i64: 1, 128>}, {pipeline_mode = #tpu.pipeline_mode<synchronous>, transform_indices = @transform_3, window_bounds = array<i64: 1, 128>}, {pipeline_mode = #tpu.pipeline_mode<synchronous>, transform_indices = @transform_4, window_bounds = array<i64: 1, 128>}, {transform_indices = @transform_5, window_bounds = array<i64: 1, 32, 128>}]} {
    %c0 = arith.constant 0 : index
    %c0_0 = arith.constant 0 : index
    %0 = vector.load %arg3[%c0, %c0_0] : memref<1x128xf32, #tpu.memory_space<vmem>>, vector<1x128xf32>
    %cst = arith.constant 3.125000e-02 : f32
    %1 = vector.broadcast %cst : f32 to vector<1x128xf32>
    %2 = arith.mulf %0, %1 : vector<1x128xf32>
    %c0_1 = arith.constant 0 : index
    %c0_2 = arith.constant 0 : index
    %3 = vector.load %arg4[%c0_1, %c0_2] : memref<1x128xf32, #tpu.memory_space<vmem>>, vector<1x128xf32>
    %cst_3 = arith.constant 3.125000e-02 : f32
    %4 = vector.broadcast %cst_3 : f32 to vector<1x128xf32>
    %5 = arith.mulf %3, %4 : vector<1x128xf32>
    %6 = arith.mulf %2, %2 : vector<1x128xf32>
    %7 = arith.subf %5, %6 : vector<1x128xf32>
    %cst_4 = arith.constant 0.000000e+00 : f32
    %8 = vector.broadcast %cst_4 : f32 to vector<1x128xf32>
    %9 = arith.maximumf %7, %8 : vector<1x128xf32>
    %c0_5 = arith.constant 0 : index
    %c0_6 = arith.constant 0 : index
    %10 = vector.load %arg5[%c0_5, %c0_6] : memref<1x128xf32, #tpu.memory_space<vmem>>, vector<1x128xf32>
    %cst_7 = arith.constant 9.99999974E-6 : f32
    %11 = vector.broadcast %cst_7 : f32 to vector<1x128xf32>
    %12 = arith.addf %9, %11 : vector<1x128xf32>
    %13 = math.rsqrt %12 : vector<1x128xf32>
    %14 = arith.mulf %10, %13 : vector<1x128xf32>
    %c0_8 = arith.constant 0 : index
    %c0_9 = arith.constant 0 : index
    %15 = vector.load %arg6[%c0_8, %c0_9] : memref<1x128xf32, #tpu.memory_space<vmem>>, vector<1x128xf32>
    %16 = arith.mulf %2, %14 : vector<1x128xf32>
    %17 = arith.subf %15, %16 : vector<1x128xf32>
    %c0_10 = arith.constant 0 : index
    %c0_11 = arith.constant 0 : index
    %c0_12 = arith.constant 0 : index
    %18 = vector.load %arg2[%c0_10, %c0_11, %c0_12] : memref<1x32x128xbf16, #tpu.memory_space<vmem>>, vector<1x32x128xbf16>
    %19 = vector.shape_cast %18 : vector<1x32x128xbf16> to vector<32x128xbf16>
    %20 = arith.extf %19 : vector<32x128xbf16> to vector<32x128xf32>
    %21 = vector.broadcast %14 : vector<1x128xf32> to vector<32x128xf32>
    %22 = arith.mulf %20, %21 : vector<32x128xf32>
    %23 = vector.broadcast %17 : vector<1x128xf32> to vector<32x128xf32>
    %24 = arith.addf %22, %23 : vector<32x128xf32>
    %cst_13 = arith.constant 0.000000e+00 : f32
    %25 = vector.broadcast %cst_13 : f32 to vector<32x128xf32>
    %26 = arith.cmpf ogt, %24, %25 : vector<32x128xf32>
    %cst_14 = arith.constant 2.000000e-01 : f32
    %27 = vector.broadcast %cst_14 : f32 to vector<32x128xf32>
    %28 = arith.mulf %27, %24 : vector<32x128xf32>
    %29 = arith.select %26, %24, %28 : vector<32x128xi1>, vector<32x128xf32>
    %30 = arith.truncf %29 : vector<32x128xf32> to vector<32x128xbf16>
    %c0_15 = arith.constant 0 : index
    %c0_16 = arith.constant 0 : index
    %c0_17 = arith.constant 0 : index
    %31 = vector.load %arg7[%c0_15, %c0_16, %c0_17] : memref<1x32x128xbf16, #tpu.memory_space<vmem>>, vector<1x32x128xbf16>
    %32 = vector.shape_cast %31 : vector<1x32x128xbf16> to vector<32x128xbf16>
    %33 = vector.shape_cast %30 : vector<32x128xbf16> to vector<1x32x128xbf16>
    tpu.vector_store %arg7[%c0_15, %c0_16, %c0_17], %33 {strides = array<i32>} : memref<1x32x128xbf16, #tpu.memory_space<vmem>>, vector<1x32x128xbf16>,
    return
  }
  func.func @transform_0(%arg0: i32, %arg1: i32) -> (i32, i32, i32) {
    %c0_i32 = arith.constant 0 : i32
    %c0_i32_0 = arith.constant 0 : i32
    return %arg0, %arg1, %c0_i32 : i32, i32, i32
  }
  func.func @transform_1(%arg0: i32, %arg1: i32) -> (i32, i32) {
    %c0_i32 = arith.constant 0 : i32
    %c0_i32_0 = arith.constant 0 : i32
    %c0_i32_1 = arith.constant 0 : i32
    return %c0_i32, %c0_i32_0 : i32, i32
  }
  func.func @transform_2(%arg0: i32, %arg1: i32) -> (i32, i32) {
    %c0_i32 = arith.constant 0 : i32
    %c0_i32_0 = arith.constant 0 : i32
    %c0_i32_1 = arith.constant 0 : i32
    return %c0_i32, %c0_i32_0 : i32, i32
  }
  func.func @transform_3(%arg0: i32, %arg1: i32) -> (i32, i32) {
    %c0_i32 = arith.constant 0 : i32
    %c0_i32_0 = arith.constant 0 : i32
    %c0_i32_1 = arith.constant 0 : i32
    return %c0_i32, %c0_i32_0 : i32, i32
  }
  func.func @transform_4(%arg0: i32, %arg1: i32) -> (i32, i32) {
    %c0_i32 = arith.constant 0 : i32
    %c0_i32_0 = arith.constant 0 : i32
    %c0_i32_1 = arith.constant 0 : i32
    return %c0_i32, %c0_i32_0 : i32, i32
  }
  func.func @transform_5(%arg0: i32, %arg1: i32) -> (i32, i32, i32) {
    %c0_i32 = arith.constant 0 : i32
    %c0_i32_0 = arith.constant 0 : i32
    return %arg0, %arg1, %c0_i32 : i32, i32, i32
  }
}

module attributes {stable_mosaic.version = 11 : i64} {
  func.func @_encode_heads_kernel(%arg0: memref<2x128xbf16, #tpu.memory_space<vmem>>, %arg1: memref<128x256xbf16, #tpu.memory_space<vmem>>, %arg2: memref<1x256xf32, #tpu.memory_space<vmem>>, %arg3: memref<2x128xf32, #tpu.memory_space<vmem>>, %arg4: memref<2x128xf32, #tpu.memory_space<vmem>>, %arg5: memref<2x128xf32, #tpu.memory_space<vmem>>, %arg6: memref<2x128xf32, #tpu.memory_space<vmem>>) attributes {dimension_semantics = [], scalar_prefetch = 0 : i64, scratch_operands = 0 : i64, tpu.core_type = #tpu.core_type<tc>} {
    %c0 = arith.constant 0 : index
    %c0_0 = arith.constant 0 : index
    %0 = vector.load %arg0[%c0, %c0_0] : memref<2x128xbf16, #tpu.memory_space<vmem>>, vector<2x128xbf16>
    %c0_1 = arith.constant 0 : index
    %c0_2 = arith.constant 0 : index
    %1 = vector.load %arg1[%c0_1, %c0_2] : memref<128x256xbf16, #tpu.memory_space<vmem>>, vector<128x256xbf16>
    %cst = arith.constant dense<0.000000e+00> : vector<2x256xf32>
    %2 = tpu.matmul %0, %1, %cst {dimension_numbers = #tpu.dot_dimension_numbers<[1], [0], [0], [1], [0, 0, 1, 1], [], []>} : vector<2x128xbf16>, vector<128x256xbf16>, vector<2x256xf32> -> vector<2x256xf32>
    %c0_3 = arith.constant 0 : index
    %c0_4 = arith.constant 0 : index
    %3 = vector.load %arg2[%c0_3, %c0_4] : memref<1x256xf32, #tpu.memory_space<vmem>>, vector<1x256xf32>
    %4 = vector.broadcast %3 : vector<1x256xf32> to vector<2x256xf32>
    %5 = arith.addf %2, %4 : vector<2x256xf32>
    %6 = vector.extract_strided_slice %5 {offsets = [0, 0], sizes = [2, 128], strides = [1, 1]} : vector<2x256xf32> to vector<2x128xf32>
    %7 = vector.extract_strided_slice %5 {offsets = [0, 128], sizes = [2, 128], strides = [1, 1]} : vector<2x256xf32> to vector<2x128xf32>
    %c0_5 = arith.constant 0 : index
    %c0_6 = arith.constant 0 : index
    %8 = vector.load %arg4[%c0_5, %c0_6] : memref<2x128xf32, #tpu.memory_space<vmem>>, vector<2x128xf32>
    tpu.vector_store %arg4[%c0_5, %c0_6], %6 {strides = array<i32>} : memref<2x128xf32, #tpu.memory_space<vmem>>, vector<2x128xf32>,
    %c0_7 = arith.constant 0 : index
    %c0_8 = arith.constant 0 : index
    %9 = vector.load %arg5[%c0_7, %c0_8] : memref<2x128xf32, #tpu.memory_space<vmem>>, vector<2x128xf32>
    tpu.vector_store %arg5[%c0_7, %c0_8], %7 {strides = array<i32>} : memref<2x128xf32, #tpu.memory_space<vmem>>, vector<2x128xf32>,
    %c0_9 = arith.constant 0 : index
    %c0_10 = arith.constant 0 : index
    %10 = vector.load %arg3[%c0_9, %c0_10] : memref<2x128xf32, #tpu.memory_space<vmem>>, vector<2x128xf32>
    %cst_11 = arith.constant 5.000000e-01 : f32
    %11 = vector.broadcast %cst_11 : f32 to vector<2x128xf32>
    %12 = arith.mulf %11, %7 : vector<2x128xf32>
    %13 = math.exp %12 : vector<2x128xf32>
    %14 = arith.mulf %10, %13 : vector<2x128xf32>
    %15 = arith.addf %6, %14 : vector<2x128xf32>
    %c0_12 = arith.constant 0 : index
    %c0_13 = arith.constant 0 : index
    %16 = vector.load %arg6[%c0_12, %c0_13] : memref<2x128xf32, #tpu.memory_space<vmem>>, vector<2x128xf32>
    tpu.vector_store %arg6[%c0_12, %c0_13], %15 {strides = array<i32>} : memref<2x128xf32, #tpu.memory_space<vmem>>, vector<2x128xf32>,
    return
  }
}

module attributes {stable_mosaic.version = 11 : i64} {
  func.func @_mm_act_kernel(%arg0: i32, %arg1: i32, %arg2: memref<1x2x128xbf16, #tpu.memory_space<vmem>>, %arg3: memref<1x128x128xbf16, #tpu.memory_space<vmem>>, %arg4: memref<1x2x128xbf16, #tpu.memory_space<vmem>>) attributes {dimension_semantics = [#tpu.dimension_semantics<parallel>, #tpu.dimension_semantics<parallel>], iteration_bounds = array<i64: 1, 1>, scalar_prefetch = 0 : i64, scratch_operands = 0 : i64, tpu.core_type = #tpu.core_type<tc>, window_params = [{transform_indices = @transform_0, window_bounds = array<i64: 1, 2, 128>}, {transform_indices = @transform_1, window_bounds = array<i64: 1, 128, 128>}, {transform_indices = @transform_2, window_bounds = array<i64: 1, 2, 128>}]} {
    %c0 = arith.constant 0 : index
    %c0_0 = arith.constant 0 : index
    %c0_1 = arith.constant 0 : index
    %0 = vector.load %arg2[%c0, %c0_0, %c0_1] : memref<1x2x128xbf16, #tpu.memory_space<vmem>>, vector<1x2x128xbf16>
    %1 = vector.shape_cast %0 : vector<1x2x128xbf16> to vector<2x128xbf16>
    %c0_2 = arith.constant 0 : index
    %c0_3 = arith.constant 0 : index
    %c0_4 = arith.constant 0 : index
    %2 = vector.load %arg3[%c0_2, %c0_3, %c0_4] : memref<1x128x128xbf16, #tpu.memory_space<vmem>>, vector<1x128x128xbf16>
    %3 = vector.shape_cast %2 : vector<1x128x128xbf16> to vector<128x128xbf16>
    %cst = arith.constant dense<0.000000e+00> : vector<2x128xf32>
    %4 = tpu.matmul %1, %3, %cst {dimension_numbers = #tpu.dot_dimension_numbers<[1], [0], [0], [1], [0, 0, 1, 1], [], []>} : vector<2x128xbf16>, vector<128x128xbf16>, vector<2x128xf32> -> vector<2x128xf32>
    %5 = arith.truncf %4 : vector<2x128xf32> to vector<2x128xbf16>
    %c0_5 = arith.constant 0 : index
    %c0_6 = arith.constant 0 : index
    %c0_7 = arith.constant 0 : index
    %6 = vector.load %arg4[%c0_5, %c0_6, %c0_7] : memref<1x2x128xbf16, #tpu.memory_space<vmem>>, vector<1x2x128xbf16>
    %7 = vector.shape_cast %6 : vector<1x2x128xbf16> to vector<2x128xbf16>
    %8 = vector.shape_cast %5 : vector<2x128xbf16> to vector<1x2x128xbf16>
    tpu.vector_store %arg4[%c0_5, %c0_6, %c0_7], %8 {strides = array<i32>} : memref<1x2x128xbf16, #tpu.memory_space<vmem>>, vector<1x2x128xbf16>,
    return
  }
  func.func @transform_0(%arg0: i32, %arg1: i32) -> (i32, i32, i32) {
    %c0_i32 = arith.constant 0 : i32
    %c0_i32_0 = arith.constant 0 : i32
    return %arg0, %arg1, %c0_i32 : i32, i32, i32
  }
  func.func @transform_1(%arg0: i32, %arg1: i32) -> (i32, i32, i32) {
    %c0_i32 = arith.constant 0 : i32
    %c0_i32_0 = arith.constant 0 : i32
    %c0_i32_1 = arith.constant 0 : i32
    return %arg0, %c0_i32, %c0_i32_0 : i32, i32, i32
  }
  func.func @transform_2(%arg0: i32, %arg1: i32) -> (i32, i32, i32) {
    %c0_i32 = arith.constant 0 : i32
    %c0_i32_0 = arith.constant 0 : i32
    return %arg0, %arg1, %c0_i32 : i32, i32, i32
  }
}

module attributes {stable_mosaic.version = 11 : i64} {
  func.func @_dec1x1_kernel(%arg0: memref<2x128xbf16, #tpu.memory_space<vmem>>, %arg1: memref<128x2048xbf16, #tpu.memory_space<vmem>>, %arg2: memref<1x128xf32, #tpu.memory_space<vmem>>, %arg3: memref<1x128xf32, #tpu.memory_space<vmem>>, %arg4: memref<2x2048xbf16, #tpu.memory_space<vmem>>) attributes {dimension_semantics = [], scalar_prefetch = 0 : i64, scratch_operands = 0 : i64, tpu.core_type = #tpu.core_type<tc>} {
    %c0 = arith.constant 0 : index
    %c0_0 = arith.constant 0 : index
    %0 = vector.load %arg0[%c0, %c0_0] : memref<2x128xbf16, #tpu.memory_space<vmem>>, vector<2x128xbf16>
    %c0_1 = arith.constant 0 : index
    %c0_2 = arith.constant 0 : index
    %1 = vector.load %arg1[%c0_1, %c0_2] : memref<128x2048xbf16, #tpu.memory_space<vmem>>, vector<128x2048xbf16>
    %cst = arith.constant dense<0.000000e+00> : vector<2x2048xf32>
    %2 = tpu.matmul %0, %1, %cst {dimension_numbers = #tpu.dot_dimension_numbers<[1], [0], [0], [1], [0, 0, 1, 1], [], []>} : vector<2x128xbf16>, vector<128x2048xbf16>, vector<2x2048xf32> -> vector<2x2048xf32>
    %cst_3 = arith.constant 0.000000e+00 : f32
    %3 = vector.broadcast %cst_3 : f32 to vector<1x128xf32>
    %cst_4 = arith.constant 0.000000e+00 : f32
    %4 = vector.broadcast %cst_4 : f32 to vector<1x128xf32>
    %5 = vector.extract_strided_slice %2 {offsets = [0, 0], sizes = [2, 128], strides = [1, 1]} : vector<2x2048xf32> to vector<2x128xf32>
    %cst_5 = arith.constant dense<0.000000e+00> : vector<128xf32>
    %6 = vector.multi_reduction <add>, %5, %cst_5 [0] : vector<2x128xf32> to vector<128xf32>
    %7 = vector.shape_cast %6 : vector<128xf32> to vector<1x128xf32>
    %8 = arith.addf %3, %7 : vector<1x128xf32>
    %9 = arith.mulf %5, %5 : vector<2x128xf32>
    %cst_6 = arith.constant dense<0.000000e+00> : vector<128xf32>
    %10 = vector.multi_reduction <add>, %9, %cst_6 [0] : vector<2x128xf32> to vector<128xf32>
    %11 = vector.shape_cast %10 : vector<128xf32> to vector<1x128xf32>
    %12 = arith.addf %4, %11 : vector<1x128xf32>
    %13 = vector.extract_strided_slice %2 {offsets = [0, 128], sizes = [2, 128], strides = [1, 1]} : vector<2x2048xf32> to vector<2x128xf32>
    %cst_7 = arith.constant dense<0.000000e+00> : vector<128xf32>
    %14 = vector.multi_reduction <add>, %13, %cst_7 [0] : vector<2x128xf32> to vector<128xf32>
    %15 = vector.shape_cast %14 : vector<128xf32> to vector<1x128xf32>
    %16 = arith.addf %8, %15 : vector<1x128xf32>
    %17 = arith.mulf %13, %13 : vector<2x128xf32>
    %cst_8 = arith.constant dense<0.000000e+00> : vector<128xf32>
    %18 = vector.multi_reduction <add>, %17, %cst_8 [0] : vector<2x128xf32> to vector<128xf32>
    %19 = vector.shape_cast %18 : vector<128xf32> to vector<1x128xf32>
    %20 = arith.addf %12, %19 : vector<1x128xf32>
    %21 = vector.extract_strided_slice %2 {offsets = [0, 256], sizes = [2, 128], strides = [1, 1]} : vector<2x2048xf32> to vector<2x128xf32>
    %cst_9 = arith.constant dense<0.000000e+00> : vector<128xf32>
    %22 = vector.multi_reduction <add>, %21, %cst_9 [0] : vector<2x128xf32> to vector<128xf32>
    %23 = vector.shape_cast %22 : vector<128xf32> to vector<1x128xf32>
    %24 = arith.addf %16, %23 : vector<1x128xf32>
    %25 = arith.mulf %21, %21 : vector<2x128xf32>
    %cst_10 = arith.constant dense<0.000000e+00> : vector<128xf32>
    %26 = vector.multi_reduction <add>, %25, %cst_10 [0] : vector<2x128xf32> to vector<128xf32>
    %27 = vector.shape_cast %26 : vector<128xf32> to vector<1x128xf32>
    %28 = arith.addf %20, %27 : vector<1x128xf32>
    %29 = vector.extract_strided_slice %2 {offsets = [0, 384], sizes = [2, 128], strides = [1, 1]} : vector<2x2048xf32> to vector<2x128xf32>
    %cst_11 = arith.constant dense<0.000000e+00> : vector<128xf32>
    %30 = vector.multi_reduction <add>, %29, %cst_11 [0] : vector<2x128xf32> to vector<128xf32>
    %31 = vector.shape_cast %30 : vector<128xf32> to vector<1x128xf32>
    %32 = arith.addf %24, %31 : vector<1x128xf32>
    %33 = arith.mulf %29, %29 : vector<2x128xf32>
    %cst_12 = arith.constant dense<0.000000e+00> : vector<128xf32>
    %34 = vector.multi_reduction <add>, %33, %cst_12 [0] : vector<2x128xf32> to vector<128xf32>
    %35 = vector.shape_cast %34 : vector<128xf32> to vector<1x128xf32>
    %36 = arith.addf %28, %35 : vector<1x128xf32>
    %37 = vector.extract_strided_slice %2 {offsets = [0, 512], sizes = [2, 128], strides = [1, 1]} : vector<2x2048xf32> to vector<2x128xf32>
    %cst_13 = arith.constant dense<0.000000e+00> : vector<128xf32>
    %38 = vector.multi_reduction <add>, %37, %cst_13 [0] : vector<2x128xf32> to vector<128xf32>
    %39 = vector.shape_cast %38 : vector<128xf32> to vector<1x128xf32>
    %40 = arith.addf %32, %39 : vector<1x128xf32>
    %41 = arith.mulf %37, %37 : vector<2x128xf32>
    %cst_14 = arith.constant dense<0.000000e+00> : vector<128xf32>
    %42 = vector.multi_reduction <add>, %41, %cst_14 [0] : vector<2x128xf32> to vector<128xf32>
    %43 = vector.shape_cast %42 : vector<128xf32> to vector<1x128xf32>
    %44 = arith.addf %36, %43 : vector<1x128xf32>
    %45 = vector.extract_strided_slice %2 {offsets = [0, 640], sizes = [2, 128], strides = [1, 1]} : vector<2x2048xf32> to vector<2x128xf32>
    %cst_15 = arith.constant dense<0.000000e+00> : vector<128xf32>
    %46 = vector.multi_reduction <add>, %45, %cst_15 [0] : vector<2x128xf32> to vector<128xf32>
    %47 = vector.shape_cast %46 : vector<128xf32> to vector<1x128xf32>
    %48 = arith.addf %40, %47 : vector<1x128xf32>
    %49 = arith.mulf %45, %45 : vector<2x128xf32>
    %cst_16 = arith.constant dense<0.000000e+00> : vector<128xf32>
    %50 = vector.multi_reduction <add>, %49, %cst_16 [0] : vector<2x128xf32> to vector<128xf32>
    %51 = vector.shape_cast %50 : vector<128xf32> to vector<1x128xf32>
    %52 = arith.addf %44, %51 : vector<1x128xf32>
    %53 = vector.extract_strided_slice %2 {offsets = [0, 768], sizes = [2, 128], strides = [1, 1]} : vector<2x2048xf32> to vector<2x128xf32>
    %cst_17 = arith.constant dense<0.000000e+00> : vector<128xf32>
    %54 = vector.multi_reduction <add>, %53, %cst_17 [0] : vector<2x128xf32> to vector<128xf32>
    %55 = vector.shape_cast %54 : vector<128xf32> to vector<1x128xf32>
    %56 = arith.addf %48, %55 : vector<1x128xf32>
    %57 = arith.mulf %53, %53 : vector<2x128xf32>
    %cst_18 = arith.constant dense<0.000000e+00> : vector<128xf32>
    %58 = vector.multi_reduction <add>, %57, %cst_18 [0] : vector<2x128xf32> to vector<128xf32>
    %59 = vector.shape_cast %58 : vector<128xf32> to vector<1x128xf32>
    %60 = arith.addf %52, %59 : vector<1x128xf32>
    %61 = vector.extract_strided_slice %2 {offsets = [0, 896], sizes = [2, 128], strides = [1, 1]} : vector<2x2048xf32> to vector<2x128xf32>
    %cst_19 = arith.constant dense<0.000000e+00> : vector<128xf32>
    %62 = vector.multi_reduction <add>, %61, %cst_19 [0] : vector<2x128xf32> to vector<128xf32>
    %63 = vector.shape_cast %62 : vector<128xf32> to vector<1x128xf32>
    %64 = arith.addf %56, %63 : vector<1x128xf32>
    %65 = arith.mulf %61, %61 : vector<2x128xf32>
    %cst_20 = arith.constant dense<0.000000e+00> : vector<128xf32>
    %66 = vector.multi_reduction <add>, %65, %cst_20 [0] : vector<2x128xf32> to vector<128xf32>
    %67 = vector.shape_cast %66 : vector<128xf32> to vector<1x128xf32>
    %68 = arith.addf %60, %67 : vector<1x128xf32>
    %69 = vector.extract_strided_slice %2 {offsets = [0, 1024], sizes = [2, 128], strides = [1, 1]} : vector<2x2048xf32> to vector<2x128xf32>
    %cst_21 = arith.constant dense<0.000000e+00> : vector<128xf32>
    %70 = vector.multi_reduction <add>, %69, %cst_21 [0] : vector<2x128xf32> to vector<128xf32>
    %71 = vector.shape_cast %70 : vector<128xf32> to vector<1x128xf32>
    %72 = arith.addf %64, %71 : vector<1x128xf32>
    %73 = arith.mulf %69, %69 : vector<2x128xf32>
    %cst_22 = arith.constant dense<0.000000e+00> : vector<128xf32>
    %74 = vector.multi_reduction <add>, %73, %cst_22 [0] : vector<2x128xf32> to vector<128xf32>
    %75 = vector.shape_cast %74 : vector<128xf32> to vector<1x128xf32>
    %76 = arith.addf %68, %75 : vector<1x128xf32>
    %77 = vector.extract_strided_slice %2 {offsets = [0, 1152], sizes = [2, 128], strides = [1, 1]} : vector<2x2048xf32> to vector<2x128xf32>
    %cst_23 = arith.constant dense<0.000000e+00> : vector<128xf32>
    %78 = vector.multi_reduction <add>, %77, %cst_23 [0] : vector<2x128xf32> to vector<128xf32>
    %79 = vector.shape_cast %78 : vector<128xf32> to vector<1x128xf32>
    %80 = arith.addf %72, %79 : vector<1x128xf32>
    %81 = arith.mulf %77, %77 : vector<2x128xf32>
    %cst_24 = arith.constant dense<0.000000e+00> : vector<128xf32>
    %82 = vector.multi_reduction <add>, %81, %cst_24 [0] : vector<2x128xf32> to vector<128xf32>
    %83 = vector.shape_cast %82 : vector<128xf32> to vector<1x128xf32>
    %84 = arith.addf %76, %83 : vector<1x128xf32>
    %85 = vector.extract_strided_slice %2 {offsets = [0, 1280], sizes = [2, 128], strides = [1, 1]} : vector<2x2048xf32> to vector<2x128xf32>
    %cst_25 = arith.constant dense<0.000000e+00> : vector<128xf32>
    %86 = vector.multi_reduction <add>, %85, %cst_25 [0] : vector<2x128xf32> to vector<128xf32>
    %87 = vector.shape_cast %86 : vector<128xf32> to vector<1x128xf32>
    %88 = arith.addf %80, %87 : vector<1x128xf32>
    %89 = arith.mulf %85, %85 : vector<2x128xf32>
    %cst_26 = arith.constant dense<0.000000e+00> : vector<128xf32>
    %90 = vector.multi_reduction <add>, %89, %cst_26 [0] : vector<2x128xf32> to vector<128xf32>
    %91 = vector.shape_cast %90 : vector<128xf32> to vector<1x128xf32>
    %92 = arith.addf %84, %91 : vector<1x128xf32>
    %93 = vector.extract_strided_slice %2 {offsets = [0, 1408], sizes = [2, 128], strides = [1, 1]} : vector<2x2048xf32> to vector<2x128xf32>
    %cst_27 = arith.constant dense<0.000000e+00> : vector<128xf32>
    %94 = vector.multi_reduction <add>, %93, %cst_27 [0] : vector<2x128xf32> to vector<128xf32>
    %95 = vector.shape_cast %94 : vector<128xf32> to vector<1x128xf32>
    %96 = arith.addf %88, %95 : vector<1x128xf32>
    %97 = arith.mulf %93, %93 : vector<2x128xf32>
    %cst_28 = arith.constant dense<0.000000e+00> : vector<128xf32>
    %98 = vector.multi_reduction <add>, %97, %cst_28 [0] : vector<2x128xf32> to vector<128xf32>
    %99 = vector.shape_cast %98 : vector<128xf32> to vector<1x128xf32>
    %100 = arith.addf %92, %99 : vector<1x128xf32>
    %101 = vector.extract_strided_slice %2 {offsets = [0, 1536], sizes = [2, 128], strides = [1, 1]} : vector<2x2048xf32> to vector<2x128xf32>
    %cst_29 = arith.constant dense<0.000000e+00> : vector<128xf32>
    %102 = vector.multi_reduction <add>, %101, %cst_29 [0] : vector<2x128xf32> to vector<128xf32>
    %103 = vector.shape_cast %102 : vector<128xf32> to vector<1x128xf32>
    %104 = arith.addf %96, %103 : vector<1x128xf32>
    %105 = arith.mulf %101, %101 : vector<2x128xf32>
    %cst_30 = arith.constant dense<0.000000e+00> : vector<128xf32>
    %106 = vector.multi_reduction <add>, %105, %cst_30 [0] : vector<2x128xf32> to vector<128xf32>
    %107 = vector.shape_cast %106 : vector<128xf32> to vector<1x128xf32>
    %108 = arith.addf %100, %107 : vector<1x128xf32>
    %109 = vector.extract_strided_slice %2 {offsets = [0, 1664], sizes = [2, 128], strides = [1, 1]} : vector<2x2048xf32> to vector<2x128xf32>
    %cst_31 = arith.constant dense<0.000000e+00> : vector<128xf32>
    %110 = vector.multi_reduction <add>, %109, %cst_31 [0] : vector<2x128xf32> to vector<128xf32>
    %111 = vector.shape_cast %110 : vector<128xf32> to vector<1x128xf32>
    %112 = arith.addf %104, %111 : vector<1x128xf32>
    %113 = arith.mulf %109, %109 : vector<2x128xf32>
    %cst_32 = arith.constant dense<0.000000e+00> : vector<128xf32>
    %114 = vector.multi_reduction <add>, %113, %cst_32 [0] : vector<2x128xf32> to vector<128xf32>
    %115 = vector.shape_cast %114 : vector<128xf32> to vector<1x128xf32>
    %116 = arith.addf %108, %115 : vector<1x128xf32>
    %117 = vector.extract_strided_slice %2 {offsets = [0, 1792], sizes = [2, 128], strides = [1, 1]} : vector<2x2048xf32> to vector<2x128xf32>
    %cst_33 = arith.constant dense<0.000000e+00> : vector<128xf32>
    %118 = vector.multi_reduction <add>, %117, %cst_33 [0] : vector<2x128xf32> to vector<128xf32>
    %119 = vector.shape_cast %118 : vector<128xf32> to vector<1x128xf32>
    %120 = arith.addf %112, %119 : vector<1x128xf32>
    %121 = arith.mulf %117, %117 : vector<2x128xf32>
    %cst_34 = arith.constant dense<0.000000e+00> : vector<128xf32>
    %122 = vector.multi_reduction <add>, %121, %cst_34 [0] : vector<2x128xf32> to vector<128xf32>
    %123 = vector.shape_cast %122 : vector<128xf32> to vector<1x128xf32>
    %124 = arith.addf %116, %123 : vector<1x128xf32>
    %125 = vector.extract_strided_slice %2 {offsets = [0, 1920], sizes = [2, 128], strides = [1, 1]} : vector<2x2048xf32> to vector<2x128xf32>
    %cst_35 = arith.constant dense<0.000000e+00> : vector<128xf32>
    %126 = vector.multi_reduction <add>, %125, %cst_35 [0] : vector<2x128xf32> to vector<128xf32>
    %127 = vector.shape_cast %126 : vector<128xf32> to vector<1x128xf32>
    %128 = arith.addf %120, %127 : vector<1x128xf32>
    %129 = arith.mulf %125, %125 : vector<2x128xf32>
    %cst_36 = arith.constant dense<0.000000e+00> : vector<128xf32>
    %130 = vector.multi_reduction <add>, %129, %cst_36 [0] : vector<2x128xf32> to vector<128xf32>
    %131 = vector.shape_cast %130 : vector<128xf32> to vector<1x128xf32>
    %132 = arith.addf %124, %131 : vector<1x128xf32>
    %cst_37 = arith.constant 3.125000e-02 : f32
    %133 = vector.broadcast %cst_37 : f32 to vector<1x128xf32>
    %134 = arith.mulf %128, %133 : vector<1x128xf32>
    %cst_38 = arith.constant 3.125000e-02 : f32
    %135 = vector.broadcast %cst_38 : f32 to vector<1x128xf32>
    %136 = arith.mulf %132, %135 : vector<1x128xf32>
    %137 = arith.mulf %134, %134 : vector<1x128xf32>
    %138 = arith.subf %136, %137 : vector<1x128xf32>
    %cst_39 = arith.constant 0.000000e+00 : f32
    %139 = vector.broadcast %cst_39 : f32 to vector<1x128xf32>
    %140 = arith.maximumf %138, %139 : vector<1x128xf32>
    %c0_40 = arith.constant 0 : index
    %c0_41 = arith.constant 0 : index
    %141 = vector.load %arg2[%c0_40, %c0_41] : memref<1x128xf32, #tpu.memory_space<vmem>>, vector<1x128xf32>
    %cst_42 = arith.constant 9.99999974E-6 : f32
    %142 = vector.broadcast %cst_42 : f32 to vector<1x128xf32>
    %143 = arith.addf %140, %142 : vector<1x128xf32>
    %144 = math.rsqrt %143 : vector<1x128xf32>
    %145 = arith.mulf %141, %144 : vector<1x128xf32>
    %c0_43 = arith.constant 0 : index
    %c0_44 = arith.constant 0 : index
    %146 = vector.load %arg3[%c0_43, %c0_44] : memref<1x128xf32, #tpu.memory_space<vmem>>, vector<1x128xf32>
    %147 = arith.mulf %134, %145 : vector<1x128xf32>
    %148 = arith.subf %146, %147 : vector<1x128xf32>
    %149 = vector.extract_strided_slice %2 {offsets = [0, 0], sizes = [2, 128], strides = [1, 1]} : vector<2x2048xf32> to vector<2x128xf32>
    %150 = vector.broadcast %145 : vector<1x128xf32> to vector<2x128xf32>
    %151 = arith.mulf %149, %150 : vector<2x128xf32>
    %152 = vector.broadcast %148 : vector<1x128xf32> to vector<2x128xf32>
    %153 = arith.addf %151, %152 : vector<2x128xf32>
    %cst_45 = arith.constant 0.000000e+00 : f32
    %154 = vector.broadcast %cst_45 : f32 to vector<2x128xf32>
    %155 = arith.maximumf %153, %154 : vector<2x128xf32>
    %156 = arith.truncf %155 : vector<2x128xf32> to vector<2x128xbf16>
    %c0_46 = arith.constant 0 : index
    %c0_47 = arith.constant 0 : index
    %157 = vector.load %arg4[%c0_46, %c0_47] : memref<2x2048xbf16, #tpu.memory_space<vmem>>, vector<2x128xbf16>
    tpu.vector_store %arg4[%c0_46, %c0_47], %156 {strides = array<i32>} : memref<2x2048xbf16, #tpu.memory_space<vmem>>, vector<2x128xbf16>,
    %158 = vector.extract_strided_slice %2 {offsets = [0, 128], sizes = [2, 128], strides = [1, 1]} : vector<2x2048xf32> to vector<2x128xf32>
    %159 = vector.broadcast %145 : vector<1x128xf32> to vector<2x128xf32>
    %160 = arith.mulf %158, %159 : vector<2x128xf32>
    %161 = vector.broadcast %148 : vector<1x128xf32> to vector<2x128xf32>
    %162 = arith.addf %160, %161 : vector<2x128xf32>
    %cst_48 = arith.constant 0.000000e+00 : f32
    %163 = vector.broadcast %cst_48 : f32 to vector<2x128xf32>
    %164 = arith.maximumf %162, %163 : vector<2x128xf32>
    %165 = arith.truncf %164 : vector<2x128xf32> to vector<2x128xbf16>
    %c0_49 = arith.constant 0 : index
    %c128 = arith.constant 128 : index
    %166 = vector.load %arg4[%c0_49, %c128] : memref<2x2048xbf16, #tpu.memory_space<vmem>>, vector<2x128xbf16>
    tpu.vector_store %arg4[%c0_49, %c128], %165 {strides = array<i32>} : memref<2x2048xbf16, #tpu.memory_space<vmem>>, vector<2x128xbf16>,
    %167 = vector.extract_strided_slice %2 {offsets = [0, 256], sizes = [2, 128], strides = [1, 1]} : vector<2x2048xf32> to vector<2x128xf32>
    %168 = vector.broadcast %145 : vector<1x128xf32> to vector<2x128xf32>
    %169 = arith.mulf %167, %168 : vector<2x128xf32>
    %170 = vector.broadcast %148 : vector<1x128xf32> to vector<2x128xf32>
    %171 = arith.addf %169, %170 : vector<2x128xf32>
    %cst_50 = arith.constant 0.000000e+00 : f32
    %172 = vector.broadcast %cst_50 : f32 to vector<2x128xf32>
    %173 = arith.maximumf %171, %172 : vector<2x128xf32>
    %174 = arith.truncf %173 : vector<2x128xf32> to vector<2x128xbf16>
    %c0_51 = arith.constant 0 : index
    %c256 = arith.constant 256 : index
    %175 = vector.load %arg4[%c0_51, %c256] : memref<2x2048xbf16, #tpu.memory_space<vmem>>, vector<2x128xbf16>
    tpu.vector_store %arg4[%c0_51, %c256], %174 {strides = array<i32>} : memref<2x2048xbf16, #tpu.memory_space<vmem>>, vector<2x128xbf16>,
    %176 = vector.extract_strided_slice %2 {offsets = [0, 384], sizes = [2, 128], strides = [1, 1]} : vector<2x2048xf32> to vector<2x128xf32>
    %177 = vector.broadcast %145 : vector<1x128xf32> to vector<2x128xf32>
    %178 = arith.mulf %176, %177 : vector<2x128xf32>
    %179 = vector.broadcast %148 : vector<1x128xf32> to vector<2x128xf32>
    %180 = arith.addf %178, %179 : vector<2x128xf32>
    %cst_52 = arith.constant 0.000000e+00 : f32
    %181 = vector.broadcast %cst_52 : f32 to vector<2x128xf32>
    %182 = arith.maximumf %180, %181 : vector<2x128xf32>
    %183 = arith.truncf %182 : vector<2x128xf32> to vector<2x128xbf16>
    %c0_53 = arith.constant 0 : index
    %c384 = arith.constant 384 : index
    %184 = vector.load %arg4[%c0_53, %c384] : memref<2x2048xbf16, #tpu.memory_space<vmem>>, vector<2x128xbf16>
    tpu.vector_store %arg4[%c0_53, %c384], %183 {strides = array<i32>} : memref<2x2048xbf16, #tpu.memory_space<vmem>>, vector<2x128xbf16>,
    %185 = vector.extract_strided_slice %2 {offsets = [0, 512], sizes = [2, 128], strides = [1, 1]} : vector<2x2048xf32> to vector<2x128xf32>
    %186 = vector.broadcast %145 : vector<1x128xf32> to vector<2x128xf32>
    %187 = arith.mulf %185, %186 : vector<2x128xf32>
    %188 = vector.broadcast %148 : vector<1x128xf32> to vector<2x128xf32>
    %189 = arith.addf %187, %188 : vector<2x128xf32>
    %cst_54 = arith.constant 0.000000e+00 : f32
    %190 = vector.broadcast %cst_54 : f32 to vector<2x128xf32>
    %191 = arith.maximumf %189, %190 : vector<2x128xf32>
    %192 = arith.truncf %191 : vector<2x128xf32> to vector<2x128xbf16>
    %c0_55 = arith.constant 0 : index
    %c512 = arith.constant 512 : index
    %193 = vector.load %arg4[%c0_55, %c512] : memref<2x2048xbf16, #tpu.memory_space<vmem>>, vector<2x128xbf16>
    tpu.vector_store %arg4[%c0_55, %c512], %192 {strides = array<i32>} : memref<2x2048xbf16, #tpu.memory_space<vmem>>, vector<2x128xbf16>,
    %194 = vector.extract_strided_slice %2 {offsets = [0, 640], sizes = [2, 128], strides = [1, 1]} : vector<2x2048xf32> to vector<2x128xf32>
    %195 = vector.broadcast %145 : vector<1x128xf32> to vector<2x128xf32>
    %196 = arith.mulf %194, %195 : vector<2x128xf32>
    %197 = vector.broadcast %148 : vector<1x128xf32> to vector<2x128xf32>
    %198 = arith.addf %196, %197 : vector<2x128xf32>
    %cst_56 = arith.constant 0.000000e+00 : f32
    %199 = vector.broadcast %cst_56 : f32 to vector<2x128xf32>
    %200 = arith.maximumf %198, %199 : vector<2x128xf32>
    %201 = arith.truncf %200 : vector<2x128xf32> to vector<2x128xbf16>
    %c0_57 = arith.constant 0 : index
    %c640 = arith.constant 640 : index
    %202 = vector.load %arg4[%c0_57, %c640] : memref<2x2048xbf16, #tpu.memory_space<vmem>>, vector<2x128xbf16>
    tpu.vector_store %arg4[%c0_57, %c640], %201 {strides = array<i32>} : memref<2x2048xbf16, #tpu.memory_space<vmem>>, vector<2x128xbf16>,
    %203 = vector.extract_strided_slice %2 {offsets = [0, 768], sizes = [2, 128], strides = [1, 1]} : vector<2x2048xf32> to vector<2x128xf32>
    %204 = vector.broadcast %145 : vector<1x128xf32> to vector<2x128xf32>
    %205 = arith.mulf %203, %204 : vector<2x128xf32>
    %206 = vector.broadcast %148 : vector<1x128xf32> to vector<2x128xf32>
    %207 = arith.addf %205, %206 : vector<2x128xf32>
    %cst_58 = arith.constant 0.000000e+00 : f32
    %208 = vector.broadcast %cst_58 : f32 to vector<2x128xf32>
    %209 = arith.maximumf %207, %208 : vector<2x128xf32>
    %210 = arith.truncf %209 : vector<2x128xf32> to vector<2x128xbf16>
    %c0_59 = arith.constant 0 : index
    %c768 = arith.constant 768 : index
    %211 = vector.load %arg4[%c0_59, %c768] : memref<2x2048xbf16, #tpu.memory_space<vmem>>, vector<2x128xbf16>
    tpu.vector_store %arg4[%c0_59, %c768], %210 {strides = array<i32>} : memref<2x2048xbf16, #tpu.memory_space<vmem>>, vector<2x128xbf16>,
    %212 = vector.extract_strided_slice %2 {offsets = [0, 896], sizes = [2, 128], strides = [1, 1]} : vector<2x2048xf32> to vector<2x128xf32>
    %213 = vector.broadcast %145 : vector<1x128xf32> to vector<2x128xf32>
    %214 = arith.mulf %212, %213 : vector<2x128xf32>
    %215 = vector.broadcast %148 : vector<1x128xf32> to vector<2x128xf32>
    %216 = arith.addf %214, %215 : vector<2x128xf32>
    %cst_60 = arith.constant 0.000000e+00 : f32
    %217 = vector.broadcast %cst_60 : f32 to vector<2x128xf32>
    %218 = arith.maximumf %216, %217 : vector<2x128xf32>
    %219 = arith.truncf %218 : vector<2x128xf32> to vector<2x128xbf16>
    %c0_61 = arith.constant 0 : index
    %c896 = arith.constant 896 : index
    %220 = vector.load %arg4[%c0_61, %c896] : memref<2x2048xbf16, #tpu.memory_space<vmem>>, vector<2x128xbf16>
    tpu.vector_store %arg4[%c0_61, %c896], %219 {strides = array<i32>} : memref<2x2048xbf16, #tpu.memory_space<vmem>>, vector<2x128xbf16>,
    %221 = vector.extract_strided_slice %2 {offsets = [0, 1024], sizes = [2, 128], strides = [1, 1]} : vector<2x2048xf32> to vector<2x128xf32>
    %222 = vector.broadcast %145 : vector<1x128xf32> to vector<2x128xf32>
    %223 = arith.mulf %221, %222 : vector<2x128xf32>
    %224 = vector.broadcast %148 : vector<1x128xf32> to vector<2x128xf32>
    %225 = arith.addf %223, %224 : vector<2x128xf32>
    %cst_62 = arith.constant 0.000000e+00 : f32
    %226 = vector.broadcast %cst_62 : f32 to vector<2x128xf32>
    %227 = arith.maximumf %225, %226 : vector<2x128xf32>
    %228 = arith.truncf %227 : vector<2x128xf32> to vector<2x128xbf16>
    %c0_63 = arith.constant 0 : index
    %c1024 = arith.constant 1024 : index
    %229 = vector.load %arg4[%c0_63, %c1024] : memref<2x2048xbf16, #tpu.memory_space<vmem>>, vector<2x128xbf16>
    tpu.vector_store %arg4[%c0_63, %c1024], %228 {strides = array<i32>} : memref<2x2048xbf16, #tpu.memory_space<vmem>>, vector<2x128xbf16>,
    %230 = vector.extract_strided_slice %2 {offsets = [0, 1152], sizes = [2, 128], strides = [1, 1]} : vector<2x2048xf32> to vector<2x128xf32>
    %231 = vector.broadcast %145 : vector<1x128xf32> to vector<2x128xf32>
    %232 = arith.mulf %230, %231 : vector<2x128xf32>
    %233 = vector.broadcast %148 : vector<1x128xf32> to vector<2x128xf32>
    %234 = arith.addf %232, %233 : vector<2x128xf32>
    %cst_64 = arith.constant 0.000000e+00 : f32
    %235 = vector.broadcast %cst_64 : f32 to vector<2x128xf32>
    %236 = arith.maximumf %234, %235 : vector<2x128xf32>
    %237 = arith.truncf %236 : vector<2x128xf32> to vector<2x128xbf16>
    %c0_65 = arith.constant 0 : index
    %c1152 = arith.constant 1152 : index
    %238 = vector.load %arg4[%c0_65, %c1152] : memref<2x2048xbf16, #tpu.memory_space<vmem>>, vector<2x128xbf16>
    tpu.vector_store %arg4[%c0_65, %c1152], %237 {strides = array<i32>} : memref<2x2048xbf16, #tpu.memory_space<vmem>>, vector<2x128xbf16>,
    %239 = vector.extract_strided_slice %2 {offsets = [0, 1280], sizes = [2, 128], strides = [1, 1]} : vector<2x2048xf32> to vector<2x128xf32>
    %240 = vector.broadcast %145 : vector<1x128xf32> to vector<2x128xf32>
    %241 = arith.mulf %239, %240 : vector<2x128xf32>
    %242 = vector.broadcast %148 : vector<1x128xf32> to vector<2x128xf32>
    %243 = arith.addf %241, %242 : vector<2x128xf32>
    %cst_66 = arith.constant 0.000000e+00 : f32
    %244 = vector.broadcast %cst_66 : f32 to vector<2x128xf32>
    %245 = arith.maximumf %243, %244 : vector<2x128xf32>
    %246 = arith.truncf %245 : vector<2x128xf32> to vector<2x128xbf16>
    %c0_67 = arith.constant 0 : index
    %c1280 = arith.constant 1280 : index
    %247 = vector.load %arg4[%c0_67, %c1280] : memref<2x2048xbf16, #tpu.memory_space<vmem>>, vector<2x128xbf16>
    tpu.vector_store %arg4[%c0_67, %c1280], %246 {strides = array<i32>} : memref<2x2048xbf16, #tpu.memory_space<vmem>>, vector<2x128xbf16>,
    %248 = vector.extract_strided_slice %2 {offsets = [0, 1408], sizes = [2, 128], strides = [1, 1]} : vector<2x2048xf32> to vector<2x128xf32>
    %249 = vector.broadcast %145 : vector<1x128xf32> to vector<2x128xf32>
    %250 = arith.mulf %248, %249 : vector<2x128xf32>
    %251 = vector.broadcast %148 : vector<1x128xf32> to vector<2x128xf32>
    %252 = arith.addf %250, %251 : vector<2x128xf32>
    %cst_68 = arith.constant 0.000000e+00 : f32
    %253 = vector.broadcast %cst_68 : f32 to vector<2x128xf32>
    %254 = arith.maximumf %252, %253 : vector<2x128xf32>
    %255 = arith.truncf %254 : vector<2x128xf32> to vector<2x128xbf16>
    %c0_69 = arith.constant 0 : index
    %c1408 = arith.constant 1408 : index
    %256 = vector.load %arg4[%c0_69, %c1408] : memref<2x2048xbf16, #tpu.memory_space<vmem>>, vector<2x128xbf16>
    tpu.vector_store %arg4[%c0_69, %c1408], %255 {strides = array<i32>} : memref<2x2048xbf16, #tpu.memory_space<vmem>>, vector<2x128xbf16>,
    %257 = vector.extract_strided_slice %2 {offsets = [0, 1536], sizes = [2, 128], strides = [1, 1]} : vector<2x2048xf32> to vector<2x128xf32>
    %258 = vector.broadcast %145 : vector<1x128xf32> to vector<2x128xf32>
    %259 = arith.mulf %257, %258 : vector<2x128xf32>
    %260 = vector.broadcast %148 : vector<1x128xf32> to vector<2x128xf32>
    %261 = arith.addf %259, %260 : vector<2x128xf32>
    %cst_70 = arith.constant 0.000000e+00 : f32
    %262 = vector.broadcast %cst_70 : f32 to vector<2x128xf32>
    %263 = arith.maximumf %261, %262 : vector<2x128xf32>
    %264 = arith.truncf %263 : vector<2x128xf32> to vector<2x128xbf16>
    %c0_71 = arith.constant 0 : index
    %c1536 = arith.constant 1536 : index
    %265 = vector.load %arg4[%c0_71, %c1536] : memref<2x2048xbf16, #tpu.memory_space<vmem>>, vector<2x128xbf16>
    tpu.vector_store %arg4[%c0_71, %c1536], %264 {strides = array<i32>} : memref<2x2048xbf16, #tpu.memory_space<vmem>>, vector<2x128xbf16>,
    %266 = vector.extract_strided_slice %2 {offsets = [0, 1664], sizes = [2, 128], strides = [1, 1]} : vector<2x2048xf32> to vector<2x128xf32>
    %267 = vector.broadcast %145 : vector<1x128xf32> to vector<2x128xf32>
    %268 = arith.mulf %266, %267 : vector<2x128xf32>
    %269 = vector.broadcast %148 : vector<1x128xf32> to vector<2x128xf32>
    %270 = arith.addf %268, %269 : vector<2x128xf32>
    %cst_72 = arith.constant 0.000000e+00 : f32
    %271 = vector.broadcast %cst_72 : f32 to vector<2x128xf32>
    %272 = arith.maximumf %270, %271 : vector<2x128xf32>
    %273 = arith.truncf %272 : vector<2x128xf32> to vector<2x128xbf16>
    %c0_73 = arith.constant 0 : index
    %c1664 = arith.constant 1664 : index
    %274 = vector.load %arg4[%c0_73, %c1664] : memref<2x2048xbf16, #tpu.memory_space<vmem>>, vector<2x128xbf16>
    tpu.vector_store %arg4[%c0_73, %c1664], %273 {strides = array<i32>} : memref<2x2048xbf16, #tpu.memory_space<vmem>>, vector<2x128xbf16>,
    %275 = vector.extract_strided_slice %2 {offsets = [0, 1792], sizes = [2, 128], strides = [1, 1]} : vector<2x2048xf32> to vector<2x128xf32>
    %276 = vector.broadcast %145 : vector<1x128xf32> to vector<2x128xf32>
    %277 = arith.mulf %275, %276 : vector<2x128xf32>
    %278 = vector.broadcast %148 : vector<1x128xf32> to vector<2x128xf32>
    %279 = arith.addf %277, %278 : vector<2x128xf32>
    %cst_74 = arith.constant 0.000000e+00 : f32
    %280 = vector.broadcast %cst_74 : f32 to vector<2x128xf32>
    %281 = arith.maximumf %279, %280 : vector<2x128xf32>
    %282 = arith.truncf %281 : vector<2x128xf32> to vector<2x128xbf16>
    %c0_75 = arith.constant 0 : index
    %c1792 = arith.constant 1792 : index
    %283 = vector.load %arg4[%c0_75, %c1792] : memref<2x2048xbf16, #tpu.memory_space<vmem>>, vector<2x128xbf16>
    tpu.vector_store %arg4[%c0_75, %c1792], %282 {strides = array<i32>} : memref<2x2048xbf16, #tpu.memory_space<vmem>>, vector<2x128xbf16>,
    %284 = vector.extract_strided_slice %2 {offsets = [0, 1920], sizes = [2, 128], strides = [1, 1]} : vector<2x2048xf32> to vector<2x128xf32>
    %285 = vector.broadcast %145 : vector<1x128xf32> to vector<2x128xf32>
    %286 = arith.mulf %284, %285 : vector<2x128xf32>
    %287 = vector.broadcast %148 : vector<1x128xf32> to vector<2x128xf32>
    %288 = arith.addf %286, %287 : vector<2x128xf32>
    %cst_76 = arith.constant 0.000000e+00 : f32
    %289 = vector.broadcast %cst_76 : f32 to vector<2x128xf32>
    %290 = arith.maximumf %288, %289 : vector<2x128xf32>
    %291 = arith.truncf %290 : vector<2x128xf32> to vector<2x128xbf16>
    %c0_77 = arith.constant 0 : index
    %c1920 = arith.constant 1920 : index
    %292 = vector.load %arg4[%c0_77, %c1920] : memref<2x2048xbf16, #tpu.memory_space<vmem>>, vector<2x128xbf16>
    tpu.vector_store %arg4[%c0_77, %c1920], %291 {strides = array<i32>} : memref<2x2048xbf16, #tpu.memory_space<vmem>>, vector<2x128xbf16>,
    return
  }
}

module attributes {stable_mosaic.version = 11 : i64} {
  func.func @_bn_act_kernel(%arg0: i32, %arg1: i32, %arg2: memref<1x32x128xbf16, #tpu.memory_space<vmem>>, %arg3: memref<1x128xf32, #tpu.memory_space<vmem>>, %arg4: memref<1x128xf32, #tpu.memory_space<vmem>>, %arg5: memref<1x128xf32, #tpu.memory_space<vmem>>, %arg6: memref<1x128xf32, #tpu.memory_space<vmem>>, %arg7: memref<1x32x128xbf16, #tpu.memory_space<vmem>>) attributes {dimension_semantics = [#tpu.dimension_semantics<parallel>, #tpu.dimension_semantics<parallel>], iteration_bounds = array<i64: 4, 1>, scalar_prefetch = 0 : i64, scratch_operands = 0 : i64, tpu.core_type = #tpu.core_type<tc>, window_params = [{transform_indices = @transform_0, window_bounds = array<i64: 1, 32, 128>}, {pipeline_mode = #tpu.pipeline_mode<synchronous>, transform_indices = @transform_1, window_bounds = array<i64: 1, 128>}, {pipeline_mode = #tpu.pipeline_mode<synchronous>, transform_indices = @transform_2, window_bounds = array<i64: 1, 128>}, {pipeline_mode = #tpu.pipeline_mode<synchronous>, transform_indices = @transform_3, window_bounds = array<i64: 1, 128>}, {pipeline_mode = #tpu.pipeline_mode<synchronous>, transform_indices = @transform_4, window_bounds = array<i64: 1, 128>}, {transform_indices = @transform_5, window_bounds = array<i64: 1, 32, 128>}]} {
    %c0 = arith.constant 0 : index
    %c0_0 = arith.constant 0 : index
    %0 = vector.load %arg3[%c0, %c0_0] : memref<1x128xf32, #tpu.memory_space<vmem>>, vector<1x128xf32>
    %cst = arith.constant 7.812500e-03 : f32
    %1 = vector.broadcast %cst : f32 to vector<1x128xf32>
    %2 = arith.mulf %0, %1 : vector<1x128xf32>
    %c0_1 = arith.constant 0 : index
    %c0_2 = arith.constant 0 : index
    %3 = vector.load %arg4[%c0_1, %c0_2] : memref<1x128xf32, #tpu.memory_space<vmem>>, vector<1x128xf32>
    %cst_3 = arith.constant 7.812500e-03 : f32
    %4 = vector.broadcast %cst_3 : f32 to vector<1x128xf32>
    %5 = arith.mulf %3, %4 : vector<1x128xf32>
    %6 = arith.mulf %2, %2 : vector<1x128xf32>
    %7 = arith.subf %5, %6 : vector<1x128xf32>
    %cst_4 = arith.constant 0.000000e+00 : f32
    %8 = vector.broadcast %cst_4 : f32 to vector<1x128xf32>
    %9 = arith.maximumf %7, %8 : vector<1x128xf32>
    %c0_5 = arith.constant 0 : index
    %c0_6 = arith.constant 0 : index
    %10 = vector.load %arg5[%c0_5, %c0_6] : memref<1x128xf32, #tpu.memory_space<vmem>>, vector<1x128xf32>
    %cst_7 = arith.constant 9.99999974E-6 : f32
    %11 = vector.broadcast %cst_7 : f32 to vector<1x128xf32>
    %12 = arith.addf %9, %11 : vector<1x128xf32>
    %13 = math.rsqrt %12 : vector<1x128xf32>
    %14 = arith.mulf %10, %13 : vector<1x128xf32>
    %c0_8 = arith.constant 0 : index
    %c0_9 = arith.constant 0 : index
    %15 = vector.load %arg6[%c0_8, %c0_9] : memref<1x128xf32, #tpu.memory_space<vmem>>, vector<1x128xf32>
    %16 = arith.mulf %2, %14 : vector<1x128xf32>
    %17 = arith.subf %15, %16 : vector<1x128xf32>
    %c0_10 = arith.constant 0 : index
    %c0_11 = arith.constant 0 : index
    %c0_12 = arith.constant 0 : index
    %18 = vector.load %arg2[%c0_10, %c0_11, %c0_12] : memref<1x32x128xbf16, #tpu.memory_space<vmem>>, vector<1x32x128xbf16>
    %19 = vector.shape_cast %18 : vector<1x32x128xbf16> to vector<32x128xbf16>
    %20 = arith.extf %19 : vector<32x128xbf16> to vector<32x128xf32>
    %21 = vector.broadcast %14 : vector<1x128xf32> to vector<32x128xf32>
    %22 = arith.mulf %20, %21 : vector<32x128xf32>
    %23 = vector.broadcast %17 : vector<1x128xf32> to vector<32x128xf32>
    %24 = arith.addf %22, %23 : vector<32x128xf32>
    %cst_13 = arith.constant 0.000000e+00 : f32
    %25 = vector.broadcast %cst_13 : f32 to vector<32x128xf32>
    %26 = arith.maximumf %24, %25 : vector<32x128xf32>
    %27 = arith.truncf %26 : vector<32x128xf32> to vector<32x128xbf16>
    %c0_14 = arith.constant 0 : index
    %c0_15 = arith.constant 0 : index
    %c0_16 = arith.constant 0 : index
    %28 = vector.load %arg7[%c0_14, %c0_15, %c0_16] : memref<1x32x128xbf16, #tpu.memory_space<vmem>>, vector<1x32x128xbf16>
    %29 = vector.shape_cast %28 : vector<1x32x128xbf16> to vector<32x128xbf16>
    %30 = vector.shape_cast %27 : vector<32x128xbf16> to vector<1x32x128xbf16>
    tpu.vector_store %arg7[%c0_14, %c0_15, %c0_16], %30 {strides = array<i32>} : memref<1x32x128xbf16, #tpu.memory_space<vmem>>, vector<1x32x128xbf16>,
    return
  }
  func.func @transform_0(%arg0: i32, %arg1: i32) -> (i32, i32, i32) {
    %c0_i32 = arith.constant 0 : i32
    %c0_i32_0 = arith.constant 0 : i32
    return %arg0, %arg1, %c0_i32 : i32, i32, i32
  }
  func.func @transform_1(%arg0: i32, %arg1: i32) -> (i32, i32) {
    %c0_i32 = arith.constant 0 : i32
    %c0_i32_0 = arith.constant 0 : i32
    %c0_i32_1 = arith.constant 0 : i32
    return %c0_i32, %c0_i32_0 : i32, i32
  }
  func.func @transform_2(%arg0: i32, %arg1: i32) -> (i32, i32) {
    %c0_i32 = arith.constant 0 : i32
    %c0_i32_0 = arith.constant 0 : i32
    %c0_i32_1 = arith.constant 0 : i32
    return %c0_i32, %c0_i32_0 : i32, i32
  }
  func.func @transform_3(%arg0: i32, %arg1: i32) -> (i32, i32) {
    %c0_i32 = arith.constant 0 : i32
    %c0_i32_0 = arith.constant 0 : i32
    %c0_i32_1 = arith.constant 0 : i32
    return %c0_i32, %c0_i32_0 : i32, i32
  }
  func.func @transform_4(%arg0: i32, %arg1: i32) -> (i32, i32) {
    %c0_i32 = arith.constant 0 : i32
    %c0_i32_0 = arith.constant 0 : i32
    %c0_i32_1 = arith.constant 0 : i32
    return %c0_i32, %c0_i32_0 : i32, i32
  }
  func.func @transform_5(%arg0: i32, %arg1: i32) -> (i32, i32, i32) {
    %c0_i32 = arith.constant 0 : i32
    %c0_i32_0 = arith.constant 0 : i32
    return %arg0, %arg1, %c0_i32 : i32, i32, i32
  }
}

module attributes {stable_mosaic.version = 11 : i64} {
  func.func @_mm_stats_kernel(%arg0: i32, %arg1: i32, %arg2: memref<1x32x128xbf16, #tpu.memory_space<vmem>>, %arg3: memref<1x128x128xbf16, #tpu.memory_space<vmem>>, %arg4: memref<1x32x128xbf16, #tpu.memory_space<vmem>>, %arg5: memref<1x1x2x128xf32, #tpu.memory_space<vmem>>) attributes {dimension_semantics = [#tpu.dimension_semantics<parallel>, #tpu.dimension_semantics<parallel>], iteration_bounds = array<i64: 4, 1>, scalar_prefetch = 0 : i64, scratch_operands = 0 : i64, tpu.core_type = #tpu.core_type<tc>, window_params = [{transform_indices = @transform_0, window_bounds = array<i64: 1, 32, 128>}, {transform_indices = @transform_1, window_bounds = array<i64: 1, 128, 128>}, {transform_indices = @transform_2, window_bounds = array<i64: 1, 32, 128>}, {transform_indices = @transform_3, window_bounds = array<i64: 1, 1, 2, 128>}]} {
    %c0 = arith.constant 0 : index
    %c0_0 = arith.constant 0 : index
    %c0_1 = arith.constant 0 : index
    %0 = vector.load %arg2[%c0, %c0_0, %c0_1] : memref<1x32x128xbf16, #tpu.memory_space<vmem>>, vector<1x32x128xbf16>
    %1 = vector.shape_cast %0 : vector<1x32x128xbf16> to vector<32x128xbf16>
    %c0_2 = arith.constant 0 : index
    %c0_3 = arith.constant 0 : index
    %c0_4 = arith.constant 0 : index
    %2 = vector.load %arg3[%c0_2, %c0_3, %c0_4] : memref<1x128x128xbf16, #tpu.memory_space<vmem>>, vector<1x128x128xbf16>
    %3 = vector.shape_cast %2 : vector<1x128x128xbf16> to vector<128x128xbf16>
    %cst = arith.constant dense<0.000000e+00> : vector<32x128xf32>
    %4 = tpu.matmul %1, %3, %cst {dimension_numbers = #tpu.dot_dimension_numbers<[1], [0], [0], [1], [0, 0, 1, 1], [], []>} : vector<32x128xbf16>, vector<128x128xbf16>, vector<32x128xf32> -> vector<32x128xf32>
    %5 = arith.truncf %4 : vector<32x128xf32> to vector<32x128xbf16>
    %c0_5 = arith.constant 0 : index
    %c0_6 = arith.constant 0 : index
    %c0_7 = arith.constant 0 : index
    %6 = vector.load %arg4[%c0_5, %c0_6, %c0_7] : memref<1x32x128xbf16, #tpu.memory_space<vmem>>, vector<1x32x128xbf16>
    %7 = vector.shape_cast %6 : vector<1x32x128xbf16> to vector<32x128xbf16>
    %8 = vector.shape_cast %5 : vector<32x128xbf16> to vector<1x32x128xbf16>
    tpu.vector_store %arg4[%c0_5, %c0_6, %c0_7], %8 {strides = array<i32>} : memref<1x32x128xbf16, #tpu.memory_space<vmem>>, vector<1x32x128xbf16>,
    %cst_8 = arith.constant dense<0.000000e+00> : vector<128xf32>
    %9 = vector.multi_reduction <add>, %4, %cst_8 [0] : vector<32x128xf32> to vector<128xf32>
    %10 = vector.shape_cast %9 : vector<128xf32> to vector<1x128xf32>
    %c0_9 = arith.constant 0 : index
    %c0_10 = arith.constant 0 : index
    %c0_11 = arith.constant 0 : index
    %c0_12 = arith.constant 0 : index
    %11 = vector.load %arg5[%c0_9, %c0_10, %c0_11, %c0_12] : memref<1x1x2x128xf32, #tpu.memory_space<vmem>>, vector<1x1x1x128xf32>
    %12 = vector.shape_cast %11 : vector<1x1x1x128xf32> to vector<1x128xf32>
    %13 = vector.shape_cast %10 : vector<1x128xf32> to vector<1x1x1x128xf32>
    tpu.vector_store %arg5[%c0_9, %c0_10, %c0_11, %c0_12], %13 {strides = array<i32>} : memref<1x1x2x128xf32, #tpu.memory_space<vmem>>, vector<1x1x1x128xf32>,
    %14 = arith.mulf %4, %4 : vector<32x128xf32>
    %cst_13 = arith.constant dense<0.000000e+00> : vector<128xf32>
    %15 = vector.multi_reduction <add>, %14, %cst_13 [0] : vector<32x128xf32> to vector<128xf32>
    %16 = vector.shape_cast %15 : vector<128xf32> to vector<1x128xf32>
    %c0_14 = arith.constant 0 : index
    %c0_15 = arith.constant 0 : index
    %c1 = arith.constant 1 : index
    %c0_16 = arith.constant 0 : index
    %17 = vector.load %arg5[%c0_14, %c0_15, %c1, %c0_16] : memref<1x1x2x128xf32, #tpu.memory_space<vmem>>, vector<1x1x1x128xf32>
    %18 = vector.shape_cast %17 : vector<1x1x1x128xf32> to vector<1x128xf32>
    %19 = vector.shape_cast %16 : vector<1x128xf32> to vector<1x1x1x128xf32>
    tpu.vector_store %arg5[%c0_14, %c0_15, %c1, %c0_16], %19 {strides = array<i32>} : memref<1x1x2x128xf32, #tpu.memory_space<vmem>>, vector<1x1x1x128xf32>,
    return
  }
  func.func @transform_0(%arg0: i32, %arg1: i32) -> (i32, i32, i32) {
    %c0_i32 = arith.constant 0 : i32
    %c0_i32_0 = arith.constant 0 : i32
    return %arg0, %arg1, %c0_i32 : i32, i32, i32
  }
  func.func @transform_1(%arg0: i32, %arg1: i32) -> (i32, i32, i32) {
    %c0_i32 = arith.constant 0 : i32
    %c0_i32_0 = arith.constant 0 : i32
    %c0_i32_1 = arith.constant 0 : i32
    return %arg0, %c0_i32, %c0_i32_0 : i32, i32, i32
  }
  func.func @transform_2(%arg0: i32, %arg1: i32) -> (i32, i32, i32) {
    %c0_i32 = arith.constant 0 : i32
    %c0_i32_0 = arith.constant 0 : i32
    return %arg0, %arg1, %c0_i32 : i32, i32, i32
  }
  func.func @transform_3(%arg0: i32, %arg1: i32) -> (i32, i32, i32, i32) {
    %c0_i32 = arith.constant 0 : i32
    %c0_i32_0 = arith.constant 0 : i32
    %c0_i32_1 = arith.constant 0 : i32
    return %arg0, %arg1, %c0_i32, %c0_i32_0 : i32, i32, i32, i32
  }
}

module attributes {stable_mosaic.version = 11 : i64} {
  func.func @_mm_act_kernel(%arg0: i32, %arg1: i32, %arg2: memref<1x128x128xbf16, #tpu.memory_space<vmem>>, %arg3: memref<1x128x128xbf16, #tpu.memory_space<vmem>>, %arg4: memref<1x128x128xbf16, #tpu.memory_space<vmem>>) attributes {dimension_semantics = [#tpu.dimension_semantics<parallel>, #tpu.dimension_semantics<parallel>], iteration_bounds = array<i64: 4, 1>, scalar_prefetch = 0 : i64, scratch_operands = 0 : i64, tpu.core_type = #tpu.core_type<tc>, window_params = [{transform_indices = @transform_0, window_bounds = array<i64: 1, 128, 128>}, {transform_indices = @transform_1, window_bounds = array<i64: 1, 128, 128>}, {transform_indices = @transform_2, window_bounds = array<i64: 1, 128, 128>}]} {
    %c0 = arith.constant 0 : index
    %c0_0 = arith.constant 0 : index
    %c0_1 = arith.constant 0 : index
    %0 = vector.load %arg2[%c0, %c0_0, %c0_1] : memref<1x128x128xbf16, #tpu.memory_space<vmem>>, vector<1x128x128xbf16>
    %1 = vector.shape_cast %0 : vector<1x128x128xbf16> to vector<128x128xbf16>
    %c0_2 = arith.constant 0 : index
    %c0_3 = arith.constant 0 : index
    %c0_4 = arith.constant 0 : index
    %2 = vector.load %arg3[%c0_2, %c0_3, %c0_4] : memref<1x128x128xbf16, #tpu.memory_space<vmem>>, vector<1x128x128xbf16>
    %3 = vector.shape_cast %2 : vector<1x128x128xbf16> to vector<128x128xbf16>
    %cst = arith.constant dense<0.000000e+00> : vector<128x128xf32>
    %4 = tpu.matmul %1, %3, %cst {dimension_numbers = #tpu.dot_dimension_numbers<[1], [0], [0], [1], [0, 0, 1, 1], [], []>} : vector<128x128xbf16>, vector<128x128xbf16>, vector<128x128xf32> -> vector<128x128xf32>
    %5 = math.tanh %4 : vector<128x128xf32>
    %6 = arith.truncf %5 : vector<128x128xf32> to vector<128x128xbf16>
    %c0_5 = arith.constant 0 : index
    %c0_6 = arith.constant 0 : index
    %c0_7 = arith.constant 0 : index
    %7 = vector.load %arg4[%c0_5, %c0_6, %c0_7] : memref<1x128x128xbf16, #tpu.memory_space<vmem>>, vector<1x128x128xbf16>
    %8 = vector.shape_cast %7 : vector<1x128x128xbf16> to vector<128x128xbf16>
    %9 = vector.shape_cast %6 : vector<128x128xbf16> to vector<1x128x128xbf16>
    tpu.vector_store %arg4[%c0_5, %c0_6, %c0_7], %9 {strides = array<i32>} : memref<1x128x128xbf16, #tpu.memory_space<vmem>>, vector<1x128x128xbf16>,
    return
  }
  func.func @transform_0(%arg0: i32, %arg1: i32) -> (i32, i32, i32) {
    %c0_i32 = arith.constant 0 : i32
    %c0_i32_0 = arith.constant 0 : i32
    return %arg0, %arg1, %c0_i32 : i32, i32, i32
  }
  func.func @transform_1(%arg0: i32, %arg1: i32) -> (i32, i32, i32) {
    %c0_i32 = arith.constant 0 : i32
    %c0_i32_0 = arith.constant 0 : i32
    %c0_i32_1 = arith.constant 0 : i32
    return %arg0, %c0_i32, %c0_i32_0 : i32, i32, i32
  }
  func.func @transform_2(%arg0: i32, %arg1: i32) -> (i32, i32, i32) {
    %c0_i32 = arith.constant 0 : i32
    %c0_i32_0 = arith.constant 0 : i32
    return %arg0, %arg1, %c0_i32 : i32, i32, i32
  }
}

</mosaic_0001>

<llo_original>
// kernel: _lambda_.9
$region0: #{_lambda_.9}
  #allocation0 [shape = 'u32[]', space=smem, size = 0x4, offset = 0x4, fixed_abs, tag = 'smem constant byte address 0x4 - core index']
  #allocation1 [shape = 'u32[72,128]{1,0:T(1,128)}', space=vmem, size = 0x9000, scoped, tag = 'internal scratch']
  %s0 = inlined_call_operand.vmem [shape: bf16[1,128,128], index: 0, kind: input, shape index: {}]
  %s1 = inlined_call_operand.vmem [shape: bf16[1,128,128], index: 1, kind: input, shape index: {}]
  %s2 = inlined_call_operand.vmem [shape: bf16[1,128,128], index: 2, kind: output, shape index: {}]
  %s3 = sld [smem:[#allocation0]]
  $region18: #{_lambda_.9} parent=0
    _
  %s5 = ssub.s32 1, %s3
  %s6 = scalar_select 0, %s5, %s3
  // Predicated region
  $region2: #{_lambda_.9} parent=0 // pred_check
    _
  $region3: #{_lambda_.9} parent=0 // pred_check_branch
    %8 = sbr.rel (0) target = $region5
  $region4: #{_lambda_.9} parent=0 // pred_region
    _
  $region5: #{_lambda_.9} parent=0 // pred_fallthru
    _
  // Predicated region
  $region6: #{_lambda_.9} parent=0 // pred_check
    _
  $region7: #{_lambda_.9} parent=0 // pred_check_branch
    %10 = sbr.rel (0) target = $region9
  $region8: #{_lambda_.9} parent=0 // pred_region
    _
  $region9: #{_lambda_.9} parent=0 // pred_fallthru
    _
  %v11 = vld [vmem:[%s0] sm:$0xf]
  %v12 = vld [vmem:[%s0 + $0x4] sm:$0xf]
  %v13 = vld [vmem:[%s0 + $0x8] sm:$0xf]
  %v14 = vld [vmem:[%s0 + $0xc] sm:$0xf]
  %v15 = vld [vmem:[%s0 + $0x10] sm:$0xf]
  %v16 = vld [vmem:[%s0 + $0x14] sm:$0xf]
  %v17 = vld [vmem:[%s0 + $0x18] sm:$0xf]
  %v18 = vld [vmem:[%s0 + $0x1c] sm:$0xf]
  %v19 = vld [vmem:[%s0 + $0x20] sm:$0xf]
  %v20 = vld [vmem:[%s0 + $0x24] sm:$0xf]
  %v21 = vld [vmem:[%s0 + $0x28] sm:$0xf]
  %v22 = vld [vmem:[%s0 + $0x2c] sm:$0xf]
  %v23 = vld [vmem:[%s0 + $0x30] sm:$0xf]
  %v24 = vld [vmem:[%s0 + $0x34] sm:$0xf]
  %v25 = vld [vmem:[%s0 + $0x38] sm:$0xf]
  %v26 = vld [vmem:[%s0 + $0x3c] sm:$0xf]
  %v27 = vld [vmem:[%s1] sm:$0xf]
  %v28 = vld [vmem:[%s1 + $0x4] sm:$0xf]
  %v29 = vld [vmem:[%s1 + $0x8] sm:$0xf]
  %v30 = vld [vmem:[%s1 + $0xc] sm:$0xf]
  %v31 = vld [vmem:[%s1 + $0x10] sm:$0xf]
  %v32 = vld [vmem:[%s1 + $0x14] sm:$0xf]
  %v33 = vld [vmem:[%s1 + $0x18] sm:$0xf]
  %v34 = vld [vmem:[%s1 + $0x1c] sm:$0xf]
  %v35 = vld [vmem:[%s1 + $0x20] sm:$0xf]
  %v36 = vld [vmem:[%s1 + $0x24] sm:$0xf]
  %v37 = vld [vmem:[%s1 + $0x28] sm:$0xf]
  %v38 = vld [vmem:[%s1 + $0x2c] sm:$0xf]
  %v39 = vld [vmem:[%s1 + $0x30] sm:$0xf]
  %v40 = vld [vmem:[%s1 + $0x34] sm:$0xf]
  %v41 = vld [vmem:[%s1 + $0x38] sm:$0xf]
  %v42 = vld [vmem:[%s1 + $0x3c] sm:$0xf]
  %v59 = vunpack.c.l.b16 %v11
  %v60 = vunpack.c.l.b16 %v12
  %v61 = vunpack.c.l.b16 %v13
  %v62 = vunpack.c.l.b16 %v14
  %v63 = vunpack.c.l.b16 %v15
  %v64 = vunpack.c.l.b16 %v16
  %v65 = vunpack.c.l.b16 %v17
  %v66 = vunpack.c.l.b16 %v18
  %v67 = vunpack.c.l.b16 %v19
  %v68 = vunpack.c.l.b16 %v20
  %v69 = vunpack.c.l.b16 %v21
  %v70 = vunpack.c.l.b16 %v22
  %v71 = vunpack.c.l.b16 %v23
  %v72 = vunpack.c.l.b16 %v24
  %v73 = vunpack.c.l.b16 %v25
  %v74 = vunpack.c.l.b16 %v26
  %v75 = vpack.c.b16 %v60, %v59
  %v76 = vpack.c.b16 %v62, %v61
  %v77 = vpack.c.b16 %v64, %v63
  %v78 = vpack.c.b16 %v66, %v65
  %v79 = vpack.c.b16 %v68, %v67
  %v80 = vpack.c.b16 %v70, %v69
  %v81 = vpack.c.b16 %v72, %v71
  %v82 = vpack.c.b16 %v74, %v73
  %v107 = vunpack.c.l.b16 %v27
  %v108 = vunpack.c.l.b16 %v28
  %v109 = vunpack.c.l.b16 %v29
  %v110 = vunpack.c.l.b16 %v30
  %v111 = vunpack.c.l.b16 %v31
  %v112 = vunpack.c.l.b16 %v32
  %v113 = vunpack.c.l.b16 %v33
  %v114 = vunpack.c.l.b16 %v34
  %v115 = vunpack.c.l.b16 %v35
  %v116 = vunpack.c.l.b16 %v36
  %v117 = vunpack.c.l.b16 %v37
  %v118 = vunpack.c.l.b16 %v38
  %v119 = vunpack.c.l.b16 %v39
  %v120 = vunpack.c.l.b16 %v40
  %v121 = vunpack.c.l.b16 %v41
  %v122 = vunpack.c.l.b16 %v42
  %v123 = vpack.c.b16 %v108, %v107
  %v124 = vpack.c.b16 %v110, %v109
  %v125 = vpack.c.b16 %v112, %v111
  %v126 = vpack.c.b16 %v114, %v113
  %v127 = vpack.c.b16 %v116, %v115
  %v128 = vpack.c.b16 %v118, %v117
  %v129 = vpack.c.b16 %v120, %v119
  %v130 = vpack.c.b16 %v122, %v121
  %139 = vmatpush.bf16.msra.mxu0 %v130
  %140 = vmatpush.bf16.msra.mxu0 %v129
  %141 = vmatpush.bf16.msra.mxu0 %v128
  %142 = vmatpush.bf16.msra.mxu0 %v127
  %143 = vmatpush.bf16.msra.mxu0 %v126
  %144 = vmatpush.bf16.msra.mxu0 %v125
  %145 = vmatpush.bf16.msra.mxu0 %v124
  %146 = vmatpush.bf16.msra.mxu0 %v123
  %147 = vmatmul.bf16.gmra.mxu0 %v75
  %v148 = vpop.f32.mrf.mxu0
  %v149 = vadd.f32 0.0, %v148
  %v150 = vpop.f32.mrf.mxu0
  %v151 = vadd.f32 0.0, %v150
  %152 = vmatmul.bf16.gmra.mxu0 %v76
  %v153 = vpop.f32.mrf.mxu0
  %v154 = vadd.f32 0.0, %v153
  %v155 = vpop.f32.mrf.mxu0
  %v156 = vadd.f32 0.0, %v155
  %157 = vmatmul.bf16.gmra.mxu0 %v77
  %v158 = vpop.f32.mrf.mxu0
  %v159 = vadd.f32 0.0, %v158
  %v160 = vpop.f32.mrf.mxu0
  %v161 = vadd.f32 0.0, %v160
  %162 = vmatmul.bf16.gmra.mxu0 %v78
  %v163 = vpop.f32.mrf.mxu0
  %v164 = vadd.f32 0.0, %v163
  %v165 = vpop.f32.mrf.mxu0
  %v166 = vadd.f32 0.0, %v165
  %167 = vmatmul.bf16.gmra.mxu0 %v79
  %v168 = vpop.f32.mrf.mxu0
  %v169 = vadd.f32 0.0, %v168
  %v170 = vpop.f32.mrf.mxu0
  %v171 = vadd.f32 0.0, %v170
  %172 = vmatmul.bf16.gmra.mxu0 %v80
  %v173 = vpop.f32.mrf.mxu0
  %v174 = vadd.f32 0.0, %v173
  %v175 = vpop.f32.mrf.mxu0
  %v176 = vadd.f32 0.0, %v175
  %177 = vmatmul.bf16.gmra.mxu0 %v81
  %v178 = vpop.f32.mrf.mxu0
  %v179 = vadd.f32 0.0, %v178
  %v180 = vpop.f32.mrf.mxu0
  %v181 = vadd.f32 0.0, %v180
  %182 = vmatmul.bf16.gmra.mxu0 %v82
  %v183 = vpop.f32.mrf.mxu0
  %v184 = vadd.f32 0.0, %v183
  %v185 = vpop.f32.mrf.mxu0
  %v186 = vadd.f32 0.0, %v185
  %187 = vdwg.mxu0
  %vm188 = vcmp.gt.f32.partialorder %v149, 0.0
  %vm189 = vcmp.gt.f32.partialorder %v151, 0.0
  %vm190 = vcmp.gt.f32.partialorder %v154, 0.0
  %vm191 = vcmp.gt.f32.partialorder %v156, 0.0
  %vm192 = vcmp.gt.f32.partialorder %v159, 0.0
  %vm193 = vcmp.gt.f32.partialorder %v161, 0.0
  %vm194 = vcmp.gt.f32.partialorder %v164, 0.0
  %vm195 = vcmp.gt.f32.partialorder %v166, 0.0
  %vm196 = vcmp.gt.f32.partialorder %v169, 0.0
  %vm197 = vcmp.gt.f32.partialorder %v171, 0.0
  %vm198 = vcmp.gt.f32.partialorder %v174, 0.0
  %vm199 = vcmp.gt.f32.partialorder %v176, 0.0
  %vm200 = vcmp.gt.f32.partialorder %v179, 0.0
  %vm201 = vcmp.gt.f32.partialorder %v181, 0.0
  %vm202 = vcmp.gt.f32.partialorder %v184, 0.0
  %vm203 = vcmp.gt.f32.partialorder %v186, 0.0
  %v204 = vmul.f32 %v149, 0.2
  %v205 = vmul.f32 %v151, 0.2
  %v206 = vmul.f32 %v154, 0.2
  %v207 = vmul.f32 %v156, 0.2
  %v208 = vmul.f32 %v159, 0.2
  %v209 = vmul.f32 %v161, 0.2
  %v210 = vmul.f32 %v164, 0.2
  %v211 = vmul.f32 %v166, 0.2
  %v212 = vmul.f32 %v169, 0.2
  %v213 = vmul.f32 %v171, 0.2
  %v214 = vmul.f32 %v174, 0.2
  %v215 = vmul.f32 %v176, 0.2
  %v216 = vmul.f32 %v179, 0.2
  %v217 = vmul.f32 %v181, 0.2
  %v218 = vmul.f32 %v184, 0.2
  %v219 = vmul.f32 %v186, 0.2
  %v220 = vsel %vm188, %v149, %v204
  %v221 = vsel %vm189, %v151, %v205
  %v222 = vsel %vm190, %v154, %v206
  %v223 = vsel %vm191, %v156, %v207
  %v224 = vsel %vm192, %v159, %v208
  %v225 = vsel %vm193, %v161, %v209
  %v226 = vsel %vm194, %v164, %v210
  %v227 = vsel %vm195, %v166, %v211
  %v228 = vsel %vm196, %v169, %v212
  %v229 = vsel %vm197, %v171, %v213
  %v230 = vsel %vm198, %v174, %v214
  %v231 = vsel %vm199, %v176, %v215
  %v232 = vsel %vm200, %v179, %v216
  %v233 = vsel %vm201, %v181, %v217
  %v234 = vsel %vm202, %v184, %v218
  %v235 = vsel %vm203, %v186, %v219
  %v236 = vpack.c.bf16 %v220, %v220
  %v237 = vpack.c.bf16 %v221, %v221
  %v238 = vpack.c.bf16 %v222, %v222
  %v239 = vpack.c.bf16 %v223, %v223
  %v240 = vpack.c.bf16 %v224, %v224
  %v241 = vpack.c.bf16 %v225, %v225
  %v242 = vpack.c.bf16 %v226, %v226
  %v243 = vpack.c.bf16 %v227, %v227
  %v244 = vpack.c.bf16 %v228, %v228
  %v245 = vpack.c.bf16 %v229, %v229
  %v246 = vpack.c.bf16 %v230, %v230
  %v247 = vpack.c.bf16 %v231, %v231
  %v248 = vpack.c.bf16 %v232, %v232
  %v249 = vpack.c.bf16 %v233, %v233
  %v250 = vpack.c.bf16 %v234, %v234
  %v251 = vpack.c.bf16 %v235, %v235
  %252 = vst [vmem:[%s2] sm:$0xf] %v236
  %253 = vst [vmem:[%s2 + $0x4] sm:$0xf] %v237
  %254 = vst [vmem:[%s2 + $0x8] sm:$0xf] %v238
  %255 = vst [vmem:[%s2 + $0xc] sm:$0xf] %v239
  %256 = vst [vmem:[%s2 + $0x10] sm:$0xf] %v240
  %257 = vst [vmem:[%s2 + $0x14] sm:$0xf] %v241
  %258 = vst [vmem:[%s2 + $0x18] sm:$0xf] %v242
  %259 = vst [vmem:[%s2 + $0x1c] sm:$0xf] %v243
  %260 = vst [vmem:[%s2 + $0x20] sm:$0xf] %v244
  %261 = vst [vmem:[%s2 + $0x24] sm:$0xf] %v245
  %262 = vst [vmem:[%s2 + $0x28] sm:$0xf] %v246
  %263 = vst [vmem:[%s2 + $0x2c] sm:$0xf] %v247
  %264 = vst [vmem:[%s2 + $0x30] sm:$0xf] %v248
  %265 = vst [vmem:[%s2 + $0x34] sm:$0xf] %v249
  %266 = vst [vmem:[%s2 + $0x38] sm:$0xf] %v250
  %267 = vst [vmem:[%s2 + $0x3c] sm:$0xf] %v251
  // Predicated region
  $region10: #{_lambda_.9} parent=0 // pred_check
    _
  $region11: #{_lambda_.9} parent=0 // pred_check_branch
    %269 = sbr.rel (0) target = $region13
  $region12: #{_lambda_.9} parent=0 // pred_region
    _
  $region13: #{_lambda_.9} parent=0 // pred_fallthru
    _
  // Predicated region
  $region14: #{_lambda_.9} parent=0 // pred_check
    _
  $region15: #{_lambda_.9} parent=0 // pred_check_branch
    %271 = sbr.rel (0) target = $region17
  $region16: #{_lambda_.9} parent=0 // pred_region
    _
  $region17: #{_lambda_.9} parent=0 // pred_fallthru
    _

// kernel: _lambda_.10
$region0: #{_lambda_.10}
  #allocation0 [shape = 'u32[]', space=smem, size = 0x4, offset = 0x4, fixed_abs, tag = 'smem constant byte address 0x4 - core index']
  #allocation1 [shape = 'u32[72,128]{1,0:T(1,128)}', space=vmem, size = 0x9000, scoped, tag = 'internal scratch']
  %s0 = inlined_call_operand.vmem [shape: bf16[1,32,128], index: 0, kind: input, shape index: {}]
  %s1 = inlined_call_operand.vmem [shape: bf16[1,128,128], index: 1, kind: input, shape index: {}]
  %s2 = inlined_call_operand.vmem [shape: bf16[1,32,128], index: 2, kind: output, shape index: {0}]
  %s3 = inlined_call_operand.vmem [shape: f32[1,1,2,128], index: 3, kind: output, shape index: {1}]
  %4 = xla_tuple %s2, %s3
  %s5 = sld [smem:[#allocation0]]
  $region26: #{_lambda_.10} parent=0
    _
  %s7 = ssub.s32 1, %s5
  %s8 = scalar_select 0, %s7, %s5
  // Predicated region
  $region2: #{_lambda_.10} parent=0 // pred_check
    _
  $region3: #{_lambda_.10} parent=0 // pred_check_branch
    %10 = sbr.rel (0) target = $region5
  $region4: #{_lambda_.10} parent=0 // pred_region
    _
  $region5: #{_lambda_.10} parent=0 // pred_fallthru
    _
  // Predicated region
  $region6: #{_lambda_.10} parent=0 // pred_check
    _
  $region7: #{_lambda_.10} parent=0 // pred_check_branch
    %12 = sbr.rel (0) target = $region9
  $region8: #{_lambda_.10} parent=0 // pred_region
    _
  $region9: #{_lambda_.10} parent=0 // pred_fallthru
    _
  %v13 = vld [vmem:[%s0] sm:$0xf]
  %v14 = vld [vmem:[%s0 + $0x4] sm:$0xf]
  %v15 = vld [vmem:[%s0 + $0x8] sm:$0xf]
  %v16 = vld [vmem:[%s0 + $0xc] sm:$0xf]
  %v17 = vld [vmem:[%s1] sm:$0xf]
  %v18 = vld [vmem:[%s1 + $0x4] sm:$0xf]
  %v19 = vld [vmem:[%s1 + $0x8] sm:$0xf]
  %v20 = vld [vmem:[%s1 + $0xc] sm:$0xf]
  %v21 = vld [vmem:[%s1 + $0x10] sm:$0xf]
  %v22 = vld [vmem:[%s1 + $0x14] sm:$0xf]
  %v23 = vld [vmem:[%s1 + $0x18] sm:$0xf]
  %v24 = vld [vmem:[%s1 + $0x1c] sm:$0xf]
  %v25 = vld [vmem:[%s1 + $0x20] sm:$0xf]
  %v26 = vld [vmem:[%s1 + $0x24] sm:$0xf]
  %v27 = vld [vmem:[%s1 + $0x28] sm:$0xf]
  %v28 = vld [vmem:[%s1 + $0x2c] sm:$0xf]
  %v29 = vld [vmem:[%s1 + $0x30] sm:$0xf]
  %v30 = vld [vmem:[%s1 + $0x34] sm:$0xf]
  %v31 = vld [vmem:[%s1 + $0x38] sm:$0xf]
  %v32 = vld [vmem:[%s1 + $0x3c] sm:$0xf]
  %v37 = vunpack.c.l.b16 %v13
  %v38 = vunpack.c.l.b16 %v14
  %v39 = vunpack.c.l.b16 %v15
  %v40 = vunpack.c.l.b16 %v16
  %v41 = vpack.c.b16 %v38, %v37
  %v42 = vpack.c.b16 %v40, %v39
  %v61 = vunpack.c.l.b16 %v17
  %v62 = vunpack.c.l.b16 %v18
  %v63 = vunpack.c.l.b16 %v19
  %v64 = vunpack.c.l.b16 %v20
  %v65 = vunpack.c.l.b16 %v21
  %v66 = vunpack.c.l.b16 %v22
  %v67 = vunpack.c.l.b16 %v23
  %v68 = vunpack.c.l.b16 %v24
  %v69 = vunpack.c.l.b16 %v25
  %v70 = vunpack.c.l.b16 %v26
  %v71 = vunpack.c.l.b16 %v27
  %v72 = vunpack.c.l.b16 %v28
  %v73 = vunpack.c.l.b16 %v29
  %v74 = vunpack.c.l.b16 %v30
  %v75 = vunpack.c.l.b16 %v31
  %v76 = vunpack.c.l.b16 %v32
  %v77 = vpack.c.b16 %v62, %v61
  %v78 = vpack.c.b16 %v64, %v63
  %v79 = vpack.c.b16 %v66, %v65
  %v80 = vpack.c.b16 %v68, %v67
  %v81 = vpack.c.b16 %v70, %v69
  %v82 = vpack.c.b16 %v72, %v71
  %v83 = vpack.c.b16 %v74, %v73
  %v84 = vpack.c.b16 %v76, %v75
  %93 = vmatpush.bf16.msra.mxu0 %v84
  %94 = vmatpush.bf16.msra.mxu0 %v83
  %95 = vmatpush.bf16.msra.mxu0 %v82
  %96 = vmatpush.bf16.msra.mxu0 %v81
  %97 = vmatpush.bf16.msra.mxu0 %v80
  %98 = vmatpush.bf16.msra.mxu0 %v79
  %99 = vmatpush.bf16.msra.mxu0 %v78
  %100 = vmatpush.bf16.msra.mxu0 %v77
  %101 = vmatmul.bf16.gmra.mxu0 %v41
  %v102 = vpop.f32.mrf.mxu0
  %v103 = vadd.f32 0.0, %v102
  %v104 = vpop.f32.mrf.mxu0
  %v105 = vadd.f32 0.0, %v104
  %106 = vmatmul.bf16.gmra.mxu0 %v42
  %v107 = vpop.f32.mrf.mxu0
  %v108 = vadd.f32 0.0, %v107
  %v109 = vpop.f32.mrf.mxu0
  %v110 = vadd.f32 0.0, %v109
  %111 = vdwg.mxu0
  %v112 = vpack.c.bf16 %v103, %v103
  %v113 = vpack.c.bf16 %v105, %v105
  %v114 = vpack.c.bf16 %v108, %v108
  %v115 = vpack.c.bf16 %v110, %v110
  %116 = vst [vmem:[%s2] sm:$0xf] %v112
  %117 = vst [vmem:[%s2 + $0x4] sm:$0xf] %v113
  %118 = vst [vmem:[%s2 + $0x8] sm:$0xf] %v114
  %119 = vst [vmem:[%s2 + $0xc] sm:$0xf] %v115
  %v120 = vadd.f32 %v103, %v105
  %v121 = vadd.f32 %v120, %v108
  %v122 = vadd.f32 %v121, %v110
  %v123 = vrot.slane %v122, 4
  %v124 = vadd.f32 %v122, %v123
  %v125 = vrot.slane %v124, 2
  %v126 = vadd.f32 %v124, %v125
  %v127 = vrot.slane %v126, 1
  %v128 = vadd.f32 %v126, %v127
  %129 = vst [vmem:[%s3] sm:$0x1] %v128
  %v130 = vmul.f32 %v103, %v103
  %v131 = vmul.f32 %v105, %v105
  %v132 = vmul.f32 %v108, %v108
  %v133 = vmul.f32 %v110, %v110
  %v134 = vadd.f32 %v130, %v131
  %v135 = vadd.f32 %v134, %v132
  %v136 = vadd.f32 %v135, %v133
  %v137 = vrot.slane %v136, 4
  %v138 = vadd.f32 %v136, %v137
  %v139 = vrot.slane %v138, 2
  %v140 = vadd.f32 %v138, %v139
  %v141 = vrot.slane %v140, 1
  %v142 = vadd.f32 %v140, %v141
  %143 = vst [vmem:[%s3 + $0x1] sm:$0x1] %v142
  // Predicated region
  $region10: #{_lambda_.10} parent=0 // pred_check
    _
  $region11: #{_lambda_.10} parent=0 // pred_check_branch
    %145 = sbr.rel (0) target = $region13
  $region12: #{_lambda_.10} parent=0 // pred_region
    _
  $region13: #{_lambda_.10} parent=0 // pred_fallthru
    _
  // Predicated region
  $region14: #{_lambda_.10} parent=0 // pred_check
    _
  $region15: #{_lambda_.10} parent=0 // pred_check_branch
    %147 = sbr.rel (0) target = $region17
  $region16: #{_lambda_.10} parent=0 // pred_region
    _
  $region17: #{_lambda_.10} parent=0 // pred_fallthru
    _
  // Predicated region
  $region18: #{_lambda_.10} parent=0 // pred_check
    _
  $region19: #{_lambda_.10} parent=0 // pred_check_branch
    %149 = sbr.rel (0) target = $region21
  $region20: #{_lambda_.10} parent=0 // pred_region
    _
  $region21: #{_lambda_.10} parent=0 // pred_fallthru
    _
  // Predicated region
  $region22: #{_lambda_.10} parent=0 // pred_check
    _
  $region23: #{_lambda_.10} parent=0 // pred_check_branch
    %151 = sbr.rel (0) target = $region25
  $region24: #{_lambda_.10} parent=0 // pred_region
    _
  $region25: #{_lambda_.10} parent=0 // pred_fallthru
    _

// kernel: _lambda_.11
$region0: #{_lambda_.11}
  #allocation0 [shape = 'u32[]', space=smem, size = 0x4, offset = 0x4, fixed_abs, tag = 'smem constant byte address 0x4 - core index']
  #allocation1 [shape = 'u32[72,128]{1,0:T(1,128)}', space=vmem, size = 0x9000, scoped, tag = 'internal scratch']
  %s0 = inlined_call_operand.vmem [shape: bf16[1,32,128], index: 0, kind: input, shape index: {}]
  %s1 = inlined_call_operand.vmem [shape: f32[1,128], index: 1, kind: input, shape index: {}]
  %s2 = inlined_call_operand.vmem [shape: f32[1,128], index: 2, kind: input, shape index: {}]
  %s3 = inlined_call_operand.vmem [shape: f32[1,128], index: 3, kind: input, shape index: {}]
  %s4 = inlined_call_operand.vmem [shape: f32[1,128], index: 4, kind: input, shape index: {}]
  %s5 = inlined_call_operand.vmem [shape: bf16[1,32,128], index: 5, kind: output, shape index: {}]
  %s6 = sld [smem:[#allocation0]]
  $region30: #{_lambda_.11} parent=0
    _
  %s8 = ssub.s32 1, %s6
  %s9 = scalar_select 0, %s8, %s6
  // Predicated region
  $region2: #{_lambda_.11} parent=0 // pred_check
    _
  $region3: #{_lambda_.11} parent=0 // pred_check_branch
    %11 = sbr.rel (0) target = $region5
  $region4: #{_lambda_.11} parent=0 // pred_region
    _
  $region5: #{_lambda_.11} parent=0 // pred_fallthru
    _
  // Predicated region
  $region6: #{_lambda_.11} parent=0 // pred_check
    _
  $region7: #{_lambda_.11} parent=0 // pred_check_branch
    %13 = sbr.rel (0) target = $region9
  $region8: #{_lambda_.11} parent=0 // pred_region
    _
  $region9: #{_lambda_.11} parent=0 // pred_fallthru
    _
  // Predicated region
  $region10: #{_lambda_.11} parent=0 // pred_check
    _
  $region11: #{_lambda_.11} parent=0 // pred_check_branch
    %15 = sbr.rel (0) target = $region13
  $region12: #{_lambda_.11} parent=0 // pred_region
    _
  $region13: #{_lambda_.11} parent=0 // pred_fallthru
    _
  // Predicated region
  $region14: #{_lambda_.11} parent=0 // pred_check
    _
  $region15: #{_lambda_.11} parent=0 // pred_check_branch
    %17 = sbr.rel (0) target = $region17
  $region16: #{_lambda_.11} parent=0 // pred_region
    _
  $region17: #{_lambda_.11} parent=0 // pred_fallthru
    _
  // Predicated region
  $region18: #{_lambda_.11} parent=0 // pred_check
    _
  $region19: #{_lambda_.11} parent=0 // pred_check_branch
    %19 = sbr.rel (0) target = $region21
  $region20: #{_lambda_.11} parent=0 // pred_region
    _
  $region21: #{_lambda_.11} parent=0 // pred_fallthru
    _
  %v20 = vld [vmem:[%s1] sm:$0x1]
  %v21 = vmul.f32 %v20, 0.03125
  %v22 = vld [vmem:[%s2] sm:$0x1]
  %v23 = vmul.f32 %v22, 0.03125
  %v24 = vmul.f32 %v21, %v21
  %v25 = vsub.f32 %v23, %v24
  %v26 = vmax.f32 %v25, 0.0
  %v27 = vld [vmem:[%s3] sm:$0x1]
  %v28 = vadd.f32 %v26, 1e-05
  %v29 = vrsqrt.pop %v28
  %v30 = vmul.f32 %v29, %v28
  %v31 = vmul.f32 %v30, %v29
  %v32 = vmul.f32 0.5, %v31
  %v33 = vsub.f32 1.5, %v32
  %v34 = vmul.f32 %v29, %v33
  %vm35 = vweird.f32 %v28
  %vm36 = vweird.f32 %v29
  %vm37 = vmor %vm35, %vm36
  %v38 = vsel %vm37, %v29, %v34
  %v39 = vmul.f32 %v27, %v38
  %v40 = vld [vmem:[%s4] sm:$0x1]
  %v41 = vmul.f32 %v21, %v39
  %v42 = vsub.f32 %v40, %v41
  %v43 = vld [vmem:[%s0] sm:$0xf]
  %v44 = vld [vmem:[%s0 + $0x4] sm:$0xf]
  %v45 = vld [vmem:[%s0 + $0x8] sm:$0xf]
  %v46 = vld [vmem:[%s0 + $0xc] sm:$0xf]
  %v47 = vunpack.c.l.bf16 %v43
  %v48 = vunpack.c.l.bf16 %v44
  %v49 = vunpack.c.l.bf16 %v45
  %v50 = vunpack.c.l.bf16 %v46
  %v52 = vperm.slane %v39, 0
  %v54 = vmul.f32 %v47, %v52
  %v55 = vmul.f32 %v48, %v52
  %v56 = vmul.f32 %v49, %v52
  %v57 = vmul.f32 %v50, %v52
  %v59 = vperm.slane %v42, 0
  %v61 = vadd.f32 %v54, %v59
  %v62 = vadd.f32 %v55, %v59
  %v63 = vadd.f32 %v56, %v59
  %v64 = vadd.f32 %v57, %v59
  %vm65 = vcmp.gt.f32.partialorder %v61, 0.0
  %vm66 = vcmp.gt.f32.partialorder %v62, 0.0
  %vm67 = vcmp.gt.f32.partialorder %v63, 0.0
  %vm68 = vcmp.gt.f32.partialorder %v64, 0.0
  %v69 = vmul.f32 %v61, 0.2
  %v70 = vmul.f32 %v62, 0.2
  %v71 = vmul.f32 %v63, 0.2
  %v72 = vmul.f32 %v64, 0.2
  %v73 = vsel %vm65, %v61, %v69
  %v74 = vsel %vm66, %v62, %v70
  %v75 = vsel %vm67, %v63, %v71
  %v76 = vsel %vm68, %v64, %v72
  %v77 = vpack.c.bf16 %v73, %v73
  %v78 = vpack.c.bf16 %v74, %v74
  %v79 = vpack.c.bf16 %v75, %v75
  %v80 = vpack.c.bf16 %v76, %v76
  %81 = vst [vmem:[%s5] sm:$0xf] %v77
  %82 = vst [vmem:[%s5 + $0x4] sm:$0xf] %v78
  %83 = vst [vmem:[%s5 + $0x8] sm:$0xf] %v79
  %84 = vst [vmem:[%s5 + $0xc] sm:$0xf] %v80
  // Predicated region
  $region22: #{_lambda_.11} parent=0 // pred_check
    _
  $region23: #{_lambda_.11} parent=0 // pred_check_branch
    %86 = sbr.rel (0) target = $region25
  $region24: #{_lambda_.11} parent=0 // pred_region
    _
  $region25: #{_lambda_.11} parent=0 // pred_fallthru
    _
  // Predicated region
  $region26: #{_lambda_.11} parent=0 // pred_check
    _
  $region27: #{_lambda_.11} parent=0 // pred_check_branch
    %88 = sbr.rel (0) target = $region29
  $region28: #{_lambda_.11} parent=0 // pred_region
    _
  $region29: #{_lambda_.11} parent=0 // pred_fallthru
    _

// kernel: _lambda_.12
$region0: #{_lambda_.12}
  #allocation0 [shape = 'u32[]', space=smem, size = 0x4, offset = 0x4, fixed_abs, tag = 'smem constant byte address 0x4 - core index']
  #allocation1 [shape = 'u32[72,128]{1,0:T(1,128)}', space=vmem, size = 0x9000, scoped, tag = 'internal scratch']
  %s0 = inlined_call_operand.vmem [shape: bf16[1,2,128], index: 0, kind: input, shape index: {}]
  %s1 = inlined_call_operand.vmem [shape: bf16[1,128,128], index: 1, kind: input, shape index: {}]
  %s2 = inlined_call_operand.vmem [shape: bf16[1,2,128], index: 2, kind: output, shape index: {}]
  %s3 = sld [smem:[#allocation0]]
  $region18: #{_lambda_.12} parent=0
    _
  %s5 = ssub.s32 1, %s3
  %s6 = scalar_select 0, %s5, %s3
  // Predicated region
  $region2: #{_lambda_.12} parent=0 // pred_check
    _
  $region3: #{_lambda_.12} parent=0 // pred_check_branch
    %8 = sbr.rel (0) target = $region5
  $region4: #{_lambda_.12} parent=0 // pred_region
    _
  $region5: #{_lambda_.12} parent=0 // pred_fallthru
    _
  // Predicated region
  $region6: #{_lambda_.12} parent=0 // pred_check
    _
  $region7: #{_lambda_.12} parent=0 // pred_check_branch
    %10 = sbr.rel (0) target = $region9
  $region8: #{_lambda_.12} parent=0 // pred_region
    _
  $region9: #{_lambda_.12} parent=0 // pred_fallthru
    _
  %v11 = vld [vmem:[%s0] sm:$0x1]
  %v12 = vld [vmem:[%s1] sm:$0xf]
  %v13 = vld [vmem:[%s1 + $0x4] sm:$0xf]
  %v14 = vld [vmem:[%s1 + $0x8] sm:$0xf]
  %v15 = vld [vmem:[%s1 + $0xc] sm:$0xf]
  %v16 = vld [vmem:[%s1 + $0x10] sm:$0xf]
  %v17 = vld [vmem:[%s1 + $0x14] sm:$0xf]
  %v18 = vld [vmem:[%s1 + $0x18] sm:$0xf]
  %v19 = vld [vmem:[%s1 + $0x1c] sm:$0xf]
  %v20 = vld [vmem:[%s1 + $0x20] sm:$0xf]
  %v21 = vld [vmem:[%s1 + $0x24] sm:$0xf]
  %v22 = vld [vmem:[%s1 + $0x28] sm:$0xf]
  %v23 = vld [vmem:[%s1 + $0x2c] sm:$0xf]
  %v24 = vld [vmem:[%s1 + $0x30] sm:$0xf]
  %v25 = vld [vmem:[%s1 + $0x34] sm:$0xf]
  %v26 = vld [vmem:[%s1 + $0x38] sm:$0xf]
  %v27 = vld [vmem:[%s1 + $0x3c] sm:$0xf]
  %v44 = vunpack.c.l.b16 %v12
  %v45 = vunpack.c.l.b16 %v13
  %v46 = vunpack.c.l.b16 %v14
  %v47 = vunpack.c.l.b16 %v15
  %v48 = vunpack.c.l.b16 %v16
  %v49 = vunpack.c.l.b16 %v17
  %v50 = vunpack.c.l.b16 %v18
  %v51 = vunpack.c.l.b16 %v19
  %v52 = vunpack.c.l.b16 %v20
  %v53 = vunpack.c.l.b16 %v21
  %v54 = vunpack.c.l.b16 %v22
  %v55 = vunpack.c.l.b16 %v23
  %v56 = vunpack.c.l.b16 %v24
  %v57 = vunpack.c.l.b16 %v25
  %v58 = vunpack.c.l.b16 %v26
  %v59 = vunpack.c.l.b16 %v27
  %v60 = vpack.c.b16 %v45, %v44
  %v61 = vpack.c.b16 %v47, %v46
  %v62 = vpack.c.b16 %v49, %v48
  %v63 = vpack.c.b16 %v51, %v50
  %v64 = vpack.c.b16 %v53, %v52
  %v65 = vpack.c.b16 %v55, %v54
  %v66 = vpack.c.b16 %v57, %v56
  %v67 = vpack.c.b16 %v59, %v58
  %76 = vmatpush.bf16.msra.mxu0 %v67
  %77 = vmatpush.bf16.msra.mxu0 %v66
  %78 = vmatpush.bf16.msra.mxu0 %v65
  %79 = vmatpush.bf16.msra.mxu0 %v64
  %80 = vmatpush.bf16.msra.mxu0 %v63
  %81 = vmatpush.bf16.msra.mxu0 %v62
  %82 = vmatpush.bf16.msra.mxu0 %v61
  %83 = vmatpush.bf16.msra.mxu0 %v60
  %84 = vmatmul.bf16.gmra.mxu0 %v11
  %v85 = vpop.f32.mrf.mxu0
  %v86 = vadd.f32 0.0, %v85
  %v87 = vpop.f32.mrf.mxu0
  %88 = vdwg.mxu0
  %v89 = vpack.c.bf16 %v86, %v86
  %90 = vst [vmem:[%s2] sm:$0x1] %v89
  // Predicated region
  $region10: #{_lambda_.12} parent=0 // pred_check
    _
  $region11: #{_lambda_.12} parent=0 // pred_check_branch
    %92 = sbr.rel (0) target = $region13
  $region12: #{_lambda_.12} parent=0 // pred_region
    _
  $region13: #{_lambda_.12} parent=0 // pred_fallthru
    _
  // Predicated region
  $region14: #{_lambda_.12} parent=0 // pred_check
    _
  $region15: #{_lambda_.12} parent=0 // pred_check_branch
    %94 = sbr.rel (0) target = $region17
  $region16: #{_lambda_.12} parent=0 // pred_region
    _
  $region17: #{_lambda_.12} parent=0 // pred_fallthru
    _

// kernel: _lambda_.13
$region0: #{_lambda_.13}
  #allocation0 [shape = 'u32[]', space=smem, size = 0x4, offset = 0x4, fixed_abs, tag = 'smem constant byte address 0x4 - core index']
  #allocation1 [shape = 'u32[72,128]{1,0:T(1,128)}', space=vmem, size = 0x9000, scoped, tag = 'internal scratch']
  %s0 = inlined_call_operand.vmem [shape: bf16[2,128], index: 0, kind: input, shape index: {}]
  %s1 = inlined_call_operand.vmem [shape: bf16[128,256], index: 1, kind: input, shape index: {}]
  %s2 = inlined_call_operand.vmem [shape: f32[1,256], index: 2, kind: input, shape index: {}]
  %s3 = inlined_call_operand.vmem [shape: f32[2,128], index: 3, kind: input, shape index: {}]
  %s4 = inlined_call_operand.hbm [shape: f32[2,128], index: 4, kind: output, shape index: {0}]
  %s5 = inlined_call_operand.hbm [shape: f32[2,128], index: 5, kind: output, shape index: {1}]
  %s6 = inlined_call_operand.vmem [shape: f32[2,128], index: 6, kind: output, shape index: {2}]
  %7 = xla_tuple %s4, %s5, %s6
  %s8 = sld [smem:[#allocation0]]
  $region42: #{_lambda_.13} parent=0
    _
  %s10 = ssub.s32 1, %s8
  %s11 = scalar_select 0, %s10, %s8
  $region1: #{_lambda_.13} parent=0
    #allocation2 [shape = 'u8[1024]{0}', space=vmem, size = 0x400, scoped, tag = 'output window, operand 0, single buffered']
    #allocation3 [shape = 's32[1]{0}', space=sflag, size = 0x4, scoped, tag = 'scoped memory for _lambda_.13']
    #allocation4 [shape = 'u8[1024]{0}', space=vmem, size = 0x400, scoped, tag = 'output window, operand 1, single buffered']
    #allocation5 [shape = 's32[1]{0}', space=sflag, size = 0x4, scoped, tag = 'scoped memory for _lambda_.13']
    %12 = vsyncpa [#allocation3], 0
    %13 = vsyncpa [#allocation5], 0
    // Predicated region
    $region2: #{_lambda_.13} parent=1 // pred_check
      _
    $region3: #{_lambda_.13} parent=1 // pred_check_branch
      %15 = sbr.rel (0) target = $region5
    $region4: #{_lambda_.13} parent=1 // pred_region
      _
    $region5: #{_lambda_.13} parent=1 // pred_fallthru
      _
    // Predicated region
    $region6: #{_lambda_.13} parent=1 // pred_check
      _
    $region7: #{_lambda_.13} parent=1 // pred_check_branch
      %17 = sbr.rel (0) target = $region9
    $region8: #{_lambda_.13} parent=1 // pred_region
      _
    $region9: #{_lambda_.13} parent=1 // pred_fallthru
      _
    // Predicated region
    $region10: #{_lambda_.13} parent=1 // pred_check
      _
    $region11: #{_lambda_.13} parent=1 // pred_check_branch
      %19 = sbr.rel (0) target = $region13
    $region12: #{_lambda_.13} parent=1 // pred_region
      _
    $region13: #{_lambda_.13} parent=1 // pred_fallthru
      _
    // Predicated region
    $region14: #{_lambda_.13} parent=1 // pred_check
      _
    $region15: #{_lambda_.13} parent=1 // pred_check_branch
      %21 = sbr.rel (0) target = $region17
    $region16: #{_lambda_.13} parent=1 // pred_region
      _
    $region17: #{_lambda_.13} parent=1 // pred_fallthru
      _
    %v22 = vld [vmem:[%s0] sm:$0x1]
    %v23 = vld [vmem:[%s1] sm:$0xff]
    %v24 = vld [vmem:[%s1 + $0x8] sm:$0xff]
    %v25 = vld [vmem:[%s1 + $0x10] sm:$0xff]
    %v26 = vld [vmem:[%s1 + $0x18] sm:$0xff]
    %v27 = vld [vmem:[%s1 + $0x20] sm:$0xff]
    %v28 = vld [vmem:[%s1 + $0x28] sm:$0xff]
    %v29 = vld [vmem:[%s1 + $0x30] sm:$0xff]
    %v30 = vld [vmem:[%s1 + $0x38] sm:$0xff]
    %v31 = vld [vmem:[%s1 + $0x40] sm:$0xff]
    %v32 = vld [vmem:[%s1 + $0x48] sm:$0xff]
    %v33 = vld [vmem:[%s1 + $0x50] sm:$0xff]
    %v34 = vld [vmem:[%s1 + $0x58] sm:$0xff]
    %v35 = vld [vmem:[%s1 + $0x60] sm:$0xff]
    %v36 = vld [vmem:[%s1 + $0x68] sm:$0xff]
    %v37 = vld [vmem:[%s1 + $0x70] sm:$0xff]
    %v38 = vld [vmem:[%s1 + $0x78] sm:$0xff]
    %v39 = vld [vmem:[%s2] sm:$0x3]
    %v41 = vperm.slane %v39, 0
    %v42 = vperm.slane %v39, 1
    %v61 = vunpack.c.l.b16 %v23
    %v62 = vunpack.c.h.b16 %v23
    %v63 = vunpack.c.l.b16 %v24
    %v64 = vunpack.c.h.b16 %v24
    %v65 = vunpack.c.l.b16 %v25
    %v66 = vunpack.c.h.b16 %v25
    %v67 = vunpack.c.l.b16 %v26
    %v68 = vunpack.c.h.b16 %v26
    %v69 = vunpack.c.l.b16 %v27
    %v70 = vunpack.c.h.b16 %v27
    %v71 = vunpack.c.l.b16 %v28
    %v72 = vunpack.c.h.b16 %v28
    %v73 = vunpack.c.l.b16 %v29
    %v74 = vunpack.c.h.b16 %v29
    %v75 = vunpack.c.l.b16 %v30
    %v76 = vunpack.c.h.b16 %v30
    %v77 = vunpack.c.l.b16 %v31
    %v78 = vunpack.c.h.b16 %v31
    %v79 = vunpack.c.l.b16 %v32
    %v80 = vunpack.c.h.b16 %v32
    %v81 = vunpack.c.l.b16 %v33
    %v82 = vunpack.c.h.b16 %v33
    %v83 = vunpack.c.l.b16 %v34
    %v84 = vunpack.c.h.b16 %v34
    %v85 = vunpack.c.l.b16 %v35
    %v86 = vunpack.c.h.b16 %v35
    %v87 = vunpack.c.l.b16 %v36
    %v88 = vunpack.c.h.b16 %v36
    %v89 = vunpack.c.l.b16 %v37
    %v90 = vunpack.c.h.b16 %v37
    %v91 = vunpack.c.l.b16 %v38
    %v92 = vunpack.c.h.b16 %v38
    %v93 = vpack.c.b16 %v63, %v61
    %v94 = vpack.c.b16 %v64, %v62
    %v95 = vpack.c.b16 %v67, %v65
    %v96 = vpack.c.b16 %v68, %v66
    %v97 = vpack.c.b16 %v71, %v69
    %v98 = vpack.c.b16 %v72, %v70
    %v99 = vpack.c.b16 %v75, %v73
    %v100 = vpack.c.b16 %v76, %v74
    %v101 = vpack.c.b16 %v79, %v77
    %v102 = vpack.c.b16 %v80, %v78
    %v103 = vpack.c.b16 %v83, %v81
    %v104 = vpack.c.b16 %v84, %v82
    %v105 = vpack.c.b16 %v87, %v85
    %v106 = vpack.c.b16 %v88, %v86
    %v107 = vpack.c.b16 %v91, %v89
    %v108 = vpack.c.b16 %v92, %v90
    %125 = vmatpush.bf16.msra.mxu0 %v107
    %126 = vmatpush.bf16.msra.mxu0 %v105
    %127 = vmatpush.bf16.msra.mxu0 %v103
    %128 = vmatpush.bf16.msra.mxu0 %v101
    %129 = vmatpush.bf16.msra.mxu0 %v99
    %130 = vmatpush.bf16.msra.mxu0 %v97
    %131 = vmatpush.bf16.msra.mxu0 %v95
    %132 = vmatpush.bf16.msra.mxu0 %v93
    %133 = vmatmul.bf16.gmra.mxu0 %v22
    %v134 = vpop.f32.mrf.mxu0
    %v135 = vadd.f32 %v41, %v134
    %v136 = vpop.f32.mrf.mxu0
    %137 = vdwg.mxu0
    %138 = vmatpush.bf16.msra.mxu0 %v108
    %139 = vmatpush.bf16.msra.mxu0 %v106
    %140 = vmatpush.bf16.msra.mxu0 %v104
    %141 = vmatpush.bf16.msra.mxu0 %v102
    %142 = vmatpush.bf16.msra.mxu0 %v100
    %143 = vmatpush.bf16.msra.mxu0 %v98
    %144 = vmatpush.bf16.msra.mxu0 %v96
    %145 = vmatpush.bf16.msra.mxu0 %v94
    %146 = vmatmul.bf16.gmra.mxu0 %v22
    %v147 = vpop.f32.mrf.mxu0
    %v148 = vadd.f32 %v42, %v147
    %v149 = vpop.f32.mrf.mxu0
    %150 = vdwg.mxu0
    %151 = vst [vmem:[#allocation2] sm:$0x3] %v135
    %152 = vst [vmem:[#allocation4] sm:$0x3] %v148
    %v153 = vld [vmem:[%s3] sm:$0x3]
    %v154 = vmul.f32 %v148, 0.5
    %v155 = vmul.f32 %v154, 1.442695
    %v156 = vpow.pop %v155
    %v157 = vmul.f32 %v153, %v156
    %v158 = vadd.f32 %v135, %v157
    %159 = vst [vmem:[%s6] sm:$0x3] %v158
    // Predicated region
    $region18: #{_lambda_.13} parent=1 // pred_check
      _
    $region19: #{_lambda_.13} parent=1 // pred_check_branch
      %161 = sbr.rel (0) target = $region21
    $region20: #{_lambda_.13} parent=1 // pred_region
      %163 = vsyncadd [#allocation3], 0
      %s165 = sshll.u32 [#allocation2], 4
      %s166 = int_to_ptr.vmem [resolvable:$true] %s165
      %s167 = sshll.u32 %s4, 4
      %s168 = int_to_ptr.hbm [resolvable:$true] %s167
      %170 = dma.vmem_to_hbm [thread:$0]  %s166, 32, %s168, [#allocation3]
    $region21: #{_lambda_.13} parent=1 // pred_fallthru
      _
    // Predicated region
    $region22: #{_lambda_.13} parent=1 // pred_check
      _
    $region23: #{_lambda_.13} parent=1 // pred_check_branch
      %172 = sbr.rel (0) target = $region25
    $region24: #{_lambda_.13} parent=1 // pred_region
      %174 = vsyncadd [#allocation5], 0
      %s176 = sshll.u32 [#allocation4], 4
      %s177 = int_to_ptr.vmem [resolvable:$true] %s176
      %s178 = sshll.u32 %s5, 4
      %s179 = int_to_ptr.hbm [resolvable:$true] %s178
      %181 = dma.vmem_to_hbm [thread:$0]  %s177, 32, %s179, [#allocation5]
    $region25: #{_lambda_.13} parent=1 // pred_fallthru
      _
    // Predicated region
    $region26: #{_lambda_.13} parent=1 // pred_check
      _
    $region27: #{_lambda_.13} parent=1 // pred_check_branch
      %183 = sbr.rel (0) target = $region29
    $region28: #{_lambda_.13} parent=1 // pred_region
      _
    $region29: #{_lambda_.13} parent=1 // pred_fallthru
      _
    // Predicated region
    $region30: #{_lambda_.13} parent=1 // pred_check
      _
    $region31: #{_lambda_.13} parent=1 // pred_check_branch
      %185 = sbr.rel (0) target = $region33
    $region32: #{_lambda_.13} parent=1 // pred_region
      %187 = dma.done [#allocation3], 32
    $region33: #{_lambda_.13} parent=1 // pred_fallthru
      _
    // Predicated region
    $region34: #{_lambda_.13} parent=1 // pred_check
      _
    $region35: #{_lambda_.13} parent=1 // pred_check_branch
      %189 = sbr.rel (0) target = $region37
    $region36: #{_lambda_.13} parent=1 // pred_region
      %191 = dma.done [#allocation5], 32
    $region37: #{_lambda_.13} parent=1 // pred_fallthru
      _
    // Predicated region
    $region38: #{_lambda_.13} parent=1 // pred_check
      _
    $region39: #{_lambda_.13} parent=1 // pred_check_branch
      %193 = sbr.rel (0) target = $region41
    $region40: #{_lambda_.13} parent=1 // pred_region
      _
    $region41: #{_lambda_.13} parent=1 // pred_fallthru
      _
    %194 = vsyncpa [#allocation3], 1
    %195 = vsyncpa [#allocation5], 1

// kernel: _lambda_.16
$region0: #{_lambda_.16}
  #allocation0 [shape = 'u32[]', space=smem, size = 0x4, offset = 0x4, fixed_abs, tag = 'smem constant byte address 0x4 - core index']
  #allocation1 [shape = 'u32[72,128]{1,0:T(1,128)}', space=vmem, size = 0x9000, scoped, tag = 'internal scratch']
  %s0 = inlined_call_operand.vmem [shape: bf16[4,32,128], index: 0, kind: input, shape index: {}]
  %s1 = inlined_call_operand.vmem [shape: f32[1,128], index: 1, kind: input, shape index: {}]
  %s2 = inlined_call_operand.vmem [shape: f32[1,128], index: 2, kind: input, shape index: {}]
  %s3 = inlined_call_operand.vmem [shape: f32[1,128], index: 3, kind: input, shape index: {}]
  %s4 = inlined_call_operand.vmem [shape: f32[1,128], index: 4, kind: input, shape index: {}]
  %s5 = inlined_call_operand.vmem [shape: bf16[4,32,128], index: 5, kind: output, shape index: {}]
  %s6 = sld [smem:[#allocation0]]
  $region53: #{_lambda_.16} parent=0
    _
  %s8 = ssub.s32 1, %s6
  %s9 = scalar_select 0, %s8, %s6
  loop: start=0, step=1, limit=6
  $region2: #{_lambda_.16} parent=0 // loop_pre_header
    _
  $region3: #{_lambda_.16} parent=0 // loop_header
    %s11 = sphi 0, %s15
    %p12 = scmp.ge.s32.totalorder %s11, 6
    %s18 = sphi 0, %s30
    %s19 = sphi 0, %s26
    %s20 = sphi 0, %s18
    %s21 = sphi 0, %s19
    %s22 = sphi 0, %s20
    %s23 = sphi 0, %s21
    %s35 = sphi 0, %s37
    %s38 = sphi 0, %s35
    %s39 = sphi 0, %s38
    %s55 = sphi 0, %s39
    %s59 = sphi 0, %s59
    %s61 = sphi 0, %s59
    %s62 = sphi 0, %s61
    %s76 = sphi 0, %s62
    %s80 = sphi 0, %s80
    %s82 = sphi 0, %s80
    %s83 = sphi 0, %s82
    %s97 = sphi 0, %s83
    %s101 = sphi 0, %s101
    %s103 = sphi 0, %s101
    %s104 = sphi 0, %s103
    %s118 = sphi 0, %s104
    %s122 = sphi 0, %s122
    %s124 = sphi 0, %s122
    %s125 = sphi 0, %s124
    %s139 = sphi 0, %s125
    %s147 = sphi 0, %s149
    %s150 = sphi 0, %s147
    %s151 = sphi 0, %s150
    %s167 = sphi 0, %s151
  $region4: #{_lambda_.16} parent=0 // loop_header_branch
    %14 = sbr.rel (%p12) target = $region8
  $region5: #{_lambda_.16} parent=0 // loop_body
    %s16 = ssub.s32 %s11, 1
    %s17 = ssub.s32 %s11, 2
    %s24 = sadd.s32 1, %s19
    %p25 = scmp.ge.s32.totalorder %s24, 1
    %s26 = scalar_select %p25, 0, %s24
    %s27 = sadd.s32 1, %s18
    %s28 = scalar_select %p25, %s27, %s18
    %p29 = scmp.ge.s32.totalorder %s28, 4
    %s30 = scalar_select %p29, 0, %s28
    %s31 = ssub.s32 %s18, %s30
    %s32 = ssub.s32 %s19, %s26
    %s33 = sor.u32 %s31, %s32
    %p34 = scmp.eq.s32.totalorder %s33, 0
    %s36 = sadd.s32 %s35, 1
    %s37 = scalar_select %p34, %s35, %s36
    %p40 = pneg %p34
    %p41 = scmp.eq.s32.totalorder %s11, 3
    %p42 = por %p40, %p41
    %p43 = scmp.ne.s32.totalorder %s35, %s38
    %p44 = scmp.eq.s32.totalorder %s11, 0
    %p45 = por %p43, %p44
    %p46 = scmp.ne.s32.totalorder %s35, %s38
    %p47 = scmp.eq.s32.totalorder %s16, 3
    %p48 = por %p46, %p47
    %p49 = scmp.ne.s32.totalorder %s38, %s39
    %p50 = scmp.eq.s32.totalorder %s16, 0
    %p51 = por %p49, %p50
    %p52 = scmp.ne.s32.totalorder %s38, %s39
    %p53 = scmp.eq.s32.totalorder %s17, 3
    %p54 = por %p52, %p53
    %p56 = scmp.ne.s32.totalorder %s39, %s55
    %p57 = scmp.eq.s32.totalorder %s17, 0
    %p58 = por %p56, %p57
    %s60 = sadd.s32 %s59, 1
    %p63 = scmp.eq.s32.totalorder %s11, 3
    %p64 = scmp.ne.s32.totalorder %s59, %s61
    %p65 = scmp.eq.s32.totalorder %s11, 0
    %p66 = por %p64, %p65
    %p67 = scmp.ne.s32.totalorder %s59, %s61
    %p68 = scmp.eq.s32.totalorder %s16, 3
    %p69 = por %p67, %p68
    %p70 = scmp.ne.s32.totalorder %s61, %s62
    %p71 = scmp.eq.s32.totalorder %s16, 0
    %p72 = por %p70, %p71
    %p73 = scmp.ne.s32.totalorder %s61, %s62
    %p74 = scmp.eq.s32.totalorder %s17, 3
    %p75 = por %p73, %p74
    %p77 = scmp.ne.s32.totalorder %s62, %s76
    %p78 = scmp.eq.s32.totalorder %s17, 0
    %p79 = por %p77, %p78
    %s81 = sadd.s32 %s80, 1
    %p84 = scmp.eq.s32.totalorder %s11, 3
    %p85 = scmp.ne.s32.totalorder %s80, %s82
    %p86 = scmp.eq.s32.totalorder %s11, 0
    %p87 = por %p85, %p86
    %p88 = scmp.ne.s32.totalorder %s80, %s82
    %p89 = scmp.eq.s32.totalorder %s16, 3
    %p90 = por %p88, %p89
    %p91 = scmp.ne.s32.totalorder %s82, %s83
    %p92 = scmp.eq.s32.totalorder %s16, 0
    %p93 = por %p91, %p92
    %p94 = scmp.ne.s32.totalorder %s82, %s83
    %p95 = scmp.eq.s32.totalorder %s17, 3
    %p96 = por %p94, %p95
    %p98 = scmp.ne.s32.totalorder %s83, %s97
    %p99 = scmp.eq.s32.totalorder %s17, 0
    %p100 = por %p98, %p99
    %s102 = sadd.s32 %s101, 1
    %p105 = scmp.eq.s32.totalorder %s11, 3
    %p106 = scmp.ne.s32.totalorder %s101, %s103
    %p107 = scmp.eq.s32.totalorder %s11, 0
    %p108 = por %p106, %p107
    %p109 = scmp.ne.s32.totalorder %s101, %s103
    %p110 = scmp.eq.s32.totalorder %s16, 3
    %p111 = por %p109, %p110
    %p112 = scmp.ne.s32.totalorder %s103, %s104
    %p113 = scmp.eq.s32.totalorder %s16, 0
    %p114 = por %p112, %p113
    %p115 = scmp.ne.s32.totalorder %s103, %s104
    %p116 = scmp.eq.s32.totalorder %s17, 3
    %p117 = por %p115, %p116
    %p119 = scmp.ne.s32.totalorder %s104, %s118
    %p120 = scmp.eq.s32.totalorder %s17, 0
    %p121 = por %p119, %p120
    %s123 = sadd.s32 %s122, 1
    %p126 = scmp.eq.s32.totalorder %s11, 3
    %p127 = scmp.ne.s32.totalorder %s122, %s124
    %p128 = scmp.eq.s32.totalorder %s11, 0
    %p129 = por %p127, %p128
    %p130 = scmp.ne.s32.totalorder %s122, %s124
    %p131 = scmp.eq.s32.totalorder %s16, 3
    %p132 = por %p130, %p131
    %p133 = scmp.ne.s32.totalorder %s124, %s125
    %p134 = scmp.eq.s32.totalorder %s16, 0
    %p135 = por %p133, %p134
    %p136 = scmp.ne.s32.totalorder %s124, %s125
    %p137 = scmp.eq.s32.totalorder %s17, 3
    %p138 = por %p136, %p137
    %p140 = scmp.ne.s32.totalorder %s125, %s139
    %p141 = scmp.eq.s32.totalorder %s17, 0
    %p142 = por %p140, %p141
    %s143 = ssub.s32 %s18, %s30
    %s144 = ssub.s32 %s19, %s26
    %s145 = sor.u32 %s143, %s144
    %p146 = scmp.eq.s32.totalorder %s145, 0
    %s148 = sadd.s32 %s147, 1
    %s149 = scalar_select %p146, %s147, %s148
    %p152 = pneg %p146
    %p153 = scmp.eq.s32.totalorder %s11, 3
    %p154 = por %p152, %p153
    %p155 = scmp.ne.s32.totalorder %s147, %s150
    %p156 = scmp.eq.s32.totalorder %s11, 0
    %p157 = por %p155, %p156
    %p158 = scmp.ne.s32.totalorder %s147, %s150
    %p159 = scmp.eq.s32.totalorder %s16, 3
    %p160 = por %p158, %p159
    %p161 = scmp.ne.s32.totalorder %s150, %s151
    %p162 = scmp.eq.s32.totalorder %s16, 0
    %p163 = por %p161, %p162
    %p164 = scmp.ne.s32.totalorder %s150, %s151
    %p165 = scmp.eq.s32.totalorder %s17, 3
    %p166 = por %p164, %p165
    %p168 = scmp.ne.s32.totalorder %s151, %s167
    %p169 = scmp.eq.s32.totalorder %s17, 0
    %p170 = por %p168, %p169
    %p171 = scmp.le.s32.totalorder 1, %s11
    %p172 = scmp.lt.s32.totalorder %s11, 5
    %p173 = pnand %p171, %p172
    %p174 = pneg %p173
    // Predicated region
    $region9: #{_lambda_.16} parent=5 // pred_check
      _
    $region10: #{_lambda_.16} parent=5 // pred_check_branch
      %176 = sbr.rel (%p173) target = $region12
    $region11: #{_lambda_.16} parent=5 // pred_region
      %s177 = ssub.s32 %s11, 1
      // Predicated region
      $region13: #{_lambda_.16} parent=11 // pred_check
        %p178 = pneg %p72
      $region14: #{_lambda_.16} parent=11 // pred_check_branch
        %180 = sbr.rel (%p178) target = $region16
      $region15: #{_lambda_.16} parent=11 // pred_region
        _
      $region16: #{_lambda_.16} parent=11 // pred_fallthru
        _
      // Predicated region
      $region17: #{_lambda_.16} parent=11 // pred_check
        %p181 = pneg %p93
      $region18: #{_lambda_.16} parent=11 // pred_check_branch
        %183 = sbr.rel (%p181) target = $region20
      $region19: #{_lambda_.16} parent=11 // pred_region
        _
      $region20: #{_lambda_.16} parent=11 // pred_fallthru
        _
      // Predicated region
      $region21: #{_lambda_.16} parent=11 // pred_check
        %p184 = pneg %p114
      $region22: #{_lambda_.16} parent=11 // pred_check_branch
        %186 = sbr.rel (%p184) target = $region24
      $region23: #{_lambda_.16} parent=11 // pred_region
        _
      $region24: #{_lambda_.16} parent=11 // pred_fallthru
        _
      // Predicated region
      $region25: #{_lambda_.16} parent=11 // pred_check
        %p187 = pneg %p135
      $region26: #{_lambda_.16} parent=11 // pred_check_branch
        %189 = sbr.rel (%p187) target = $region28
      $region27: #{_lambda_.16} parent=11 // pred_region
        _
      $region28: #{_lambda_.16} parent=11 // pred_fallthru
        _
    $region12: #{_lambda_.16} parent=5 // pred_fallthru
      _
    %p190 = scmp.lt.s32.totalorder %s11, 4
    // Predicated region
    $region29: #{_lambda_.16} parent=5 // pred_check
      %p191 = pneg %p190
    $region30: #{_lambda_.16} parent=5 // pred_check_branch
      %193 = sbr.rel (%p191) target = $region32
    $region31: #{_lambda_.16} parent=5 // pred_region
      // Predicated region
      $region33: #{_lambda_.16} parent=31 // pred_check
        %p194 = pneg %p45
      $region34: #{_lambda_.16} parent=31 // pred_check_branch
        %196 = sbr.rel (%p194) target = $region36
      $region35: #{_lambda_.16} parent=31 // pred_region
        %s197 = smul.u32 4, %s19
        %p198 = scmp.lt.s32.totalorder %s18, 3
        %s199 = scalar_select %p198, %s18, 3
        %p200 = scmp.lt.s32.totalorder %s197, 3
        %s201 = scalar_select %p200, %s197, 3
        %s202 = smul.addr %s199, 4
        %s203 = sadd.s32 %s201, %s202
        %s204 = smul.addr %s203, 4
        %s205 = scalar_lea.vmem %s0, %s204
        %s206 = smul.u32 4, %s19
      $region36: #{_lambda_.16} parent=31 // pred_fallthru
        _
    $region32: #{_lambda_.16} parent=5 // pred_fallthru
      _
    %p207 = scmp.le.s32.totalorder 1, %s11
    %p208 = scmp.lt.s32.totalorder %s11, 5
    %p209 = pnand %p207, %p208
    %p210 = pneg %p209
    // Predicated region
    $region37: #{_lambda_.16} parent=5 // pred_check
      _
    $region38: #{_lambda_.16} parent=5 // pred_check_branch
      %212 = sbr.rel (%p209) target = $region40
    $region39: #{_lambda_.16} parent=5 // pred_region
      %s213 = ssub.s32 %s11, 1
      %s214 = smul.u32 4, %s21
      %p215 = scmp.lt.s32.totalorder %s20, 3
      %s216 = scalar_select %p215, %s20, 3
      %p217 = scmp.lt.s32.totalorder %s214, 3
      %s218 = scalar_select %p217, %s214, 3
      %s219 = smul.addr %s216, 4
      %s220 = sadd.s32 %s218, %s219
      %s221 = smul.addr %s220, 4
      %s222 = scalar_lea.vmem %s0, %s221
      %p223 = pneg %p51
      %p224 = pneg %p48
      %p225 = pneg %p72
      %p226 = pneg %p69
      %p227 = pneg %p93
      %p228 = pneg %p90
      %p229 = pneg %p114
      %p230 = pneg %p111
      %p231 = pneg %p135
      %p232 = pneg %p132
      %p233 = pneg %p163
      %p234 = pneg %p160
      %s235 = smul.u32 4, %s21
      %p236 = scmp.lt.s32.totalorder %s20, 3
      %s237 = scalar_select %p236, %s20, 3
      %p238 = scmp.lt.s32.totalorder %s235, 3
      %s239 = scalar_select %p238, %s235, 3
      %s240 = smul.addr %s237, 4
      %s241 = sadd.s32 %s239, %s240
      %s242 = smul.addr %s241, 4
      %s243 = scalar_lea.vmem %s5, %s242
      %s244 = smul.u32 4, %s21
      %p245 = scmp.lt.s32.totalorder %s20, 3
      %s246 = scalar_select %p245, %s20, 3
      %p247 = scmp.lt.s32.totalorder %s244, 3
      %s248 = scalar_select %p247, %s244, 3
      %s249 = smul.addr %s246, 4
      %s250 = sadd.s32 %s248, %s249
      %s251 = smul.addr %s250, 4
      %s252 = scalar_lea.vmem %s0, %s251
      %s253 = smul.u32 4, %s21
      %s254 = smul.u32 4, %s21
      %p255 = scmp.lt.s32.totalorder %s20, 3
      %s256 = scalar_select %p255, %s20, 3
      %p257 = scmp.lt.s32.totalorder %s254, 3
      %s258 = scalar_select %p257, %s254, 3
      %s259 = smul.addr %s256, 4
      %s260 = sadd.s32 %s258, %s259
      %s261 = smul.addr %s260, 4
      %s262 = scalar_lea.vmem %s5, %s261
      %s263 = smul.u32 4, %s21
      %v264 = vld [vmem:[%s1] sm:$0x1]
      %v265 = vmul.f32 %v264, 0.0078125
      %v266 = vld [vmem:[%s2] sm:$0x1]
      %v267 = vmul.f32 %v266, 0.0078125
      %v268 = vmul.f32 %v265, %v265
      %v269 = vsub.f32 %v267, %v268
      %v270 = vmax.f32 %v269, 0.0
      %v271 = vld [vmem:[%s3] sm:$0x1]
      %v272 = vadd.f32 %v270, 1e-05
      %v273 = vrsqrt.pop %v272
      %v274 = vmul.f32 %v273, %v272
      %v275 = vmul.f32 %v274, %v273
      %v276 = vmul.f32 0.5, %v275
      %v277 = vsub.f32 1.5, %v276
      %v278 = vmul.f32 %v273, %v277
      %vm279 = vweird.f32 %v272
      %vm280 = vweird.f32 %v273
      %vm281 = vmor %vm279, %vm280
      %v282 = vsel %vm281, %v273, %v278
      %v283 = vmul.f32 %v271, %v282
      %v284 = vld [vmem:[%s4] sm:$0x1]
      %v285 = vmul.f32 %v265, %v283
      %v286 = vsub.f32 %v284, %v285
      %v287 = vld [vmem:[%s252] sm:$0xf]
      %v288 = vld [vmem:[%s252 + $0x4] sm:$0xf]
      %v289 = vld [vmem:[%s252 + $0x8] sm:$0xf]
      %v290 = vld [vmem:[%s252 + $0xc] sm:$0xf]
      %v291 = vunpack.c.l.bf16 %v287
      %v292 = vunpack.c.l.bf16 %v288
      %v293 = vunpack.c.l.bf16 %v289
      %v294 = vunpack.c.l.bf16 %v290
      %v296 = vperm.slane %v283, 0
      %v298 = vmul.f32 %v291, %v296
      %v299 = vmul.f32 %v292, %v296
      %v300 = vmul.f32 %v293, %v296
      %v301 = vmul.f32 %v294, %v296
      %v303 = vperm.slane %v286, 0
      %v305 = vadd.f32 %v298, %v303
      %v306 = vadd.f32 %v299, %v303
      %v307 = vadd.f32 %v300, %v303
      %v308 = vadd.f32 %v301, %v303
      %v309 = vmax.f32 %v305, 0.0
      %v310 = vmax.f32 %v306, 0.0
      %v311 = vmax.f32 %v307, 0.0
      %v312 = vmax.f32 %v308, 0.0
      %v313 = vpack.c.bf16 %v309, %v309
      %v314 = vpack.c.bf16 %v310, %v310
      %v315 = vpack.c.bf16 %v311, %v311
      %v316 = vpack.c.bf16 %v312, %v312
      %317 = vst [vmem:[%s262] sm:$0xf] %v313
      %318 = vst [vmem:[%s262 + $0x4] sm:$0xf] %v314
      %319 = vst [vmem:[%s262 + $0x8] sm:$0xf] %v315
      %320 = vst [vmem:[%s262 + $0xc] sm:$0xf] %v316
      %s321 = smul.u32 4, %s21
      %p322 = scmp.lt.s32.totalorder %s20, 3
      %s323 = scalar_select %p322, %s20, 3
      %p324 = scmp.lt.s32.totalorder %s321, 3
      %s325 = scalar_select %p324, %s321, 3
      %s326 = smul.addr %s323, 4
      %s327 = sadd.s32 %s325, %s326
      %s328 = smul.addr %s327, 4
      %s329 = scalar_lea.vmem %s5, %s328
      // Predicated region
      $region41: #{_lambda_.16} parent=39 // pred_check
        %p330 = pneg %p160
      $region42: #{_lambda_.16} parent=39 // pred_check_branch
        %332 = sbr.rel (%p330) target = $region44
      $region43: #{_lambda_.16} parent=39 // pred_region
        %s333 = smul.u32 4, %s21
      $region44: #{_lambda_.16} parent=39 // pred_fallthru
        _
    $region40: #{_lambda_.16} parent=5 // pred_fallthru
      _
    %p334 = scmp.le.s32.totalorder 2, %s11
    // Predicated region
    $region45: #{_lambda_.16} parent=5 // pred_check
      %p335 = pneg %p334
    $region46: #{_lambda_.16} parent=5 // pred_check_branch
      %337 = sbr.rel (%p335) target = $region48
    $region47: #{_lambda_.16} parent=5 // pred_region
      %s338 = ssub.s32 %s11, 2
      // Predicated region
      $region49: #{_lambda_.16} parent=47 // pred_check
        %p339 = pneg %p166
      $region50: #{_lambda_.16} parent=47 // pred_check_branch
        %341 = sbr.rel (%p339) target = $region52
      $region51: #{_lambda_.16} parent=47 // pred_region
        %s342 = smul.u32 4, %s23
        %p343 = scmp.lt.s32.totalorder %s22, 3
        %s344 = scalar_select %p343, %s22, 3
        %p345 = scmp.lt.s32.totalorder %s342, 3
        %s346 = scalar_select %p345, %s342, 3
        %s347 = smul.addr %s344, 4
        %s348 = sadd.s32 %s346, %s347
        %s349 = smul.addr %s348, 4
        %s350 = scalar_lea.vmem %s5, %s349
      $region52: #{_lambda_.16} parent=47 // pred_fallthru
        _
    $region48: #{_lambda_.16} parent=5 // pred_fallthru
      _
  $region6: #{_lambda_.16} parent=0 // loop_footer
    %s15 = sadd.s32 1, %s11
  $region7: #{_lambda_.16} parent=0 // loop_footer_branch
    %10 = sbr.rel target = $region3
  $region8: #{_lambda_.16} parent=0 // loop_exit
    _

// kernel: _lambda_.15
$region0: #{_lambda_.15}
  #allocation0 [shape = 'u32[]', space=smem, size = 0x4, offset = 0x4, fixed_abs, tag = 'smem constant byte address 0x4 - core index']
  #allocation1 [shape = 'u32[72,128]{1,0:T(1,128)}', space=vmem, size = 0x9000, scoped, tag = 'internal scratch']
  %s0 = inlined_call_operand.vmem [shape: bf16[4,32,128], index: 0, kind: input, shape index: {}]
  %s1 = inlined_call_operand.vmem [shape: bf16[4,128,128], index: 1, kind: input, shape index: {}]
  %s2 = inlined_call_operand.vmem [shape: bf16[4,32,128], index: 2, kind: output, shape index: {0}]
  %s3 = inlined_call_operand.vmem [shape: f32[4,1,2,128], index: 3, kind: output, shape index: {1}]
  %4 = xla_tuple %s2, %s3
  %s5 = sld [smem:[#allocation0]]
  $region49: #{_lambda_.15} parent=0
    _
  %s7 = ssub.s32 1, %s5
  %s8 = scalar_select 0, %s7, %s5
  loop: start=0, step=1, limit=6
  $region2: #{_lambda_.15} parent=0 // loop_pre_header
    _
  $region3: #{_lambda_.15} parent=0 // loop_header
    %s10 = sphi 0, %s14
    %p11 = scmp.ge.s32.totalorder %s10, 6
    %s17 = sphi 0, %s29
    %s18 = sphi 0, %s25
    %s19 = sphi 0, %s17
    %s20 = sphi 0, %s18
    %s21 = sphi 0, %s19
    %s22 = sphi 0, %s20
    %s34 = sphi 0, %s36
    %s37 = sphi 0, %s34
    %s38 = sphi 0, %s37
    %s54 = sphi 0, %s38
    %s60 = sphi 0, %s62
    %s63 = sphi 0, %s60
    %s64 = sphi 0, %s63
    %s80 = sphi 0, %s64
    %s88 = sphi 0, %s90
    %s91 = sphi 0, %s88
    %s92 = sphi 0, %s91
    %s108 = sphi 0, %s92
    %s116 = sphi 0, %s118
    %s119 = sphi 0, %s116
    %s120 = sphi 0, %s119
    %s136 = sphi 0, %s120
  $region4: #{_lambda_.15} parent=0 // loop_header_branch
    %13 = sbr.rel (%p11) target = $region8
  $region5: #{_lambda_.15} parent=0 // loop_body
    %s15 = ssub.s32 %s10, 1
    %s16 = ssub.s32 %s10, 2
    %s23 = sadd.s32 1, %s18
    %p24 = scmp.ge.s32.totalorder %s23, 1
    %s25 = scalar_select %p24, 0, %s23
    %s26 = sadd.s32 1, %s17
    %s27 = scalar_select %p24, %s26, %s17
    %p28 = scmp.ge.s32.totalorder %s27, 4
    %s29 = scalar_select %p28, 0, %s27
    %s30 = ssub.s32 %s17, %s29
    %s31 = ssub.s32 %s18, %s25
    %s32 = sor.u32 %s30, %s31
    %p33 = scmp.eq.s32.totalorder %s32, 0
    %s35 = sadd.s32 %s34, 1
    %s36 = scalar_select %p33, %s34, %s35
    %p39 = pneg %p33
    %p40 = scmp.eq.s32.totalorder %s10, 3
    %p41 = por %p39, %p40
    %p42 = scmp.ne.s32.totalorder %s34, %s37
    %p43 = scmp.eq.s32.totalorder %s10, 0
    %p44 = por %p42, %p43
    %p45 = scmp.ne.s32.totalorder %s34, %s37
    %p46 = scmp.eq.s32.totalorder %s15, 3
    %p47 = por %p45, %p46
    %p48 = scmp.ne.s32.totalorder %s37, %s38
    %p49 = scmp.eq.s32.totalorder %s15, 0
    %p50 = por %p48, %p49
    %p51 = scmp.ne.s32.totalorder %s37, %s38
    %p52 = scmp.eq.s32.totalorder %s16, 3
    %p53 = por %p51, %p52
    %p55 = scmp.ne.s32.totalorder %s38, %s54
    %p56 = scmp.eq.s32.totalorder %s16, 0
    %p57 = por %p55, %p56
    %s58 = ssub.s32 %s17, %s29
    %p59 = scmp.eq.s32.totalorder %s58, 0
    %s61 = sadd.s32 %s60, 1
    %s62 = scalar_select %p59, %s60, %s61
    %p65 = pneg %p59
    %p66 = scmp.eq.s32.totalorder %s10, 3
    %p67 = por %p65, %p66
    %p68 = scmp.ne.s32.totalorder %s60, %s63
    %p69 = scmp.eq.s32.totalorder %s10, 0
    %p70 = por %p68, %p69
    %p71 = scmp.ne.s32.totalorder %s60, %s63
    %p72 = scmp.eq.s32.totalorder %s15, 3
    %p73 = por %p71, %p72
    %p74 = scmp.ne.s32.totalorder %s63, %s64
    %p75 = scmp.eq.s32.totalorder %s15, 0
    %p76 = por %p74, %p75
    %p77 = scmp.ne.s32.totalorder %s63, %s64
    %p78 = scmp.eq.s32.totalorder %s16, 3
    %p79 = por %p77, %p78
    %p81 = scmp.ne.s32.totalorder %s64, %s80
    %p82 = scmp.eq.s32.totalorder %s16, 0
    %p83 = por %p81, %p82
    %s84 = ssub.s32 %s17, %s29
    %s85 = ssub.s32 %s18, %s25
    %s86 = sor.u32 %s84, %s85
    %p87 = scmp.eq.s32.totalorder %s86, 0
    %s89 = sadd.s32 %s88, 1
    %s90 = scalar_select %p87, %s88, %s89
    %p93 = pneg %p87
    %p94 = scmp.eq.s32.totalorder %s10, 3
    %p95 = por %p93, %p94
    %p96 = scmp.ne.s32.totalorder %s88, %s91
    %p97 = scmp.eq.s32.totalorder %s10, 0
    %p98 = por %p96, %p97
    %p99 = scmp.ne.s32.totalorder %s88, %s91
    %p100 = scmp.eq.s32.totalorder %s15, 3
    %p101 = por %p99, %p100
    %p102 = scmp.ne.s32.totalorder %s91, %s92
    %p103 = scmp.eq.s32.totalorder %s15, 0
    %p104 = por %p102, %p103
    %p105 = scmp.ne.s32.totalorder %s91, %s92
    %p106 = scmp.eq.s32.totalorder %s16, 3
    %p107 = por %p105, %p106
    %p109 = scmp.ne.s32.totalorder %s92, %s108
    %p110 = scmp.eq.s32.totalorder %s16, 0
    %p111 = por %p109, %p110
    %s112 = ssub.s32 %s17, %s29
    %s113 = ssub.s32 %s18, %s25
    %s114 = sor.u32 %s112, %s113
    %p115 = scmp.eq.s32.totalorder %s114, 0
    %s117 = sadd.s32 %s116, 1
    %s118 = scalar_select %p115, %s116, %s117
    %p121 = pneg %p115
    %p122 = scmp.eq.s32.totalorder %s10, 3
    %p123 = por %p121, %p122
    %p124 = scmp.ne.s32.totalorder %s116, %s119
    %p125 = scmp.eq.s32.totalorder %s10, 0
    %p126 = por %p124, %p125
    %p127 = scmp.ne.s32.totalorder %s116, %s119
    %p128 = scmp.eq.s32.totalorder %s15, 3
    %p129 = por %p127, %p128
    %p130 = scmp.ne.s32.totalorder %s119, %s120
    %p131 = scmp.eq.s32.totalorder %s15, 0
    %p132 = por %p130, %p131
    %p133 = scmp.ne.s32.totalorder %s119, %s120
    %p134 = scmp.eq.s32.totalorder %s16, 3
    %p135 = por %p133, %p134
    %p137 = scmp.ne.s32.totalorder %s120, %s136
    %p138 = scmp.eq.s32.totalorder %s16, 0
    %p139 = por %p137, %p138
    %p140 = scmp.le.s32.totalorder 1, %s10
    %p141 = scmp.lt.s32.totalorder %s10, 5
    %p142 = pnand %p140, %p141
    %p143 = pneg %p142
    // Predicated region
    $region9: #{_lambda_.15} parent=5 // pred_check
      _
    $region10: #{_lambda_.15} parent=5 // pred_check_branch
      %145 = sbr.rel (%p142) target = $region12
    $region11: #{_lambda_.15} parent=5 // pred_region
      %s146 = ssub.s32 %s10, 1
    $region12: #{_lambda_.15} parent=5 // pred_fallthru
      _
    %p147 = scmp.lt.s32.totalorder %s10, 4
    // Predicated region
    $region13: #{_lambda_.15} parent=5 // pred_check
      %p148 = pneg %p147
    $region14: #{_lambda_.15} parent=5 // pred_check_branch
      %150 = sbr.rel (%p148) target = $region16
    $region15: #{_lambda_.15} parent=5 // pred_region
      // Predicated region
      $region17: #{_lambda_.15} parent=15 // pred_check
        %p151 = pneg %p44
      $region18: #{_lambda_.15} parent=15 // pred_check_branch
        %153 = sbr.rel (%p151) target = $region20
      $region19: #{_lambda_.15} parent=15 // pred_region
        %s154 = smul.u32 4, %s18
        %p155 = scmp.lt.s32.totalorder %s17, 3
        %s156 = scalar_select %p155, %s17, 3
        %p157 = scmp.lt.s32.totalorder %s154, 3
        %s158 = scalar_select %p157, %s154, 3
        %s159 = smul.addr %s156, 4
        %s160 = sadd.s32 %s158, %s159
        %s161 = smul.addr %s160, 4
        %s162 = scalar_lea.vmem %s0, %s161
        %s163 = smul.u32 4, %s18
      $region20: #{_lambda_.15} parent=15 // pred_fallthru
        _
      // Predicated region
      $region21: #{_lambda_.15} parent=15 // pred_check
        %p164 = pneg %p70
      $region22: #{_lambda_.15} parent=15 // pred_check_branch
        %166 = sbr.rel (%p164) target = $region24
      $region23: #{_lambda_.15} parent=15 // pred_region
        %p167 = scmp.lt.s32.totalorder %s17, 3
        %s168 = scalar_select %p167, %s17, 3
        %s169 = smul.addr %s168, 16
        %s170 = smul.addr %s169, 4
        %s171 = scalar_lea.vmem %s1, %s170
      $region24: #{_lambda_.15} parent=15 // pred_fallthru
        _
    $region16: #{_lambda_.15} parent=5 // pred_fallthru
      _
    %p172 = scmp.le.s32.totalorder 1, %s10
    %p173 = scmp.lt.s32.totalorder %s10, 5
    %p174 = pnand %p172, %p173
    %p175 = pneg %p174
    // Predicated region
    $region25: #{_lambda_.15} parent=5 // pred_check
      _
    $region26: #{_lambda_.15} parent=5 // pred_check_branch
      %177 = sbr.rel (%p174) target = $region28
    $region27: #{_lambda_.15} parent=5 // pred_region
      %s178 = ssub.s32 %s10, 1
      %s179 = smul.u32 4, %s20
      %p180 = scmp.lt.s32.totalorder %s19, 3
      %s181 = scalar_select %p180, %s19, 3
      %p182 = scmp.lt.s32.totalorder %s179, 3
      %s183 = scalar_select %p182, %s179, 3
      %s184 = smul.addr %s181, 4
      %s185 = sadd.s32 %s183, %s184
      %s186 = smul.addr %s185, 4
      %s187 = scalar_lea.vmem %s0, %s186
      %p188 = pneg %p50
      %p189 = pneg %p47
      %p190 = scmp.lt.s32.totalorder %s19, 3
      %s191 = scalar_select %p190, %s19, 3
      %s192 = smul.addr %s191, 16
      %s193 = smul.addr %s192, 4
      %s194 = scalar_lea.vmem %s1, %s193
      %p195 = pneg %p76
      %p196 = pneg %p73
      %p197 = pneg %p104
      %p198 = pneg %p101
      %s199 = smul.u32 4, %s20
      %p200 = scmp.lt.s32.totalorder %s19, 3
      %s201 = scalar_select %p200, %s19, 3
      %p202 = scmp.lt.s32.totalorder %s199, 3
      %s203 = scalar_select %p202, %s199, 3
      %s204 = smul.addr %s201, 4
      %s205 = sadd.s32 %s203, %s204
      %s206 = smul.addr %s205, 4
      %s207 = scalar_lea.vmem %s2, %s206
      %p208 = pneg %p132
      %p209 = pneg %p129
      %p210 = scmp.lt.s32.totalorder %s19, 3
      %s211 = scalar_select %p210, %s19, 3
      %p212 = scmp.lt.s32.totalorder %s20, 0
      %s213 = scalar_select %p212, %s20, 0
      %s214 = sadd.s32 %s213, %s211
      %s215 = smul.addr %s214, 2
      %s216 = scalar_lea.vmem %s3, %s215
      %s217 = smul.u32 4, %s20
      %p218 = scmp.lt.s32.totalorder %s19, 3
      %s219 = scalar_select %p218, %s19, 3
      %p220 = scmp.lt.s32.totalorder %s217, 3
      %s221 = scalar_select %p220, %s217, 3
      %s222 = smul.addr %s219, 4
      %s223 = sadd.s32 %s221, %s222
      %s224 = smul.addr %s223, 4
      %s225 = scalar_lea.vmem %s0, %s224
      %s226 = smul.u32 4, %s20
      %p227 = scmp.lt.s32.totalorder %s19, 3
      %s228 = scalar_select %p227, %s19, 3
      %s229 = smul.addr %s228, 16
      %s230 = smul.addr %s229, 4
      %s231 = scalar_lea.vmem %s1, %s230
      %s232 = smul.u32 4, %s20
      %p233 = scmp.lt.s32.totalorder %s19, 3
      %s234 = scalar_select %p233, %s19, 3
      %p235 = scmp.lt.s32.totalorder %s232, 3
      %s236 = scalar_select %p235, %s232, 3
      %s237 = smul.addr %s234, 4
      %s238 = sadd.s32 %s236, %s237
      %s239 = smul.addr %s238, 4
      %s240 = scalar_lea.vmem %s2, %s239
      %s241 = smul.u32 4, %s20
      %p242 = scmp.lt.s32.totalorder %s19, 3
      %s243 = scalar_select %p242, %s19, 3
      %p244 = scmp.lt.s32.totalorder %s20, 0
      %s245 = scalar_select %p244, %s20, 0
      %s246 = sadd.s32 %s245, %s243
      %s247 = smul.addr %s246, 2
      %s248 = scalar_lea.vmem %s3, %s247
      %v249 = vld [vmem:[%s225] sm:$0xf]
      %v250 = vld [vmem:[%s225 + $0x4] sm:$0xf]
      %v251 = vld [vmem:[%s225 + $0x8] sm:$0xf]
      %v252 = vld [vmem:[%s225 + $0xc] sm:$0xf]
      %v253 = vld [vmem:[%s231] sm:$0xf]
      %v254 = vld [vmem:[%s231 + $0x4] sm:$0xf]
      %v255 = vld [vmem:[%s231 + $0x8] sm:$0xf]
      %v256 = vld [vmem:[%s231 + $0xc] sm:$0xf]
      %v257 = vld [vmem:[%s231 + $0x10] sm:$0xf]
      %v258 = vld [vmem:[%s231 + $0x14] sm:$0xf]
      %v259 = vld [vmem:[%s231 + $0x18] sm:$0xf]
      %v260 = vld [vmem:[%s231 + $0x1c] sm:$0xf]
      %v261 = vld [vmem:[%s231 + $0x20] sm:$0xf]
      %v262 = vld [vmem:[%s231 + $0x24] sm:$0xf]
      %v263 = vld [vmem:[%s231 + $0x28] sm:$0xf]
      %v264 = vld [vmem:[%s231 + $0x2c] sm:$0xf]
      %v265 = vld [vmem:[%s231 + $0x30] sm:$0xf]
      %v266 = vld [vmem:[%s231 + $0x34] sm:$0xf]
      %v267 = vld [vmem:[%s231 + $0x38] sm:$0xf]
      %v268 = vld [vmem:[%s231 + $0x3c] sm:$0xf]
      %v273 = vunpack.c.l.b16 %v249
      %v274 = vunpack.c.l.b16 %v250
      %v275 = vunpack.c.l.b16 %v251
      %v276 = vunpack.c.l.b16 %v252
      %v277 = vpack.c.b16 %v274, %v273
      %v278 = vpack.c.b16 %v276, %v275
      %v297 = vunpack.c.l.b16 %v253
      %v298 = vunpack.c.l.b16 %v254
      %v299 = vunpack.c.l.b16 %v255
      %v300 = vunpack.c.l.b16 %v256
      %v301 = vunpack.c.l.b16 %v257
      %v302 = vunpack.c.l.b16 %v258
      %v303 = vunpack.c.l.b16 %v259
      %v304 = vunpack.c.l.b16 %v260
      %v305 = vunpack.c.l.b16 %v261
      %v306 = vunpack.c.l.b16 %v262
      %v307 = vunpack.c.l.b16 %v263
      %v308 = vunpack.c.l.b16 %v264
      %v309 = vunpack.c.l.b16 %v265
      %v310 = vunpack.c.l.b16 %v266
      %v311 = vunpack.c.l.b16 %v267
      %v312 = vunpack.c.l.b16 %v268
      %v313 = vpack.c.b16 %v298, %v297
      %v314 = vpack.c.b16 %v300, %v299
      %v315 = vpack.c.b16 %v302, %v301
      %v316 = vpack.c.b16 %v304, %v303
      %v317 = vpack.c.b16 %v306, %v305
      %v318 = vpack.c.b16 %v308, %v307
      %v319 = vpack.c.b16 %v310, %v309
      %v320 = vpack.c.b16 %v312, %v311
      %329 = vmatpush.bf16.msra.mxu0 %v320
      %330 = vmatpush.bf16.msra.mxu0 %v319
      %331 = vmatpush.bf16.msra.mxu0 %v318
      %332 = vmatpush.bf16.msra.mxu0 %v317
      %333 = vmatpush.bf16.msra.mxu0 %v316
      %334 = vmatpush.bf16.msra.mxu0 %v315
      %335 = vmatpush.bf16.msra.mxu0 %v314
      %336 = vmatpush.bf16.msra.mxu0 %v313
      %337 = vmatmul.bf16.gmra.mxu0 %v277
      %v338 = vpop.f32.mrf.mxu0
      %v339 = vadd.f32 0.0, %v338
      %v340 = vpop.f32.mrf.mxu0
      %v341 = vadd.f32 0.0, %v340
      %342 = vmatmul.bf16.gmra.mxu0 %v278
      %v343 = vpop.f32.mrf.mxu0
      %v344 = vadd.f32 0.0, %v343
      %v345 = vpop.f32.mrf.mxu0
      %v346 = vadd.f32 0.0, %v345
      %347 = vdwg.mxu0
      %v348 = vpack.c.bf16 %v339, %v339
      %v349 = vpack.c.bf16 %v341, %v341
      %v350 = vpack.c.bf16 %v344, %v344
      %v351 = vpack.c.bf16 %v346, %v346
      %352 = vst [vmem:[%s240] sm:$0xf] %v348
      %353 = vst [vmem:[%s240 + $0x4] sm:$0xf] %v349
      %354 = vst [vmem:[%s240 + $0x8] sm:$0xf] %v350
      %355 = vst [vmem:[%s240 + $0xc] sm:$0xf] %v351
      %v356 = vadd.f32 %v339, %v341
      %v357 = vadd.f32 %v356, %v344
      %v358 = vadd.f32 %v357, %v346
      %v359 = vrot.slane %v358, 4
      %v360 = vadd.f32 %v358, %v359
      %v361 = vrot.slane %v360, 2
      %v362 = vadd.f32 %v360, %v361
      %v363 = vrot.slane %v362, 1
      %v364 = vadd.f32 %v362, %v363
      %365 = vst [vmem:[%s248] sm:$0x1] %v364
      %v366 = vmul.f32 %v339, %v339
      %v367 = vmul.f32 %v341, %v341
      %v368 = vmul.f32 %v344, %v344
      %v369 = vmul.f32 %v346, %v346
      %v370 = vadd.f32 %v366, %v367
      %v371 = vadd.f32 %v370, %v368
      %v372 = vadd.f32 %v371, %v369
      %v373 = vrot.slane %v372, 4
      %v374 = vadd.f32 %v372, %v373
      %v375 = vrot.slane %v374, 2
      %v376 = vadd.f32 %v374, %v375
      %v377 = vrot.slane %v376, 1
      %v378 = vadd.f32 %v376, %v377
      %379 = vst [vmem:[%s248 + $0x1] sm:$0x1] %v378
      %s380 = smul.u32 4, %s20
      %p381 = scmp.lt.s32.totalorder %s19, 3
      %s382 = scalar_select %p381, %s19, 3
      %p383 = scmp.lt.s32.totalorder %s380, 3
      %s384 = scalar_select %p383, %s380, 3
      %s385 = smul.addr %s382, 4
      %s386 = sadd.s32 %s384, %s385
      %s387 = smul.addr %s386, 4
      %s388 = scalar_lea.vmem %s2, %s387
      %p389 = scmp.lt.s32.totalorder %s19, 3
      %s390 = scalar_select %p389, %s19, 3
      %p391 = scmp.lt.s32.totalorder %s20, 0
      %s392 = scalar_select %p391, %s20, 0
      %s393 = sadd.s32 %s392, %s390
      %s394 = smul.addr %s393, 2
      %s395 = scalar_lea.vmem %s3, %s394
      // Predicated region
      $region29: #{_lambda_.15} parent=27 // pred_check
        %p396 = pneg %p101
      $region30: #{_lambda_.15} parent=27 // pred_check_branch
        %398 = sbr.rel (%p396) target = $region32
      $region31: #{_lambda_.15} parent=27 // pred_region
        %s399 = smul.u32 4, %s20
      $region32: #{_lambda_.15} parent=27 // pred_fallthru
        _
      // Predicated region
      $region33: #{_lambda_.15} parent=27 // pred_check
        %p400 = pneg %p129
      $region34: #{_lambda_.15} parent=27 // pred_check_branch
        %402 = sbr.rel (%p400) target = $region36
      $region35: #{_lambda_.15} parent=27 // pred_region
        _
      $region36: #{_lambda_.15} parent=27 // pred_fallthru
        _
    $region28: #{_lambda_.15} parent=5 // pred_fallthru
      _
    %p403 = scmp.le.s32.totalorder 2, %s10
    // Predicated region
    $region37: #{_lambda_.15} parent=5 // pred_check
      %p404 = pneg %p403
    $region38: #{_lambda_.15} parent=5 // pred_check_branch
      %406 = sbr.rel (%p404) target = $region40
    $region39: #{_lambda_.15} parent=5 // pred_region
      %s407 = ssub.s32 %s10, 2
      // Predicated region
      $region41: #{_lambda_.15} parent=39 // pred_check
        %p408 = pneg %p107
      $region42: #{_lambda_.15} parent=39 // pred_check_branch
        %410 = sbr.rel (%p408) target = $region44
      $region43: #{_lambda_.15} parent=39 // pred_region
        %s411 = smul.u32 4, %s22
        %p412 = scmp.lt.s32.totalorder %s21, 3
        %s413 = scalar_select %p412, %s21, 3
        %p414 = scmp.lt.s32.totalorder %s411, 3
        %s415 = scalar_select %p414, %s411, 3
        %s416 = smul.addr %s413, 4
        %s417 = sadd.s32 %s415, %s416
        %s418 = smul.addr %s417, 4
        %s419 = scalar_lea.vmem %s2, %s418
      $region44: #{_lambda_.15} parent=39 // pred_fallthru
        _
      // Predicated region
      $region45: #{_lambda_.15} parent=39 // pred_check
        %p420 = pneg %p135
      $region46: #{_lambda_.15} parent=39 // pred_check_branch
        %422 = sbr.rel (%p420) target = $region48
      $region47: #{_lambda_.15} parent=39 // pred_region
        %p423 = scmp.lt.s32.totalorder %s21, 3
        %s424 = scalar_select %p423, %s21, 3
        %p425 = scmp.lt.s32.totalorder %s22, 0
        %s426 = scalar_select %p425, %s22, 0
        %s427 = sadd.s32 %s426, %s424
        %s428 = smul.addr %s427, 2
        %s429 = scalar_lea.vmem %s3, %s428
      $region48: #{_lambda_.15} parent=39 // pred_fallthru
        _
    $region40: #{_lambda_.15} parent=5 // pred_fallthru
      _
  $region6: #{_lambda_.15} parent=0 // loop_footer
    %s14 = sadd.s32 1, %s10
  $region7: #{_lambda_.15} parent=0 // loop_footer_branch
    %9 = sbr.rel target = $region3
  $region8: #{_lambda_.15} parent=0 // loop_exit
    _

// kernel: _lambda_.14
$region0: #{_lambda_.14}
  #allocation0 [shape = 'u32[]', space=smem, size = 0x4, offset = 0x4, fixed_abs, tag = 'smem constant byte address 0x4 - core index']
  #allocation1 [shape = 'u32[72,128]{1,0:T(1,128)}', space=vmem, size = 0x9000, scoped, tag = 'internal scratch']
  %s0 = inlined_call_operand.vmem [shape: bf16[2,128], index: 0, kind: input, shape index: {}]
  %s1 = inlined_call_operand.vmem [shape: bf16[128,2048], index: 1, kind: input, shape index: {}]
  %s2 = inlined_call_operand.vmem [shape: f32[1,128], index: 2, kind: input, shape index: {}]
  %s3 = inlined_call_operand.vmem [shape: f32[1,128], index: 3, kind: input, shape index: {}]
  %s4 = inlined_call_operand.vmem [shape: bf16[2,2048], index: 4, kind: output, shape index: {}]
  %s5 = sld [smem:[#allocation0]]
  $region26: #{_lambda_.14} parent=0
    _
  %s7 = ssub.s32 1, %s5
  %s8 = scalar_select 0, %s7, %s5
  // Predicated region
  $region2: #{_lambda_.14} parent=0 // pred_check
    _
  $region3: #{_lambda_.14} parent=0 // pred_check_branch
    %10 = sbr.rel (0) target = $region5
  $region4: #{_lambda_.14} parent=0 // pred_region
    _
  $region5: #{_lambda_.14} parent=0 // pred_fallthru
    _
  // Predicated region
  $region6: #{_lambda_.14} parent=0 // pred_check
    _
  $region7: #{_lambda_.14} parent=0 // pred_check_branch
    %12 = sbr.rel (0) target = $region9
  $region8: #{_lambda_.14} parent=0 // pred_region
    _
  $region9: #{_lambda_.14} parent=0 // pred_fallthru
    _
  // Predicated region
  $region10: #{_lambda_.14} parent=0 // pred_check
    _
  $region11: #{_lambda_.14} parent=0 // pred_check_branch
    %14 = sbr.rel (0) target = $region13
  $region12: #{_lambda_.14} parent=0 // pred_region
    _
  $region13: #{_lambda_.14} parent=0 // pred_fallthru
    _
  // Predicated region
  $region14: #{_lambda_.14} parent=0 // pred_check
    _
  $region15: #{_lambda_.14} parent=0 // pred_check_branch
    %16 = sbr.rel (0) target = $region17
  $region16: #{_lambda_.14} parent=0 // pred_region
    _
  $region17: #{_lambda_.14} parent=0 // pred_fallthru
    _
  %v17 = vld [vmem:[%s0] sm:$0x1]
  %v18 = vld [vmem:[%s1] sm:$0xff]
  %v19 = vld [vmem:[%s1 + $0x8] sm:$0xff]
  %v20 = vld [vmem:[%s1 + $0x10] sm:$0xff]
  %v21 = vld [vmem:[%s1 + $0x18] sm:$0xff]
  %v22 = vld [vmem:[%s1 + $0x20] sm:$0xff]
  %v23 = vld [vmem:[%s1 + $0x28] sm:$0xff]
  %v24 = vld [vmem:[%s1 + $0x30] sm:$0xff]
  %v25 = vld [vmem:[%s1 + $0x38] sm:$0xff]
  %v26 = vld [vmem:[%s1 + $0x40] sm:$0xff]
  %v27 = vld [vmem:[%s1 + $0x48] sm:$0xff]
  %v28 = vld [vmem:[%s1 + $0x50] sm:$0xff]
  %v29 = vld [vmem:[%s1 + $0x58] sm:$0xff]
  %v30 = vld [vmem:[%s1 + $0x60] sm:$0xff]
  %v31 = vld [vmem:[%s1 + $0x68] sm:$0xff]
  %v32 = vld [vmem:[%s1 + $0x70] sm:$0xff]
  %v33 = vld [vmem:[%s1 + $0x78] sm:$0xff]
  %v34 = vld [vmem:[%s1 + $0x80] sm:$0xff]
  %v35 = vld [vmem:[%s1 + $0x88] sm:$0xff]
  %v36 = vld [vmem:[%s1 + $0x90] sm:$0xff]
  %v37 = vld [vmem:[%s1 + $0x98] sm:$0xff]
  %v38 = vld [vmem:[%s1 + $0xa0] sm:$0xff]
  %v39 = vld [vmem:[%s1 + $0xa8] sm:$0xff]
  %v40 = vld [vmem:[%s1 + $0xb0] sm:$0xff]
  %v41 = vld [vmem:[%s1 + $0xb8] sm:$0xff]
  %v42 = vld [vmem:[%s1 + $0xc0] sm:$0xff]
  %v43 = vld [vmem:[%s1 + $0xc8] sm:$0xff]
  %v44 = vld [vmem:[%s1 + $0xd0] sm:$0xff]
  %v45 = vld [vmem:[%s1 + $0xd8] sm:$0xff]
  %v46 = vld [vmem:[%s1 + $0xe0] sm:$0xff]
  %v47 = vld [vmem:[%s1 + $0xe8] sm:$0xff]
  %v48 = vld [vmem:[%s1 + $0xf0] sm:$0xff]
  %v49 = vld [vmem:[%s1 + $0xf8] sm:$0xff]
  %v50 = vld [vmem:[%s1 + $0x100] sm:$0xff]
  %v51 = vld [vmem:[%s1 + $0x108] sm:$0xff]
  %v52 = vld [vmem:[%s1 + $0x110] sm:$0xff]
  %v53 = vld [vmem:[%s1 + $0x118] sm:$0xff]
  %v54 = vld [vmem:[%s1 + $0x120] sm:$0xff]
  %v55 = vld [vmem:[%s1 + $0x128] sm:$0xff]
  %v56 = vld [vmem:[%s1 + $0x130] sm:$0xff]
  %v57 = vld [vmem:[%s1 + $0x138] sm:$0xff]
  %v58 = vld [vmem:[%s1 + $0x140] sm:$0xff]
  %v59 = vld [vmem:[%s1 + $0x148] sm:$0xff]
  %v60 = vld [vmem:[%s1 + $0x150] sm:$0xff]
  %v61 = vld [vmem:[%s1 + $0x158] sm:$0xff]
  %v62 = vld [vmem:[%s1 + $0x160] sm:$0xff]
  %v63 = vld [vmem:[%s1 + $0x168] sm:$0xff]
  %v64 = vld [vmem:[%s1 + $0x170] sm:$0xff]
  %v65 = vld [vmem:[%s1 + $0x178] sm:$0xff]
  %v66 = vld [vmem:[%s1 + $0x180] sm:$0xff]
  %v67 = vld [vmem:[%s1 + $0x188] sm:$0xff]
  %v68 = vld [vmem:[%s1 + $0x190] sm:$0xff]
  %v69 = vld [vmem:[%s1 + $0x198] sm:$0xff]
  %v70 = vld [vmem:[%s1 + $0x1a0] sm:$0xff]
  %v71 = vld [vmem:[%s1 + $0x1a8] sm:$0xff]
  %v72 = vld [vmem:[%s1 + $0x1b0] sm:$0xff]
  %v73 = vld [vmem:[%s1 + $0x1b8] sm:$0xff]
  %v74 = vld [vmem:[%s1 + $0x1c0] sm:$0xff]
  %v75 = vld [vmem:[%s1 + $0x1c8] sm:$0xff]
  %v76 = vld [vmem:[%s1 + $0x1d0] sm:$0xff]
  %v77 = vld [vmem:[%s1 + $0x1d8] sm:$0xff]
  %v78 = vld [vmem:[%s1 + $0x1e0] sm:$0xff]
  %v79 = vld [vmem:[%s1 + $0x1e8] sm:$0xff]
  %v80 = vld [vmem:[%s1 + $0x1f0] sm:$0xff]
  %v81 = vld [vmem:[%s1 + $0x1f8] sm:$0xff]
  %v82 = vld [vmem:[%s1 + $0x200] sm:$0xff]
  %v83 = vld [vmem:[%s1 + $0x208] sm:$0xff]
  %v84 = vld [vmem:[%s1 + $0x210] sm:$0xff]
  %v85 = vld [vmem:[%s1 + $0x218] sm:$0xff]
  %v86 = vld [vmem:[%s1 + $0x220] sm:$0xff]
  %v87 = vld [vmem:[%s1 + $0x228] sm:$0xff]
  %v88 = vld [vmem:[%s1 + $0x230] sm:$0xff]
  %v89 = vld [vmem:[%s1 + $0x238] sm:$0xff]
  %v90 = vld [vmem:[%s1 + $0x240] sm:$0xff]
  %v91 = vld [vmem:[%s1 + $0x248] sm:$0xff]
  %v92 = vld [vmem:[%s1 + $0x250] sm:$0xff]
  %v93 = vld [vmem:[%s1 + $0x258] sm:$0xff]
  %v94 = vld [vmem:[%s1 + $0x260] sm:$0xff]
  %v95 = vld [vmem:[%s1 + $0x268] sm:$0xff]
  %v96 = vld [vmem:[%s1 + $0x270] sm:$0xff]
  %v97 = vld [vmem:[%s1 + $0x278] sm:$0xff]
  %v98 = vld [vmem:[%s1 + $0x280] sm:$0xff]
  %v99 = vld [vmem:[%s1 + $0x288] sm:$0xff]
  %v100 = vld [vmem:[%s1 + $0x290] sm:$0xff]
  %v101 = vld [vmem:[%s1 + $0x298] sm:$0xff]
  %v102 = vld [vmem:[%s1 + $0x2a0] sm:$0xff]
  %v103 = vld [vmem:[%s1 + $0x2a8] sm:$0xff]
  %v104 = vld [vmem:[%s1 + $0x2b0] sm:$0xff]
  %v105 = vld [vmem:[%s1 + $0x2b8] sm:$0xff]
  %v106 = vld [vmem:[%s1 + $0x2c0] sm:$0xff]
  %v107 = vld [vmem:[%s1 + $0x2c8] sm:$0xff]
  %v108 = vld [vmem:[%s1 + $0x2d0] sm:$0xff]
  %v109 = vld [vmem:[%s1 + $0x2d8] sm:$0xff]
  %v110 = vld [vmem:[%s1 + $0x2e0] sm:$0xff]
  %v111 = vld [vmem:[%s1 + $0x2e8] sm:$0xff]
  %v112 = vld [vmem:[%s1 + $0x2f0] sm:$0xff]
  %v113 = vld [vmem:[%s1 + $0x2f8] sm:$0xff]
  %v114 = vld [vmem:[%s1 + $0x300] sm:$0xff]
  %v115 = vld [vmem:[%s1 + $0x308] sm:$0xff]
  %v116 = vld [vmem:[%s1 + $0x310] sm:$0xff]
  %v117 = vld [vmem:[%s1 + $0x318] sm:$0xff]
  %v118 = vld [vmem:[%s1 + $0x320] sm:$0xff]
  %v119 = vld [vmem:[%s1 + $0x328] sm:$0xff]
  %v120 = vld [vmem:[%s1 + $0x330] sm:$0xff]
  %v121 = vld [vmem:[%s1 + $0x338] sm:$0xff]
  %v122 = vld [vmem:[%s1 + $0x340] sm:$0xff]
  %v123 = vld [vmem:[%s1 + $0x348] sm:$0xff]
  %v124 = vld [vmem:[%s1 + $0x350] sm:$0xff]
  %v125 = vld [vmem:[%s1 + $0x358] sm:$0xff]
  %v126 = vld [vmem:[%s1 + $0x360] sm:$0xff]
  %v127 = vld [vmem:[%s1 + $0x368] sm:$0xff]
  %v128 = vld [vmem:[%s1 + $0x370] sm:$0xff]
  %v129 = vld [vmem:[%s1 + $0x378] sm:$0xff]
  %v130 = vld [vmem:[%s1 + $0x380] sm:$0xff]
  %v131 = vld [vmem:[%s1 + $0x388] sm:$0xff]
  %v132 = vld [vmem:[%s1 + $0x390] sm:$0xff]
  %v133 = vld [vmem:[%s1 + $0x398] sm:$0xff]
  %v134 = vld [vmem:[%s1 + $0x3a0] sm:$0xff]
  %v135 = vld [vmem:[%s1 + $0x3a8] sm:$0xff]
  %v136 = vld [vmem:[%s1 + $0x3b0] sm:$0xff]
  %v137 = vld [vmem:[%s1 + $0x3b8] sm:$0xff]
  %v138 = vld [vmem:[%s1 + $0x3c0] sm:$0xff]
  %v139 = vld [vmem:[%s1 + $0x3c8] sm:$0xff]
  %v140 = vld [vmem:[%s1 + $0x3d0] sm:$0xff]
  %v141 = vld [vmem:[%s1 + $0x3d8] sm:$0xff]
  %v142 = vld [vmem:[%s1 + $0x3e0] sm:$0xff]
  %v143 = vld [vmem:[%s1 + $0x3e8] sm:$0xff]
  %v144 = vld [vmem:[%s1 + $0x3f0] sm:$0xff]
  %v145 = vld [vmem:[%s1 + $0x3f8] sm:$0xff]
  %v274 = vunpack.c.l.b16 %v18
  %v275 = vunpack.c.h.b16 %v18
  %v276 = vunpack.c.l.b16 %v19
  %v277 = vunpack.c.h.b16 %v19
  %v278 = vunpack.c.l.b16 %v20
  %v279 = vunpack.c.h.b16 %v20
  %v280 = vunpack.c.l.b16 %v21
  %v281 = vunpack.c.h.b16 %v21
  %v282 = vunpack.c.l.b16 %v22
  %v283 = vunpack.c.h.b16 %v22
  %v284 = vunpack.c.l.b16 %v23
  %v285 = vunpack.c.h.b16 %v23
  %v286 = vunpack.c.l.b16 %v24
  %v287 = vunpack.c.h.b16 %v24
  %v288 = vunpack.c.l.b16 %v25
  %v289 = vunpack.c.h.b16 %v25
  %v290 = vunpack.c.l.b16 %v26
  %v291 = vunpack.c.h.b16 %v26
  %v292 = vunpack.c.l.b16 %v27
  %v293 = vunpack.c.h.b16 %v27
  %v294 = vunpack.c.l.b16 %v28
  %v295 = vunpack.c.h.b16 %v28
  %v296 = vunpack.c.l.b16 %v29
  %v297 = vunpack.c.h.b16 %v29
  %v298 = vunpack.c.l.b16 %v30
  %v299 = vunpack.c.h.b16 %v30
  %v300 = vunpack.c.l.b16 %v31
  %v301 = vunpack.c.h.b16 %v31
  %v302 = vunpack.c.l.b16 %v32
  %v303 = vunpack.c.h.b16 %v32
  %v304 = vunpack.c.l.b16 %v33
  %v305 = vunpack.c.h.b16 %v33
  %v306 = vunpack.c.l.b16 %v34
  %v307 = vunpack.c.h.b16 %v34
  %v308 = vunpack.c.l.b16 %v35
  %v309 = vunpack.c.h.b16 %v35
  %v310 = vunpack.c.l.b16 %v36
  %v311 = vunpack.c.h.b16 %v36
  %v312 = vunpack.c.l.b16 %v37
  %v313 = vunpack.c.h.b16 %v37
  %v314 = vunpack.c.l.b16 %v38
  %v315 = vunpack.c.h.b16 %v38
  %v316 = vunpack.c.l.b16 %v39
  %v317 = vunpack.c.h.b16 %v39
  %v318 = vunpack.c.l.b16 %v40
  %v319 = vunpack.c.h.b16 %v40
  %v320 = vunpack.c.l.b16 %v41
  %v321 = vunpack.c.h.b16 %v41
  %v322 = vunpack.c.l.b16 %v42
  %v323 = vunpack.c.h.b16 %v42
  %v324 = vunpack.c.l.b16 %v43
  %v325 = vunpack.c.h.b16 %v43
  %v326 = vunpack.c.l.b16 %v44
  %v327 = vunpack.c.h.b16 %v44
  %v328 = vunpack.c.l.b16 %v45
  %v329 = vunpack.c.h.b16 %v45
  %v330 = vunpack.c.l.b16 %v46
  %v331 = vunpack.c.h.b16 %v46
  %v332 = vunpack.c.l.b16 %v47
  %v333 = vunpack.c.h.b16 %v47
  %v334 = vunpack.c.l.b16 %v48
  %v335 = vunpack.c.h.b16 %v48
  %v336 = vunpack.c.l.b16 %v49
  %v337 = vunpack.c.h.b16 %v49
  %v338 = vunpack.c.l.b16 %v50
  %v339 = vunpack.c.h.b16 %v50
  %v340 = vunpack.c.l.b16 %v51
  %v341 = vunpack.c.h.b16 %v51
  %v342 = vunpack.c.l.b16 %v52
  %v343 = vunpack.c.h.b16 %v52
  %v344 = vunpack.c.l.b16 %v53
  %v345 = vunpack.c.h.b16 %v53
  %v346 = vunpack.c.l.b16 %v54
  %v347 = vunpack.c.h.b16 %v54
  %v348 = vunpack.c.l.b16 %v55
  %v349 = vunpack.c.h.b16 %v55
  %v350 = vunpack.c.l.b16 %v56
  %v351 = vunpack.c.h.b16 %v56
  %v352 = vunpack.c.l.b16 %v57
  %v353 = vunpack.c.h.b16 %v57
  %v354 = vunpack.c.l.b16 %v58
  %v355 = vunpack.c.h.b16 %v58
  %v356 = vunpack.c.l.b16 %v59
  %v357 = vunpack.c.h.b16 %v59
  %v358 = vunpack.c.l.b16 %v60
  %v359 = vunpack.c.h.b16 %v60
  %v360 = vunpack.c.l.b16 %v61
  %v361 = vunpack.c.h.b16 %v61
  %v362 = vunpack.c.l.b16 %v62
  %v363 = vunpack.c.h.b16 %v62
  %v364 = vunpack.c.l.b16 %v63
  %v365 = vunpack.c.h.b16 %v63
  %v366 = vunpack.c.l.b16 %v64
  %v367 = vunpack.c.h.b16 %v64
  %v368 = vunpack.c.l.b16 %v65
  %v369 = vunpack.c.h.b16 %v65
  %v370 = vunpack.c.l.b16 %v66
  %v371 = vunpack.c.h.b16 %v66
  %v372 = vunpack.c.l.b16 %v67
  %v373 = vunpack.c.h.b16 %v67
  %v374 = vunpack.c.l.b16 %v68
  %v375 = vunpack.c.h.b16 %v68
  %v376 = vunpack.c.l.b16 %v69
  %v377 = vunpack.c.h.b16 %v69
  %v378 = vunpack.c.l.b16 %v70
  %v379 = vunpack.c.h.b16 %v70
  %v380 = vunpack.c.l.b16 %v71
  %v381 = vunpack.c.h.b16 %v71
  %v382 = vunpack.c.l.b16 %v72
  %v383 = vunpack.c.h.b16 %v72
  %v384 = vunpack.c.l.b16 %v73
  %v385 = vunpack.c.h.b16 %v73
  %v386 = vunpack.c.l.b16 %v74
  %v387 = vunpack.c.h.b16 %v74
  %v388 = vunpack.c.l.b16 %v75
  %v389 = vunpack.c.h.b16 %v75
  %v390 = vunpack.c.l.b16 %v76
  %v391 = vunpack.c.h.b16 %v76
  %v392 = vunpack.c.l.b16 %v77
  %v393 = vunpack.c.h.b16 %v77
  %v394 = vunpack.c.l.b16 %v78
  %v395 = vunpack.c.h.b16 %v78
  %v396 = vunpack.c.l.b16 %v79
  %v397 = vunpack.c.h.b16 %v79
  %v398 = vunpack.c.l.b16 %v80
  %v399 = vunpack.c.h.b16 %v80
  %v400 = vunpack.c.l.b16 %v81
  %v401 = vunpack.c.h.b16 %v81
  %v402 = vunpack.c.l.b16 %v82
  %v403 = vunpack.c.h.b16 %v82
  %v404 = vunpack.c.l.b16 %v83
  %v405 = vunpack.c.h.b16 %v83
  %v406 = vunpack.c.l.b16 %v84
  %v407 = vunpack.c.h.b16 %v84
  %v408 = vunpack.c.l.b16 %v85
  %v409 = vunpack.c.h.b16 %v85
  %v410 = vunpack.c.l.b16 %v86
  %v411 = vunpack.c.h.b16 %v86
  %v412 = vunpack.c.l.b16 %v87
  %v413 = vunpack.c.h.b16 %v87
  %v414 = vunpack.c.l.b16 %v88
  %v415 = vunpack.c.h.b16 %v88
  %v416 = vunpack.c.l.b16 %v89
  %v417 = vunpack.c.h.b16 %v89
  %v418 = vunpack.c.l.b16 %v90
  %v419 = vunpack.c.h.b16 %v90
  %v420 = vunpack.c.l.b16 %v91
  %v421 = vunpack.c.h.b16 %v91
  %v422 = vunpack.c.l.b16 %v92
  %v423 = vunpack.c.h.b16 %v92
  %v424 = vunpack.c.l.b16 %v93
  %v425 = vunpack.c.h.b16 %v93
  %v426 = vunpack.c.l.b16 %v94
  %v427 = vunpack.c.h.b16 %v94
  %v428 = vunpack.c.l.b16 %v95
  %v429 = vunpack.c.h.b16 %v95
  %v430 = vunpack.c.l.b16 %v96
  %v431 = vunpack.c.h.b16 %v96
  %v432 = vunpack.c.l.b16 %v97
  %v433 = vunpack.c.h.b16 %v97
  %v434 = vunpack.c.l.b16 %v98
  %v435 = vunpack.c.h.b16 %v98
  %v436 = vunpack.c.l.b16 %v99
  %v437 = vunpack.c.h.b16 %v99
  %v438 = vunpack.c.l.b16 %v100
  %v439 = vunpack.c.h.b16 %v100
  %v440 = vunpack.c.l.b16 %v101
  %v441 = vunpack.c.h.b16 %v101
  %v442 = vunpack.c.l.b16 %v102
  %v443 = vunpack.c.h.b16 %v102
  %v444 = vunpack.c.l.b16 %v103
  %v445 = vunpack.c.h.b16 %v103
  %v446 = vunpack.c.l.b16 %v104
  %v447 = vunpack.c.h.b16 %v104
  %v448 = vunpack.c.l.b16 %v105
  %v449 = vunpack.c.h.b16 %v105
  %v450 = vunpack.c.l.b16 %v106
  %v451 = vunpack.c.h.b16 %v106
  %v452 = vunpack.c.l.b16 %v107
  %v453 = vunpack.c.h.b16 %v107
  %v454 = vunpack.c.l.b16 %v108
  %v455 = vunpack.c.h.b16 %v108
  %v456 = vunpack.c.l.b16 %v109
  %v457 = vunpack.c.h.b16 %v109
  %v458 = vunpack.c.l.b16 %v110
  %v459 = vunpack.c.h.b16 %v110
  %v460 = vunpack.c.l.b16 %v111
  %v461 = vunpack.c.h.b16 %v111
  %v462 = vunpack.c.l.b16 %v112
  %v463 = vunpack.c.h.b16 %v112
  %v464 = vunpack.c.l.b16 %v113
  %v465 = vunpack.c.h.b16 %v113
  %v466 = vunpack.c.l.b16 %v114
  %v467 = vunpack.c.h.b16 %v114
  %v468 = vunpack.c.l.b16 %v115
  %v469 = vunpack.c.h.b16 %v115
  %v470 = vunpack.c.l.b16 %v116
  %v471 = vunpack.c.h.b16 %v116
  %v472 = vunpack.c.l.b16 %v117
  %v473 = vunpack.c.h.b16 %v117
  %v474 = vunpack.c.l.b16 %v118
  %v475 = vunpack.c.h.b16 %v118
  %v476 = vunpack.c.l.b16 %v119
  %v477 = vunpack.c.h.b16 %v119
  %v478 = vunpack.c.l.b16 %v120
  %v479 = vunpack.c.h.b16 %v120
  %v480 = vunpack.c.l.b16 %v121
  %v481 = vunpack.c.h.b16 %v121
  %v482 = vunpack.c.l.b16 %v122
  %v483 = vunpack.c.h.b16 %v122
  %v484 = vunpack.c.l.b16 %v123
  %v485 = vunpack.c.h.b16 %v123
  %v486 = vunpack.c.l.b16 %v124
  %v487 = vunpack.c.h.b16 %v124
  %v488 = vunpack.c.l.b16 %v125
  %v489 = vunpack.c.h.b16 %v125
  %v490 = vunpack.c.l.b16 %v126
  %v491 = vunpack.c.h.b16 %v126
  %v492 = vunpack.c.l.b16 %v127
  %v493 = vunpack.c.h.b16 %v127
  %v494 = vunpack.c.l.b16 %v128
  %v495 = vunpack.c.h.b16 %v128
  %v496 = vunpack.c.l.b16 %v129
  %v497 = vunpack.c.h.b16 %v129
  %v498 = vunpack.c.l.b16 %v130
  %v499 = vunpack.c.h.b16 %v130
  %v500 = vunpack.c.l.b16 %v131
  %v501 = vunpack.c.h.b16 %v131
  %v502 = vunpack.c.l.b16 %v132
  %v503 = vunpack.c.h.b16 %v132
  %v504 = vunpack.c.l.b16 %v133
  %v505 = vunpack.c.h.b16 %v133
  %v506 = vunpack.c.l.b16 %v134
  %v507 = vunpack.c.h.b16 %v134
  %v508 = vunpack.c.l.b16 %v135
  %v509 = vunpack.c.h.b16 %v135
  %v510 = vunpack.c.l.b16 %v136
  %v511 = vunpack.c.h.b16 %v136
  %v512 = vunpack.c.l.b16 %v137
  %v513 = vunpack.c.h.b16 %v137
  %v514 = vunpack.c.l.b16 %v138
  %v515 = vunpack.c.h.b16 %v138
  %v516 = vunpack.c.l.b16 %v139
  %v517 = vunpack.c.h.b16 %v139
  %v518 = vunpack.c.l.b16 %v140
  %v519 = vunpack.c.h.b16 %v140
  %v520 = vunpack.c.l.b16 %v141
  %v521 = vunpack.c.h.b16 %v141
  %v522 = vunpack.c.l.b16 %v142
  %v523 = vunpack.c.h.b16 %v142
  %v524 = vunpack.c.l.b16 %v143
  %v525 = vunpack.c.h.b16 %v143
  %v526 = vunpack.c.l.b16 %v144
  %v527 = vunpack.c.h.b16 %v144
  %v528 = vunpack.c.l.b16 %v145
  %v529 = vunpack.c.h.b16 %v145
  %v530 = vpack.c.b16 %v290, %v274
  %v531 = vpack.c.b16 %v291, %v275
  %v532 = vpack.c.b16 %v292, %v276
  %v533 = vpack.c.b16 %v293, %v277
  %v534 = vpack.c.b16 %v294, %v278
  %v535 = vpack.c.b16 %v295, %v279
  %v536 = vpack.c.b16 %v296, %v280
  %v537 = vpack.c.b16 %v297, %v281
  %v538 = vpack.c.b16 %v298, %v282
  %v539 = vpack.c.b16 %v299, %v283
  %v540 = vpack.c.b16 %v300, %v284
  %v541 = vpack.c.b16 %v301, %v285
  %v542 = vpack.c.b16 %v302, %v286
  %v543 = vpack.c.b16 %v303, %v287
  %v544 = vpack.c.b16 %v304, %v288
  %v545 = vpack.c.b16 %v305, %v289
  %v546 = vpack.c.b16 %v322, %v306
  %v547 = vpack.c.b16 %v323, %v307
  %v548 = vpack.c.b16 %v324, %v308
  %v549 = vpack.c.b16 %v325, %v309
  %v550 = vpack.c.b16 %v326, %v310
  %v551 = vpack.c.b16 %v327, %v311
  %v552 = vpack.c.b16 %v328, %v312
  %v553 = vpack.c.b16 %v329, %v313
  %v554 = vpack.c.b16 %v330, %v314
  %v555 = vpack.c.b16 %v331, %v315
  %v556 = vpack.c.b16 %v332, %v316
  %v557 = vpack.c.b16 %v333, %v317
  %v558 = vpack.c.b16 %v334, %v318
  %v559 = vpack.c.b16 %v335, %v319
  %v560 = vpack.c.b16 %v336, %v320
  %v561 = vpack.c.b16 %v337, %v321
  %v562 = vpack.c.b16 %v354, %v338
  %v563 = vpack.c.b16 %v355, %v339
  %v564 = vpack.c.b16 %v356, %v340
  %v565 = vpack.c.b16 %v357, %v341
  %v566 = vpack.c.b16 %v358, %v342
  %v567 = vpack.c.b16 %v359, %v343
  %v568 = vpack.c.b16 %v360, %v344
  %v569 = vpack.c.b16 %v361, %v345
  %v570 = vpack.c.b16 %v362, %v346
  %v571 = vpack.c.b16 %v363, %v347
  %v572 = vpack.c.b16 %v364, %v348
  %v573 = vpack.c.b16 %v365, %v349
  %v574 = vpack.c.b16 %v366, %v350
  %v575 = vpack.c.b16 %v367, %v351
  %v576 = vpack.c.b16 %v368, %v352
  %v577 = vpack.c.b16 %v369, %v353
  %v578 = vpack.c.b16 %v386, %v370
  %v579 = vpack.c.b16 %v387, %v371
  %v580 = vpack.c.b16 %v388, %v372
  %v581 = vpack.c.b16 %v389, %v373
  %v582 = vpack.c.b16 %v390, %v374
  %v583 = vpack.c.b16 %v391, %v375
  %v584 = vpack.c.b16 %v392, %v376
  %v585 = vpack.c.b16 %v393, %v377
  %v586 = vpack.c.b16 %v394, %v378
  %v587 = vpack.c.b16 %v395, %v379
  %v588 = vpack.c.b16 %v396, %v380
  %v589 = vpack.c.b16 %v397, %v381
  %v590 = vpack.c.b16 %v398, %v382
  %v591 = vpack.c.b16 %v399, %v383
  %v592 = vpack.c.b16 %v400, %v384
  %v593 = vpack.c.b16 %v401, %v385
  %v594 = vpack.c.b16 %v418, %v402
  %v595 = vpack.c.b16 %v419, %v403
  %v596 = vpack.c.b16 %v420, %v404
  %v597 = vpack.c.b16 %v421, %v405
  %v598 = vpack.c.b16 %v422, %v406
  %v599 = vpack.c.b16 %v423, %v407
  %v600 = vpack.c.b16 %v424, %v408
  %v601 = vpack.c.b16 %v425, %v409
  %v602 = vpack.c.b16 %v426, %v410
  %v603 = vpack.c.b16 %v427, %v411
  %v604 = vpack.c.b16 %v428, %v412
  %v605 = vpack.c.b16 %v429, %v413
  %v606 = vpack.c.b16 %v430, %v414
  %v607 = vpack.c.b16 %v431, %v415
  %v608 = vpack.c.b16 %v432, %v416
  %v609 = vpack.c.b16 %v433, %v417
  %v610 = vpack.c.b16 %v450, %v434
  %v611 = vpack.c.b16 %v451, %v435
  %v612 = vpack.c.b16 %v452, %v436
  %v613 = vpack.c.b16 %v453, %v437
  %v614 = vpack.c.b16 %v454, %v438
  %v615 = vpack.c.b16 %v455, %v439
  %v616 = vpack.c.b16 %v456, %v440
  %v617 = vpack.c.b16 %v457, %v441
  %v618 = vpack.c.b16 %v458, %v442
  %v619 = vpack.c.b16 %v459, %v443
  %v620 = vpack.c.b16 %v460, %v444
  %v621 = vpack.c.b16 %v461, %v445
  %v622 = vpack.c.b16 %v462, %v446
  %v623 = vpack.c.b16 %v463, %v447
  %v624 = vpack.c.b16 %v464, %v448
  %v625 = vpack.c.b16 %v465, %v449
  %v626 = vpack.c.b16 %v482, %v466
  %v627 = vpack.c.b16 %v483, %v467
  %v628 = vpack.c.b16 %v484, %v468
  %v629 = vpack.c.b16 %v485, %v469
  %v630 = vpack.c.b16 %v486, %v470
  %v631 = vpack.c.b16 %v487, %v471
  %v632 = vpack.c.b16 %v488, %v472
  %v633 = vpack.c.b16 %v489, %v473
  %v634 = vpack.c.b16 %v490, %v474
  %v635 = vpack.c.b16 %v491, %v475
  %v636 = vpack.c.b16 %v492, %v476
  %v637 = vpack.c.b16 %v493, %v477
  %v638 = vpack.c.b16 %v494, %v478
  %v639 = vpack.c.b16 %v495, %v479
  %v640 = vpack.c.b16 %v496, %v480
  %v641 = vpack.c.b16 %v497, %v481
  %v642 = vpack.c.b16 %v514, %v498
  %v643 = vpack.c.b16 %v515, %v499
  %v644 = vpack.c.b16 %v516, %v500
  %v645 = vpack.c.b16 %v517, %v501
  %v646 = vpack.c.b16 %v518, %v502
  %v647 = vpack.c.b16 %v519, %v503
  %v648 = vpack.c.b16 %v520, %v504
  %v649 = vpack.c.b16 %v521, %v505
  %v650 = vpack.c.b16 %v522, %v506
  %v651 = vpack.c.b16 %v523, %v507
  %v652 = vpack.c.b16 %v524, %v508
  %v653 = vpack.c.b16 %v525, %v509
  %v654 = vpack.c.b16 %v526, %v510
  %v655 = vpack.c.b16 %v527, %v511
  %v656 = vpack.c.b16 %v528, %v512
  %v657 = vpack.c.b16 %v529, %v513
  %786 = vmatpush.bf16.msra.mxu0 %v642
  %787 = vmatpush.bf16.msra.mxu0 %v626
  %788 = vmatpush.bf16.msra.mxu0 %v610
  %789 = vmatpush.bf16.msra.mxu0 %v594
  %790 = vmatpush.bf16.msra.mxu0 %v578
  %791 = vmatpush.bf16.msra.mxu0 %v562
  %792 = vmatpush.bf16.msra.mxu0 %v546
  %793 = vmatpush.bf16.msra.mxu0 %v530
  %794 = vmatmul.bf16.gmra.mxu0 %v17
  %v795 = vpop.f32.mrf.mxu0
  %v796 = vadd.f32 0.0, %v795
  %v797 = vpop.f32.mrf.mxu0
  %798 = vdwg.mxu0
  %799 = vmatpush.bf16.msra.mxu0 %v643
  %800 = vmatpush.bf16.msra.mxu0 %v627
  %801 = vmatpush.bf16.msra.mxu0 %v611
  %802 = vmatpush.bf16.msra.mxu0 %v595
  %803 = vmatpush.bf16.msra.mxu0 %v579
  %804 = vmatpush.bf16.msra.mxu0 %v563
  %805 = vmatpush.bf16.msra.mxu0 %v547
  %806 = vmatpush.bf16.msra.mxu0 %v531
  %807 = vmatmul.bf16.gmra.mxu0 %v17
  %v808 = vpop.f32.mrf.mxu0
  %v809 = vadd.f32 0.0, %v808
  %v810 = vpop.f32.mrf.mxu0
  %811 = vdwg.mxu0
  %812 = vmatpush.bf16.msra.mxu0 %v644
  %813 = vmatpush.bf16.msra.mxu0 %v628
  %814 = vmatpush.bf16.msra.mxu0 %v612
  %815 = vmatpush.bf16.msra.mxu0 %v596
  %816 = vmatpush.bf16.msra.mxu0 %v580
  %817 = vmatpush.bf16.msra.mxu0 %v564
  %818 = vmatpush.bf16.msra.mxu0 %v548
  %819 = vmatpush.bf16.msra.mxu0 %v532
  %820 = vmatmul.bf16.gmra.mxu0 %v17
  %v821 = vpop.f32.mrf.mxu0
  %v822 = vadd.f32 0.0, %v821
  %v823 = vpop.f32.mrf.mxu0
  %824 = vdwg.mxu0
  %825 = vmatpush.bf16.msra.mxu0 %v645
  %826 = vmatpush.bf16.msra.mxu0 %v629
  %827 = vmatpush.bf16.msra.mxu0 %v613
  %828 = vmatpush.bf16.msra.mxu0 %v597
  %829 = vmatpush.bf16.msra.mxu0 %v581
  %830 = vmatpush.bf16.msra.mxu0 %v565
  %831 = vmatpush.bf16.msra.mxu0 %v549
  %832 = vmatpush.bf16.msra.mxu0 %v533
  %833 = vmatmul.bf16.gmra.mxu0 %v17
  %v834 = vpop.f32.mrf.mxu0
  %v835 = vadd.f32 0.0, %v834
  %v836 = vpop.f32.mrf.mxu0
  %837 = vdwg.mxu0
  %838 = vmatpush.bf16.msra.mxu0 %v646
  %839 = vmatpush.bf16.msra.mxu0 %v630
  %840 = vmatpush.bf16.msra.mxu0 %v614
  %841 = vmatpush.bf16.msra.mxu0 %v598
  %842 = vmatpush.bf16.msra.mxu0 %v582
  %843 = vmatpush.bf16.msra.mxu0 %v566
  %844 = vmatpush.bf16.msra.mxu0 %v550
  %845 = vmatpush.bf16.msra.mxu0 %v534
  %846 = vmatmul.bf16.gmra.mxu0 %v17
  %v847 = vpop.f32.mrf.mxu0
  %v848 = vadd.f32 0.0, %v847
  %v849 = vpop.f32.mrf.mxu0
  %850 = vdwg.mxu0
  %851 = vmatpush.bf16.msra.mxu0 %v647
  %852 = vmatpush.bf16.msra.mxu0 %v631
  %853 = vmatpush.bf16.msra.mxu0 %v615
  %854 = vmatpush.bf16.msra.mxu0 %v599
  %855 = vmatpush.bf16.msra.mxu0 %v583
  %856 = vmatpush.bf16.msra.mxu0 %v567
  %857 = vmatpush.bf16.msra.mxu0 %v551
  %858 = vmatpush.bf16.msra.mxu0 %v535
  %859 = vmatmul.bf16.gmra.mxu0 %v17
  %v860 = vpop.f32.mrf.mxu0
  %v861 = vadd.f32 0.0, %v860
  %v862 = vpop.f32.mrf.mxu0
  %863 = vdwg.mxu0
  %864 = vmatpush.bf16.msra.mxu0 %v648
  %865 = vmatpush.bf16.msra.mxu0 %v632
  %866 = vmatpush.bf16.msra.mxu0 %v616
  %867 = vmatpush.bf16.msra.mxu0 %v600
  %868 = vmatpush.bf16.msra.mxu0 %v584
  %869 = vmatpush.bf16.msra.mxu0 %v568
  %870 = vmatpush.bf16.msra.mxu0 %v552
  %871 = vmatpush.bf16.msra.mxu0 %v536
  %872 = vmatmul.bf16.gmra.mxu0 %v17
  %v873 = vpop.f32.mrf.mxu0
  %v874 = vadd.f32 0.0, %v873
  %v875 = vpop.f32.mrf.mxu0
  %876 = vdwg.mxu0
  %877 = vmatpush.bf16.msra.mxu0 %v649
  %878 = vmatpush.bf16.msra.mxu0 %v633
  %879 = vmatpush.bf16.msra.mxu0 %v617
  %880 = vmatpush.bf16.msra.mxu0 %v601
  %881 = vmatpush.bf16.msra.mxu0 %v585
  %882 = vmatpush.bf16.msra.mxu0 %v569
  %883 = vmatpush.bf16.msra.mxu0 %v553
  %884 = vmatpush.bf16.msra.mxu0 %v537
  %885 = vmatmul.bf16.gmra.mxu0 %v17
  %v886 = vpop.f32.mrf.mxu0
  %v887 = vadd.f32 0.0, %v886
  %v888 = vpop.f32.mrf.mxu0
  %889 = vdwg.mxu0
  %890 = vmatpush.bf16.msra.mxu0 %v650
  %891 = vmatpush.bf16.msra.mxu0 %v634
  %892 = vmatpush.bf16.msra.mxu0 %v618
  %893 = vmatpush.bf16.msra.mxu0 %v602
  %894 = vmatpush.bf16.msra.mxu0 %v586
  %895 = vmatpush.bf16.msra.mxu0 %v570
  %896 = vmatpush.bf16.msra.mxu0 %v554
  %897 = vmatpush.bf16.msra.mxu0 %v538
  %898 = vmatmul.bf16.gmra.mxu0 %v17
  %v899 = vpop.f32.mrf.mxu0
  %v900 = vadd.f32 0.0, %v899
  %v901 = vpop.f32.mrf.mxu0
  %902 = vdwg.mxu0
  %903 = vmatpush.bf16.msra.mxu0 %v651
  %904 = vmatpush.bf16.msra.mxu0 %v635
  %905 = vmatpush.bf16.msra.mxu0 %v619
  %906 = vmatpush.bf16.msra.mxu0 %v603
  %907 = vmatpush.bf16.msra.mxu0 %v587
  %908 = vmatpush.bf16.msra.mxu0 %v571
  %909 = vmatpush.bf16.msra.mxu0 %v555
  %910 = vmatpush.bf16.msra.mxu0 %v539
  %911 = vmatmul.bf16.gmra.mxu0 %v17
  %v912 = vpop.f32.mrf.mxu0
  %v913 = vadd.f32 0.0, %v912
  %v914 = vpop.f32.mrf.mxu0
  %915 = vdwg.mxu0
  %916 = vmatpush.bf16.msra.mxu0 %v652
  %917 = vmatpush.bf16.msra.mxu0 %v636
  %918 = vmatpush.bf16.msra.mxu0 %v620
  %919 = vmatpush.bf16.msra.mxu0 %v604
  %920 = vmatpush.bf16.msra.mxu0 %v588
  %921 = vmatpush.bf16.msra.mxu0 %v572
  %922 = vmatpush.bf16.msra.mxu0 %v556
  %923 = vmatpush.bf16.msra.mxu0 %v540
  %924 = vmatmul.bf16.gmra.mxu0 %v17
  %v925 = vpop.f32.mrf.mxu0
  %v926 = vadd.f32 0.0, %v925
  %v927 = vpop.f32.mrf.mxu0
  %928 = vdwg.mxu0
  %929 = vmatpush.bf16.msra.mxu0 %v653
  %930 = vmatpush.bf16.msra.mxu0 %v637
  %931 = vmatpush.bf16.msra.mxu0 %v621
  %932 = vmatpush.bf16.msra.mxu0 %v605
  %933 = vmatpush.bf16.msra.mxu0 %v589
  %934 = vmatpush.bf16.msra.mxu0 %v573
  %935 = vmatpush.bf16.msra.mxu0 %v557
  %936 = vmatpush.bf16.msra.mxu0 %v541
  %937 = vmatmul.bf16.gmra.mxu0 %v17
  %v938 = vpop.f32.mrf.mxu0
  %v939 = vadd.f32 0.0, %v938
  %v940 = vpop.f32.mrf.mxu0
  %941 = vdwg.mxu0
  %942 = vmatpush.bf16.msra.mxu0 %v654
  %943 = vmatpush.bf16.msra.mxu0 %v638
  %944 = vmatpush.bf16.msra.mxu0 %v622
  %945 = vmatpush.bf16.msra.mxu0 %v606
  %946 = vmatpush.bf16.msra.mxu0 %v590
  %947 = vmatpush.bf16.msra.mxu0 %v574
  %948 = vmatpush.bf16.msra.mxu0 %v558
  %949 = vmatpush.bf16.msra.mxu0 %v542
  %950 = vmatmul.bf16.gmra.mxu0 %v17
  %v951 = vpop.f32.mrf.mxu0
  %v952 = vadd.f32 0.0, %v951
  %v953 = vpop.f32.mrf.mxu0
  %954 = vdwg.mxu0
  %955 = vmatpush.bf16.msra.mxu0 %v655
  %956 = vmatpush.bf16.msra.mxu0 %v639
  %957 = vmatpush.bf16.msra.mxu0 %v623
  %958 = vmatpush.bf16.msra.mxu0 %v607
  %959 = vmatpush.bf16.msra.mxu0 %v591
  %960 = vmatpush.bf16.msra.mxu0 %v575
  %961 = vmatpush.bf16.msra.mxu0 %v559
  %962 = vmatpush.bf16.msra.mxu0 %v543
  %963 = vmatmul.bf16.gmra.mxu0 %v17
  %v964 = vpop.f32.mrf.mxu0
  %v965 = vadd.f32 0.0, %v964
  %v966 = vpop.f32.mrf.mxu0
  %967 = vdwg.mxu0
  %968 = vmatpush.bf16.msra.mxu0 %v656
  %969 = vmatpush.bf16.msra.mxu0 %v640
  %970 = vmatpush.bf16.msra.mxu0 %v624
  %971 = vmatpush.bf16.msra.mxu0 %v608
  %972 = vmatpush.bf16.msra.mxu0 %v592
  %973 = vmatpush.bf16.msra.mxu0 %v576
  %974 = vmatpush.bf16.msra.mxu0 %v560
  %975 = vmatpush.bf16.msra.mxu0 %v544
  %976 = vmatmul.bf16.gmra.mxu0 %v17
  %v977 = vpop.f32.mrf.mxu0
  %v978 = vadd.f32 0.0, %v977
  %v979 = vpop.f32.mrf.mxu0
  %980 = vdwg.mxu0
  %981 = vmatpush.bf16.msra.mxu0 %v657
  %982 = vmatpush.bf16.msra.mxu0 %v641
  %983 = vmatpush.bf16.msra.mxu0 %v625
  %984 = vmatpush.bf16.msra.mxu0 %v609
  %985 = vmatpush.bf16.msra.mxu0 %v593
  %986 = vmatpush.bf16.msra.mxu0 %v577
  %987 = vmatpush.bf16.msra.mxu0 %v561
  %988 = vmatpush.bf16.msra.mxu0 %v545
  %989 = vmatmul.bf16.gmra.mxu0 %v17
  %v990 = vpop.f32.mrf.mxu0
  %v991 = vadd.f32 0.0, %v990
  %v992 = vpop.f32.mrf.mxu0
  %993 = vdwg.mxu0
  %vm994 = vcmask 1041408
  %v995 = vsel %vm994, %v796, 0.0
  %v996 = vrot.slane %v995, 4
  %v997 = vadd.f32 %v995, %v996
  %v998 = vrot.slane %v997, 2
  %v999 = vadd.f32 %v997, %v998
  %v1000 = vrot.slane %v999, 1
  %v1001 = vadd.f32 %v999, %v1000
  %v1002 = vadd.f32 %v1001, 0.0
  %v1003 = vmul.f32 %v796, %v796
  %v1004 = vsel %vm994, %v1003, 0.0
  %v1005 = vrot.slane %v1004, 4
  %v1006 = vadd.f32 %v1004, %v1005
  %v1007 = vrot.slane %v1006, 2
  %v1008 = vadd.f32 %v1006, %v1007
  %v1009 = vrot.slane %v1008, 1
  %v1010 = vadd.f32 %v1008, %v1009
  %v1011 = vadd.f32 %v1010, 0.0
  %v1012 = vsel %vm994, %v809, 0.0
  %v1013 = vrot.slane %v1012, 4
  %v1014 = vadd.f32 %v1012, %v1013
  %v1015 = vrot.slane %v1014, 2
  %v1016 = vadd.f32 %v1014, %v1015
  %v1017 = vrot.slane %v1016, 1
  %v1018 = vadd.f32 %v1016, %v1017
  %v1019 = vadd.f32 %v1002, %v1018
  %v1020 = vmul.f32 %v809, %v809
  %v1021 = vsel %vm994, %v1020, 0.0
  %v1022 = vrot.slane %v1021, 4
  %v1023 = vadd.f32 %v1021, %v1022
  %v1024 = vrot.slane %v1023, 2
  %v1025 = vadd.f32 %v1023, %v1024
  %v1026 = vrot.slane %v1025, 1
  %v1027 = vadd.f32 %v1025, %v1026
  %v1028 = vadd.f32 %v1011, %v1027
  %v1029 = vsel %vm994, %v822, 0.0
  %v1030 = vrot.slane %v1029, 4
  %v1031 = vadd.f32 %v1029, %v1030
  %v1032 = vrot.slane %v1031, 2
  %v1033 = vadd.f32 %v1031, %v1032
  %v1034 = vrot.slane %v1033, 1
  %v1035 = vadd.f32 %v1033, %v1034
  %v1036 = vadd.f32 %v1019, %v1035
  %v1037 = vmul.f32 %v822, %v822
  %v1038 = vsel %vm994, %v1037, 0.0
  %v1039 = vrot.slane %v1038, 4
  %v1040 = vadd.f32 %v1038, %v1039
  %v1041 = vrot.slane %v1040, 2
  %v1042 = vadd.f32 %v1040, %v1041
  %v1043 = vrot.slane %v1042, 1
  %v1044 = vadd.f32 %v1042, %v1043
  %v1045 = vadd.f32 %v1028, %v1044
  %v1046 = vsel %vm994, %v835, 0.0
  %v1047 = vrot.slane %v1046, 4
  %v1048 = vadd.f32 %v1046, %v1047
  %v1049 = vrot.slane %v1048, 2
  %v1050 = vadd.f32 %v1048, %v1049
  %v1051 = vrot.slane %v1050, 1
  %v1052 = vadd.f32 %v1050, %v1051
  %v1053 = vadd.f32 %v1036, %v1052
  %v1054 = vmul.f32 %v835, %v835
  %v1055 = vsel %vm994, %v1054, 0.0
  %v1056 = vrot.slane %v1055, 4
  %v1057 = vadd.f32 %v1055, %v1056
  %v1058 = vrot.slane %v1057, 2
  %v1059 = vadd.f32 %v1057, %v1058
  %v1060 = vrot.slane %v1059, 1
  %v1061 = vadd.f32 %v1059, %v1060
  %v1062 = vadd.f32 %v1045, %v1061
  %v1063 = vsel %vm994, %v848, 0.0
  %v1064 = vrot.slane %v1063, 4
  %v1065 = vadd.f32 %v1063, %v1064
  %v1066 = vrot.slane %v1065, 2
  %v1067 = vadd.f32 %v1065, %v1066
  %v1068 = vrot.slane %v1067, 1
  %v1069 = vadd.f32 %v1067, %v1068
  %v1070 = vadd.f32 %v1053, %v1069
  %v1071 = vmul.f32 %v848, %v848
  %v1072 = vsel %vm994, %v1071, 0.0
  %v1073 = vrot.slane %v1072, 4
  %v1074 = vadd.f32 %v1072, %v1073
  %v1075 = vrot.slane %v1074, 2
  %v1076 = vadd.f32 %v1074, %v1075
  %v1077 = vrot.slane %v1076, 1
  %v1078 = vadd.f32 %v1076, %v1077
  %v1079 = vadd.f32 %v1062, %v1078
  %v1080 = vsel %vm994, %v861, 0.0
  %v1081 = vrot.slane %v1080, 4
  %v1082 = vadd.f32 %v1080, %v1081
  %v1083 = vrot.slane %v1082, 2
  %v1084 = vadd.f32 %v1082, %v1083
  %v1085 = vrot.slane %v1084, 1
  %v1086 = vadd.f32 %v1084, %v1085
  %v1087 = vadd.f32 %v1070, %v1086
  %v1088 = vmul.f32 %v861, %v861
  %v1089 = vsel %vm994, %v1088, 0.0
  %v1090 = vrot.slane %v1089, 4
  %v1091 = vadd.f32 %v1089, %v1090
  %v1092 = vrot.slane %v1091, 2
  %v1093 = vadd.f32 %v1091, %v1092
  %v1094 = vrot.slane %v1093, 1
  %v1095 = vadd.f32 %v1093, %v1094
  %v1096 = vadd.f32 %v1079, %v1095
  %v1097 = vsel %vm994, %v874, 0.0
  %v1098 = vrot.slane %v1097, 4
  %v1099 = vadd.f32 %v1097, %v1098
  %v1100 = vrot.slane %v1099, 2
  %v1101 = vadd.f32 %v1099, %v1100
  %v1102 = vrot.slane %v1101, 1
  %v1103 = vadd.f32 %v1101, %v1102
  %v1104 = vadd.f32 %v1087, %v1103
  %v1105 = vmul.f32 %v874, %v874
  %v1106 = vsel %vm994, %v1105, 0.0
  %v1107 = vrot.slane %v1106, 4
  %v1108 = vadd.f32 %v1106, %v1107
  %v1109 = vrot.slane %v1108, 2
  %v1110 = vadd.f32 %v1108, %v1109
  %v1111 = vrot.slane %v1110, 1
  %v1112 = vadd.f32 %v1110, %v1111
  %v1113 = vadd.f32 %v1096, %v1112
  %v1114 = vsel %vm994, %v887, 0.0
  %v1115 = vrot.slane %v1114, 4
  %v1116 = vadd.f32 %v1114, %v1115
  %v1117 = vrot.slane %v1116, 2
  %v1118 = vadd.f32 %v1116, %v1117
  %v1119 = vrot.slane %v1118, 1
  %v1120 = vadd.f32 %v1118, %v1119
  %v1121 = vadd.f32 %v1104, %v1120
  %v1122 = vmul.f32 %v887, %v887
  %v1123 = vsel %vm994, %v1122, 0.0
  %v1124 = vrot.slane %v1123, 4
  %v1125 = vadd.f32 %v1123, %v1124
  %v1126 = vrot.slane %v1125, 2
  %v1127 = vadd.f32 %v1125, %v1126
  %v1128 = vrot.slane %v1127, 1
  %v1129 = vadd.f32 %v1127, %v1128
  %v1130 = vadd.f32 %v1113, %v1129
  %v1131 = vsel %vm994, %v900, 0.0
  %v1132 = vrot.slane %v1131, 4
  %v1133 = vadd.f32 %v1131, %v1132
  %v1134 = vrot.slane %v1133, 2
  %v1135 = vadd.f32 %v1133, %v1134
  %v1136 = vrot.slane %v1135, 1
  %v1137 = vadd.f32 %v1135, %v1136
  %v1138 = vadd.f32 %v1121, %v1137
  %v1139 = vmul.f32 %v900, %v900
  %v1140 = vsel %vm994, %v1139, 0.0
  %v1141 = vrot.slane %v1140, 4
  %v1142 = vadd.f32 %v1140, %v1141
  %v1143 = vrot.slane %v1142, 2
  %v1144 = vadd.f32 %v1142, %v1143
  %v1145 = vrot.slane %v1144, 1
  %v1146 = vadd.f32 %v1144, %v1145
  %v1147 = vadd.f32 %v1130, %v1146
  %v1148 = vsel %vm994, %v913, 0.0
  %v1149 = vrot.slane %v1148, 4
  %v1150 = vadd.f32 %v1148, %v1149
  %v1151 = vrot.slane %v1150, 2
  %v1152 = vadd.f32 %v1150, %v1151
  %v1153 = vrot.slane %v1152, 1
  %v1154 = vadd.f32 %v1152, %v1153
  %v1155 = vadd.f32 %v1138, %v1154
  %v1156 = vmul.f32 %v913, %v913
  %v1157 = vsel %vm994, %v1156, 0.0
  %v1158 = vrot.slane %v1157, 4
  %v1159 = vadd.f32 %v1157, %v1158
  %v1160 = vrot.slane %v1159, 2
  %v1161 = vadd.f32 %v1159, %v1160
  %v1162 = vrot.slane %v1161, 1
  %v1163 = vadd.f32 %v1161, %v1162
  %v1164 = vadd.f32 %v1147, %v1163
  %v1165 = vsel %vm994, %v926, 0.0
  %v1166 = vrot.slane %v1165, 4
  %v1167 = vadd.f32 %v1165, %v1166
  %v1168 = vrot.slane %v1167, 2
  %v1169 = vadd.f32 %v1167, %v1168
  %v1170 = vrot.slane %v1169, 1
  %v1171 = vadd.f32 %v1169, %v1170
  %v1172 = vadd.f32 %v1155, %v1171
  %v1173 = vmul.f32 %v926, %v926
  %v1174 = vsel %vm994, %v1173, 0.0
  %v1175 = vrot.slane %v1174, 4
  %v1176 = vadd.f32 %v1174, %v1175
  %v1177 = vrot.slane %v1176, 2
  %v1178 = vadd.f32 %v1176, %v1177
  %v1179 = vrot.slane %v1178, 1
  %v1180 = vadd.f32 %v1178, %v1179
  %v1181 = vadd.f32 %v1164, %v1180
  %v1182 = vsel %vm994, %v939, 0.0
  %v1183 = vrot.slane %v1182, 4
  %v1184 = vadd.f32 %v1182, %v1183
  %v1185 = vrot.slane %v1184, 2
  %v1186 = vadd.f32 %v1184, %v1185
  %v1187 = vrot.slane %v1186, 1
  %v1188 = vadd.f32 %v1186, %v1187
  %v1189 = vadd.f32 %v1172, %v1188
  %v1190 = vmul.f32 %v939, %v939
  %v1191 = vsel %vm994, %v1190, 0.0
  %v1192 = vrot.slane %v1191, 4
  %v1193 = vadd.f32 %v1191, %v1192
  %v1194 = vrot.slane %v1193, 2
  %v1195 = vadd.f32 %v1193, %v1194
  %v1196 = vrot.slane %v1195, 1
  %v1197 = vadd.f32 %v1195, %v1196
  %v1198 = vadd.f32 %v1181, %v1197
  %v1199 = vsel %vm994, %v952, 0.0
  %v1200 = vrot.slane %v1199, 4
  %v1201 = vadd.f32 %v1199, %v1200
  %v1202 = vrot.slane %v1201, 2
  %v1203 = vadd.f32 %v1201, %v1202
  %v1204 = vrot.slane %v1203, 1
  %v1205 = vadd.f32 %v1203, %v1204
  %v1206 = vadd.f32 %v1189, %v1205
  %v1207 = vmul.f32 %v952, %v952
  %v1208 = vsel %vm994, %v1207, 0.0
  %v1209 = vrot.slane %v1208, 4
  %v1210 = vadd.f32 %v1208, %v1209
  %v1211 = vrot.slane %v1210, 2
  %v1212 = vadd.f32 %v1210, %v1211
  %v1213 = vrot.slane %v1212, 1
  %v1214 = vadd.f32 %v1212, %v1213
  %v1215 = vadd.f32 %v1198, %v1214
  %v1216 = vsel %vm994, %v965, 0.0
  %v1217 = vrot.slane %v1216, 4
  %v1218 = vadd.f32 %v1216, %v1217
  %v1219 = vrot.slane %v1218, 2
  %v1220 = vadd.f32 %v1218, %v1219
  %v1221 = vrot.slane %v1220, 1
  %v1222 = vadd.f32 %v1220, %v1221
  %v1223 = vadd.f32 %v1206, %v1222
  %v1224 = vmul.f32 %v965, %v965
  %v1225 = vsel %vm994, %v1224, 0.0
  %v1226 = vrot.slane %v1225, 4
  %v1227 = vadd.f32 %v1225, %v1226
  %v1228 = vrot.slane %v1227, 2
  %v1229 = vadd.f32 %v1227, %v1228
  %v1230 = vrot.slane %v1229, 1
  %v1231 = vadd.f32 %v1229, %v1230
  %v1232 = vadd.f32 %v1215, %v1231
  %v1233 = vsel %vm994, %v978, 0.0
  %v1234 = vrot.slane %v1233, 4
  %v1235 = vadd.f32 %v1233, %v1234
  %v1236 = vrot.slane %v1235, 2
  %v1237 = vadd.f32 %v1235, %v1236
  %v1238 = vrot.slane %v1237, 1
  %v1239 = vadd.f32 %v1237, %v1238
  %v1240 = vadd.f32 %v1223, %v1239
  %v1241 = vmul.f32 %v978, %v978
  %v1242 = vsel %vm994, %v1241, 0.0
  %v1243 = vrot.slane %v1242, 4
  %v1244 = vadd.f32 %v1242, %v1243
  %v1245 = vrot.slane %v1244, 2
  %v1246 = vadd.f32 %v1244, %v1245
  %v1247 = vrot.slane %v1246, 1
  %v1248 = vadd.f32 %v1246, %v1247
  %v1249 = vadd.f32 %v1232, %v1248
  %v1250 = vsel %vm994, %v991, 0.0
  %v1251 = vrot.slane %v1250, 4
  %v1252 = vadd.f32 %v1250, %v1251
  %v1253 = vrot.slane %v1252, 2
  %v1254 = vadd.f32 %v1252, %v1253
  %v1255 = vrot.slane %v1254, 1
  %v1256 = vadd.f32 %v1254, %v1255
  %v1257 = vadd.f32 %v1240, %v1256
  %v1258 = vmul.f32 %v991, %v991
  %v1259 = vsel %vm994, %v1258, 0.0
  %v1260 = vrot.slane %v1259, 4
  %v1261 = vadd.f32 %v1259, %v1260
  %v1262 = vrot.slane %v1261, 2
  %v1263 = vadd.f32 %v1261, %v1262
  %v1264 = vrot.slane %v1263, 1
  %v1265 = vadd.f32 %v1263, %v1264
  %v1266 = vadd.f32 %v1249, %v1265
  %v1267 = vmul.f32 %v1257, 0.03125
  %v1268 = vmul.f32 %v1266, 0.03125
  %v1269 = vmul.f32 %v1267, %v1267
  %v1270 = vsub.f32 %v1268, %v1269
  %v1271 = vmax.f32 %v1270, 0.0
  %v1272 = vld [vmem:[%s2] sm:$0x1]
  %v1273 = vadd.f32 %v1271, 1e-05
  %v1274 = vrsqrt.pop %v1273
  %v1275 = vmul.f32 %v1274, %v1273
  %v1276 = vmul.f32 %v1275, %v1274
  %v1277 = vmul.f32 0.5, %v1276
  %v1278 = vsub.f32 1.5, %v1277
  %v1279 = vmul.f32 %v1274, %v1278
  %vm1280 = vweird.f32 %v1273
  %vm1281 = vweird.f32 %v1274
  %vm1282 = vmor %vm1280, %vm1281
  %v1283 = vsel %vm1282, %v1274, %v1279
  %v1284 = vmul.f32 %v1272, %v1283
  %v1285 = vld [vmem:[%s3] sm:$0x1]
  %v1286 = vmul.f32 %v1267, %v1284
  %v1287 = vsub.f32 %v1285, %v1286
  %v1289 = vperm.slane %v1284, 0
  %v1291 = vmul.f32 %v796, %v1289
  %v1293 = vperm.slane %v1287, 0
  %v1295 = vadd.f32 %v1291, %v1293
  %v1296 = vmax.f32 %v1295, 0.0
  %v1297 = vpack.c.bf16 %v1296, %v1296
  %1298 = vst [vmem:[%s4] sm:$0x1] %v1297
  %v1299 = vmul.f32 %v809, %v1289
  %v1300 = vadd.f32 %v1299, %v1293
  %v1301 = vmax.f32 %v1300, 0.0
  %v1302 = vpack.c.bf16 %v1301, %v1301
  %1303 = vst [vmem:[%s4 + $0x1] sm:$0x1] %v1302
  %v1304 = vmul.f32 %v822, %v1289
  %v1305 = vadd.f32 %v1304, %v1293
  %v1306 = vmax.f32 %v1305, 0.0
  %v1307 = vpack.c.bf16 %v1306, %v1306
  %1308 = vst [vmem:[%s4 + $0x2] sm:$0x1] %v1307
  %v1309 = vmul.f32 %v835, %v1289
  %v1310 = vadd.f32 %v1309, %v1293
  %v1311 = vmax.f32 %v1310, 0.0
  %v1312 = vpack.c.bf16 %v1311, %v1311
  %1313 = vst [vmem:[%s4 + $0x3] sm:$0x1] %v1312
  %v1314 = vmul.f32 %v848, %v1289
  %v1315 = vadd.f32 %v1314, %v1293
  %v1316 = vmax.f32 %v1315, 0.0
  %v1317 = vpack.c.bf16 %v1316, %v1316
  %1318 = vst [vmem:[%s4 + $0x4] sm:$0x1] %v1317
  %v1319 = vmul.f32 %v861, %v1289
  %v1320 = vadd.f32 %v1319, %v1293
  %v1321 = vmax.f32 %v1320, 0.0
  %v1322 = vpack.c.bf16 %v1321, %v1321
  %1323 = vst [vmem:[%s4 + $0x5] sm:$0x1] %v1322
  %v1324 = vmul.f32 %v874, %v1289
  %v1325 = vadd.f32 %v1324, %v1293
  %v1326 = vmax.f32 %v1325, 0.0
  %v1327 = vpack.c.bf16 %v1326, %v1326
  %1328 = vst [vmem:[%s4 + $0x6] sm:$0x1] %v1327
  %v1329 = vmul.f32 %v887, %v1289
  %v1330 = vadd.f32 %v1329, %v1293
  %v1331 = vmax.f32 %v1330, 0.0
  %v1332 = vpack.c.bf16 %v1331, %v1331
  %1333 = vst [vmem:[%s4 + $0x7] sm:$0x1] %v1332
  %v1334 = vmul.f32 %v900, %v1289
  %v1335 = vadd.f32 %v1334, %v1293
  %v1336 = vmax.f32 %v1335, 0.0
  %v1337 = vpack.c.bf16 %v1336, %v1336
  %1338 = vst [vmem:[%s4 + $0x8] sm:$0x1] %v1337
  %v1339 = vmul.f32 %v913, %v1289
  %v1340 = vadd.f32 %v1339, %v1293
  %v1341 = vmax.f32 %v1340, 0.0
  %v1342 = vpack.c.bf16 %v1341, %v1341
  %1343 = vst [vmem:[%s4 + $0x9] sm:$0x1] %v1342
  %v1344 = vmul.f32 %v926, %v1289
  %v1345 = vadd.f32 %v1344, %v1293
  %v1346 = vmax.f32 %v1345, 0.0
  %v1347 = vpack.c.bf16 %v1346, %v1346
  %1348 = vst [vmem:[%s4 + $0xa] sm:$0x1] %v1347
  %v1349 = vmul.f32 %v939, %v1289
  %v1350 = vadd.f32 %v1349, %v1293
  %v1351 = vmax.f32 %v1350, 0.0
  %v1352 = vpack.c.bf16 %v1351, %v1351
  %1353 = vst [vmem:[%s4 + $0xb] sm:$0x1] %v1352
  %v1354 = vmul.f32 %v952, %v1289
  %v1355 = vadd.f32 %v1354, %v1293
  %v1356 = vmax.f32 %v1355, 0.0
  %v1357 = vpack.c.bf16 %v1356, %v1356
  %1358 = vst [vmem:[%s4 + $0xc] sm:$0x1] %v1357
  %v1359 = vmul.f32 %v965, %v1289
  %v1360 = vadd.f32 %v1359, %v1293
  %v1361 = vmax.f32 %v1360, 0.0
  %v1362 = vpack.c.bf16 %v1361, %v1361
  %1363 = vst [vmem:[%s4 + $0xd] sm:$0x1] %v1362
  %v1364 = vmul.f32 %v978, %v1289
  %v1365 = vadd.f32 %v1364, %v1293
  %v1366 = vmax.f32 %v1365, 0.0
  %v1367 = vpack.c.bf16 %v1366, %v1366
  %1368 = vst [vmem:[%s4 + $0xe] sm:$0x1] %v1367
  %v1369 = vmul.f32 %v991, %v1289
  %v1370 = vadd.f32 %v1369, %v1293
  %v1371 = vmax.f32 %v1370, 0.0
  %v1372 = vpack.c.bf16 %v1371, %v1371
  %1373 = vst [vmem:[%s4 + $0xf] sm:$0x1] %v1372
  // Predicated region
  $region18: #{_lambda_.14} parent=0 // pred_check
    _
  $region19: #{_lambda_.14} parent=0 // pred_check_branch
    %1375 = sbr.rel (0) target = $region21
  $region20: #{_lambda_.14} parent=0 // pred_region
    _
  $region21: #{_lambda_.14} parent=0 // pred_fallthru
    _
  // Predicated region
  $region22: #{_lambda_.14} parent=0 // pred_check
    _
  $region23: #{_lambda_.14} parent=0 // pred_check_branch
    %1377 = sbr.rel (0) target = $region25
  $region24: #{_lambda_.14} parent=0 // pred_region
    _
  $region25: #{_lambda_.14} parent=0 // pred_fallthru
    _

// kernel: _lambda_.17
$region0: #{_lambda_.17}
  #allocation0 [shape = 'u32[]', space=smem, size = 0x4, offset = 0x4, fixed_abs, tag = 'smem constant byte address 0x4 - core index']
  #allocation1 [shape = 'u32[72,128]{1,0:T(1,128)}', space=vmem, size = 0x9000, scoped, tag = 'internal scratch']
  %s0 = inlined_call_operand.vmem [shape: bf16[4,128,128], index: 0, kind: input, shape index: {}]
  %s1 = inlined_call_operand.vmem [shape: bf16[4,128,128], index: 1, kind: input, shape index: {}]
  %s2 = inlined_call_operand.vmem [shape: bf16[4,128,128], index: 2, kind: output, shape index: {}]
  %s3 = sld [smem:[#allocation0]]
  $region41: #{_lambda_.17} parent=0
    _
  %s5 = ssub.s32 1, %s3
  %s6 = scalar_select 0, %s5, %s3
  loop: start=0, step=1, limit=6
  $region2: #{_lambda_.17} parent=0 // loop_pre_header
    _
  $region3: #{_lambda_.17} parent=0 // loop_header
    %s8 = sphi 0, %s12
    %p9 = scmp.ge.s32.totalorder %s8, 6
    %s15 = sphi 0, %s27
    %s16 = sphi 0, %s23
    %s17 = sphi 0, %s15
    %s18 = sphi 0, %s16
    %s19 = sphi 0, %s17
    %s20 = sphi 0, %s18
    %s32 = sphi 0, %s34
    %s35 = sphi 0, %s32
    %s36 = sphi 0, %s35
    %s52 = sphi 0, %s36
    %s58 = sphi 0, %s60
    %s61 = sphi 0, %s58
    %s62 = sphi 0, %s61
    %s78 = sphi 0, %s62
    %s86 = sphi 0, %s88
    %s89 = sphi 0, %s86
    %s90 = sphi 0, %s89
    %s106 = sphi 0, %s90
  $region4: #{_lambda_.17} parent=0 // loop_header_branch
    %11 = sbr.rel (%p9) target = $region8
  $region5: #{_lambda_.17} parent=0 // loop_body
    %s13 = ssub.s32 %s8, 1
    %s14 = ssub.s32 %s8, 2
    %s21 = sadd.s32 1, %s16
    %p22 = scmp.ge.s32.totalorder %s21, 1
    %s23 = scalar_select %p22, 0, %s21
    %s24 = sadd.s32 1, %s15
    %s25 = scalar_select %p22, %s24, %s15
    %p26 = scmp.ge.s32.totalorder %s25, 4
    %s27 = scalar_select %p26, 0, %s25
    %s28 = ssub.s32 %s15, %s27
    %s29 = ssub.s32 %s16, %s23
    %s30 = sor.u32 %s28, %s29
    %p31 = scmp.eq.s32.totalorder %s30, 0
    %s33 = sadd.s32 %s32, 1
    %s34 = scalar_select %p31, %s32, %s33
    %p37 = pneg %p31
    %p38 = scmp.eq.s32.totalorder %s8, 3
    %p39 = por %p37, %p38
    %p40 = scmp.ne.s32.totalorder %s32, %s35
    %p41 = scmp.eq.s32.totalorder %s8, 0
    %p42 = por %p40, %p41
    %p43 = scmp.ne.s32.totalorder %s32, %s35
    %p44 = scmp.eq.s32.totalorder %s13, 3
    %p45 = por %p43, %p44
    %p46 = scmp.ne.s32.totalorder %s35, %s36
    %p47 = scmp.eq.s32.totalorder %s13, 0
    %p48 = por %p46, %p47
    %p49 = scmp.ne.s32.totalorder %s35, %s36
    %p50 = scmp.eq.s32.totalorder %s14, 3
    %p51 = por %p49, %p50
    %p53 = scmp.ne.s32.totalorder %s36, %s52
    %p54 = scmp.eq.s32.totalorder %s14, 0
    %p55 = por %p53, %p54
    %s56 = ssub.s32 %s15, %s27
    %p57 = scmp.eq.s32.totalorder %s56, 0
    %s59 = sadd.s32 %s58, 1
    %s60 = scalar_select %p57, %s58, %s59
    %p63 = pneg %p57
    %p64 = scmp.eq.s32.totalorder %s8, 3
    %p65 = por %p63, %p64
    %p66 = scmp.ne.s32.totalorder %s58, %s61
    %p67 = scmp.eq.s32.totalorder %s8, 0
    %p68 = por %p66, %p67
    %p69 = scmp.ne.s32.totalorder %s58, %s61
    %p70 = scmp.eq.s32.totalorder %s13, 3
    %p71 = por %p69, %p70
    %p72 = scmp.ne.s32.totalorder %s61, %s62
    %p73 = scmp.eq.s32.totalorder %s13, 0
    %p74 = por %p72, %p73
    %p75 = scmp.ne.s32.totalorder %s61, %s62
    %p76 = scmp.eq.s32.totalorder %s14, 3
    %p77 = por %p75, %p76
    %p79 = scmp.ne.s32.totalorder %s62, %s78
    %p80 = scmp.eq.s32.totalorder %s14, 0
    %p81 = por %p79, %p80
    %s82 = ssub.s32 %s15, %s27
    %s83 = ssub.s32 %s16, %s23
    %s84 = sor.u32 %s82, %s83
    %p85 = scmp.eq.s32.totalorder %s84, 0
    %s87 = sadd.s32 %s86, 1
    %s88 = scalar_select %p85, %s86, %s87
    %p91 = pneg %p85
    %p92 = scmp.eq.s32.totalorder %s8, 3
    %p93 = por %p91, %p92
    %p94 = scmp.ne.s32.totalorder %s86, %s89
    %p95 = scmp.eq.s32.totalorder %s8, 0
    %p96 = por %p94, %p95
    %p97 = scmp.ne.s32.totalorder %s86, %s89
    %p98 = scmp.eq.s32.totalorder %s13, 3
    %p99 = por %p97, %p98
    %p100 = scmp.ne.s32.totalorder %s89, %s90
    %p101 = scmp.eq.s32.totalorder %s13, 0
    %p102 = por %p100, %p101
    %p103 = scmp.ne.s32.totalorder %s89, %s90
    %p104 = scmp.eq.s32.totalorder %s14, 3
    %p105 = por %p103, %p104
    %p107 = scmp.ne.s32.totalorder %s90, %s106
    %p108 = scmp.eq.s32.totalorder %s14, 0
    %p109 = por %p107, %p108
    %p110 = scmp.le.s32.totalorder 1, %s8
    %p111 = scmp.lt.s32.totalorder %s8, 5
    %p112 = pnand %p110, %p111
    %p113 = pneg %p112
    // Predicated region
    $region9: #{_lambda_.17} parent=5 // pred_check
      _
    $region10: #{_lambda_.17} parent=5 // pred_check_branch
      %115 = sbr.rel (%p112) target = $region12
    $region11: #{_lambda_.17} parent=5 // pred_region
      %s116 = ssub.s32 %s8, 1
    $region12: #{_lambda_.17} parent=5 // pred_fallthru
      _
    %p117 = scmp.lt.s32.totalorder %s8, 4
    // Predicated region
    $region13: #{_lambda_.17} parent=5 // pred_check
      %p118 = pneg %p117
    $region14: #{_lambda_.17} parent=5 // pred_check_branch
      %120 = sbr.rel (%p118) target = $region16
    $region15: #{_lambda_.17} parent=5 // pred_region
      // Predicated region
      $region17: #{_lambda_.17} parent=15 // pred_check
        %p121 = pneg %p42
      $region18: #{_lambda_.17} parent=15 // pred_check_branch
        %123 = sbr.rel (%p121) target = $region20
      $region19: #{_lambda_.17} parent=15 // pred_region
        %s124 = smul.u32 16, %s16
        %p125 = scmp.lt.s32.totalorder %s15, 3
        %s126 = scalar_select %p125, %s15, 3
        %p127 = scmp.lt.s32.totalorder %s124, 15
        %s128 = scalar_select %p127, %s124, 15
        %s129 = smul.addr %s126, 16
        %s130 = sadd.s32 %s128, %s129
        %s131 = smul.addr %s130, 4
        %s132 = scalar_lea.vmem %s0, %s131
        %s133 = smul.u32 16, %s16
      $region20: #{_lambda_.17} parent=15 // pred_fallthru
        _
      // Predicated region
      $region21: #{_lambda_.17} parent=15 // pred_check
        %p134 = pneg %p68
      $region22: #{_lambda_.17} parent=15 // pred_check_branch
        %136 = sbr.rel (%p134) target = $region24
      $region23: #{_lambda_.17} parent=15 // pred_region
        %p137 = scmp.lt.s32.totalorder %s15, 3
        %s138 = scalar_select %p137, %s15, 3
        %s139 = smul.addr %s138, 16
        %s140 = smul.addr %s139, 4
        %s141 = scalar_lea.vmem %s1, %s140
      $region24: #{_lambda_.17} parent=15 // pred_fallthru
        _
    $region16: #{_lambda_.17} parent=5 // pred_fallthru
      _
    %p142 = scmp.le.s32.totalorder 1, %s8
    %p143 = scmp.lt.s32.totalorder %s8, 5
    %p144 = pnand %p142, %p143
    %p145 = pneg %p144
    // Predicated region
    $region25: #{_lambda_.17} parent=5 // pred_check
      _
    $region26: #{_lambda_.17} parent=5 // pred_check_branch
      %147 = sbr.rel (%p144) target = $region28
    $region27: #{_lambda_.17} parent=5 // pred_region
      %s148 = ssub.s32 %s8, 1
      %s149 = smul.u32 16, %s18
      %p150 = scmp.lt.s32.totalorder %s17, 3
      %s151 = scalar_select %p150, %s17, 3
      %p152 = scmp.lt.s32.totalorder %s149, 15
      %s153 = scalar_select %p152, %s149, 15
      %s154 = smul.addr %s151, 16
      %s155 = sadd.s32 %s153, %s154
      %s156 = smul.addr %s155, 4
      %s157 = scalar_lea.vmem %s0, %s156
      %p158 = pneg %p48
      %p159 = pneg %p45
      %p160 = scmp.lt.s32.totalorder %s17, 3
      %s161 = scalar_select %p160, %s17, 3
      %s162 = smul.addr %s161, 16
      %s163 = smul.addr %s162, 4
      %s164 = scalar_lea.vmem %s1, %s163
      %p165 = pneg %p74
      %p166 = pneg %p71
      %p167 = pneg %p102
      %p168 = pneg %p99
      %s169 = smul.u32 16, %s18
      %p170 = scmp.lt.s32.totalorder %s17, 3
      %s171 = scalar_select %p170, %s17, 3
      %p172 = scmp.lt.s32.totalorder %s169, 15
      %s173 = scalar_select %p172, %s169, 15
      %s174 = smul.addr %s171, 16
      %s175 = sadd.s32 %s173, %s174
      %s176 = smul.addr %s175, 4
      %s177 = scalar_lea.vmem %s2, %s176
      %s178 = smul.u32 16, %s18
      %p179 = scmp.lt.s32.totalorder %s17, 3
      %s180 = scalar_select %p179, %s17, 3
      %p181 = scmp.lt.s32.totalorder %s178, 15
      %s182 = scalar_select %p181, %s178, 15
      %s183 = smul.addr %s180, 16
      %s184 = sadd.s32 %s182, %s183
      %s185 = smul.addr %s184, 4
      %s186 = scalar_lea.vmem %s0, %s185
      %s187 = smul.u32 16, %s18
      %p188 = scmp.lt.s32.totalorder %s17, 3
      %s189 = scalar_select %p188, %s17, 3
      %s190 = smul.addr %s189, 16
      %s191 = smul.addr %s190, 4
      %s192 = scalar_lea.vmem %s1, %s191
      %s193 = smul.u32 16, %s18
      %p194 = scmp.lt.s32.totalorder %s17, 3
      %s195 = scalar_select %p194, %s17, 3
      %p196 = scmp.lt.s32.totalorder %s193, 15
      %s197 = scalar_select %p196, %s193, 15
      %s198 = smul.addr %s195, 16
      %s199 = sadd.s32 %s197, %s198
      %s200 = smul.addr %s199, 4
      %s201 = scalar_lea.vmem %s2, %s200
      %s202 = smul.u32 16, %s18
      %v203 = vld [vmem:[%s186] sm:$0xf]
      %v204 = vld [vmem:[%s186 + $0x4] sm:$0xf]
      %v205 = vld [vmem:[%s186 + $0x8] sm:$0xf]
      %v206 = vld [vmem:[%s186 + $0xc] sm:$0xf]
      %v207 = vld [vmem:[%s186 + $0x10] sm:$0xf]
      %v208 = vld [vmem:[%s186 + $0x14] sm:$0xf]
      %v209 = vld [vmem:[%s186 + $0x18] sm:$0xf]
      %v210 = vld [vmem:[%s186 + $0x1c] sm:$0xf]
      %v211 = vld [vmem:[%s186 + $0x20] sm:$0xf]
      %v212 = vld [vmem:[%s186 + $0x24] sm:$0xf]
      %v213 = vld [vmem:[%s186 + $0x28] sm:$0xf]
      %v214 = vld [vmem:[%s186 + $0x2c] sm:$0xf]
      %v215 = vld [vmem:[%s186 + $0x30] sm:$0xf]
      %v216 = vld [vmem:[%s186 + $0x34] sm:$0xf]
      %v217 = vld [vmem:[%s186 + $0x38] sm:$0xf]
      %v218 = vld [vmem:[%s186 + $0x3c] sm:$0xf]
      %v219 = vld [vmem:[%s192] sm:$0xf]
      %v220 = vld [vmem:[%s192 + $0x4] sm:$0xf]
      %v221 = vld [vmem:[%s192 + $0x8] sm:$0xf]
      %v222 = vld [vmem:[%s192 + $0xc] sm:$0xf]
      %v223 = vld [vmem:[%s192 + $0x10] sm:$0xf]
      %v224 = vld [vmem:[%s192 + $0x14] sm:$0xf]
      %v225 = vld [vmem:[%s192 + $0x18] sm:$0xf]
      %v226 = vld [vmem:[%s192 + $0x1c] sm:$0xf]
      %v227 = vld [vmem:[%s192 + $0x20] sm:$0xf]
      %v228 = vld [vmem:[%s192 + $0x24] sm:$0xf]
      %v229 = vld [vmem:[%s192 + $0x28] sm:$0xf]
      %v230 = vld [vmem:[%s192 + $0x2c] sm:$0xf]
      %v231 = vld [vmem:[%s192 + $0x30] sm:$0xf]
      %v232 = vld [vmem:[%s192 + $0x34] sm:$0xf]
      %v233 = vld [vmem:[%s192 + $0x38] sm:$0xf]
      %v234 = vld [vmem:[%s192 + $0x3c] sm:$0xf]
      %v251 = vunpack.c.l.b16 %v203
      %v252 = vunpack.c.l.b16 %v204
      %v253 = vunpack.c.l.b16 %v205
      %v254 = vunpack.c.l.b16 %v206
      %v255 = vunpack.c.l.b16 %v207
      %v256 = vunpack.c.l.b16 %v208
      %v257 = vunpack.c.l.b16 %v209
      %v258 = vunpack.c.l.b16 %v210
      %v259 = vunpack.c.l.b16 %v211
      %v260 = vunpack.c.l.b16 %v212
      %v261 = vunpack.c.l.b16 %v213
      %v262 = vunpack.c.l.b16 %v214
      %v263 = vunpack.c.l.b16 %v215
      %v264 = vunpack.c.l.b16 %v216
      %v265 = vunpack.c.l.b16 %v217
      %v266 = vunpack.c.l.b16 %v218
      %v267 = vpack.c.b16 %v252, %v251
      %v268 = vpack.c.b16 %v254, %v253
      %v269 = vpack.c.b16 %v256, %v255
      %v270 = vpack.c.b16 %v258, %v257
      %v271 = vpack.c.b16 %v260, %v259
      %v272 = vpack.c.b16 %v262, %v261
      %v273 = vpack.c.b16 %v264, %v263
      %v274 = vpack.c.b16 %v266, %v265
      %v299 = vunpack.c.l.b16 %v219
      %v300 = vunpack.c.l.b16 %v220
      %v301 = vunpack.c.l.b16 %v221
      %v302 = vunpack.c.l.b16 %v222
      %v303 = vunpack.c.l.b16 %v223
      %v304 = vunpack.c.l.b16 %v224
      %v305 = vunpack.c.l.b16 %v225
      %v306 = vunpack.c.l.b16 %v226
      %v307 = vunpack.c.l.b16 %v227
      %v308 = vunpack.c.l.b16 %v228
      %v309 = vunpack.c.l.b16 %v229
      %v310 = vunpack.c.l.b16 %v230
      %v311 = vunpack.c.l.b16 %v231
      %v312 = vunpack.c.l.b16 %v232
      %v313 = vunpack.c.l.b16 %v233
      %v314 = vunpack.c.l.b16 %v234
      %v315 = vpack.c.b16 %v300, %v299
      %v316 = vpack.c.b16 %v302, %v301
      %v317 = vpack.c.b16 %v304, %v303
      %v318 = vpack.c.b16 %v306, %v305
      %v319 = vpack.c.b16 %v308, %v307
      %v320 = vpack.c.b16 %v310, %v309
      %v321 = vpack.c.b16 %v312, %v311
      %v322 = vpack.c.b16 %v314, %v313
      %331 = vmatpush.bf16.msra.mxu0 %v322
      %332 = vmatpush.bf16.msra.mxu0 %v321
      %333 = vmatpush.bf16.msra.mxu0 %v320
      %334 = vmatpush.bf16.msra.mxu0 %v319
      %335 = vmatpush.bf16.msra.mxu0 %v318
      %336 = vmatpush.bf16.msra.mxu0 %v317
      %337 = vmatpush.bf16.msra.mxu0 %v316
      %338 = vmatpush.bf16.msra.mxu0 %v315
      %339 = vmatmul.bf16.gmra.mxu0 %v267
      %v340 = vpop.f32.mrf.mxu0
      %v341 = vadd.f32 0.0, %v340
      %v342 = vpop.f32.mrf.mxu0
      %v343 = vadd.f32 0.0, %v342
      %344 = vmatmul.bf16.gmra.mxu0 %v268
      %v345 = vpop.f32.mrf.mxu0
      %v346 = vadd.f32 0.0, %v345
      %v347 = vpop.f32.mrf.mxu0
      %v348 = vadd.f32 0.0, %v347
      %349 = vmatmul.bf16.gmra.mxu0 %v269
      %v350 = vpop.f32.mrf.mxu0
      %v351 = vadd.f32 0.0, %v350
      %v352 = vpop.f32.mrf.mxu0
      %v353 = vadd.f32 0.0, %v352
      %354 = vmatmul.bf16.gmra.mxu0 %v270
      %v355 = vpop.f32.mrf.mxu0
      %v356 = vadd.f32 0.0, %v355
      %v357 = vpop.f32.mrf.mxu0
      %v358 = vadd.f32 0.0, %v357
      %359 = vmatmul.bf16.gmra.mxu0 %v271
      %v360 = vpop.f32.mrf.mxu0
      %v361 = vadd.f32 0.0, %v360
      %v362 = vpop.f32.mrf.mxu0
      %v363 = vadd.f32 0.0, %v362
      %364 = vmatmul.bf16.gmra.mxu0 %v272
      %v365 = vpop.f32.mrf.mxu0
      %v366 = vadd.f32 0.0, %v365
      %v367 = vpop.f32.mrf.mxu0
      %v368 = vadd.f32 0.0, %v367
      %369 = vmatmul.bf16.gmra.mxu0 %v273
      %v370 = vpop.f32.mrf.mxu0
      %v371 = vadd.f32 0.0, %v370
      %v372 = vpop.f32.mrf.mxu0
      %v373 = vadd.f32 0.0, %v372
      %374 = vmatmul.bf16.gmra.mxu0 %v274
      %v375 = vpop.f32.mrf.mxu0
      %v376 = vadd.f32 0.0, %v375
      %v377 = vpop.f32.mrf.mxu0
      %v378 = vadd.f32 0.0, %v377
      %379 = vdwg.mxu0
      %v380 = vtanh.pop %v341
      %v381 = vtanh.pop %v343
      %v382 = vtanh.pop %v346
      %v383 = vtanh.pop %v348
      %v384 = vtanh.pop %v351
      %v385 = vtanh.pop %v353
      %v386 = vtanh.pop %v356
      %v387 = vtanh.pop %v358
      %v388 = vtanh.pop %v361
      %v389 = vtanh.pop %v363
      %v390 = vtanh.pop %v366
      %v391 = vtanh.pop %v368
      %v392 = vtanh.pop %v371
      %v393 = vtanh.pop %v373
      %v394 = vtanh.pop %v376
      %v395 = vtanh.pop %v378
      %v396 = vpack.c.bf16 %v380, %v380
      %v397 = vpack.c.bf16 %v381, %v381
      %v398 = vpack.c.bf16 %v382, %v382
      %v399 = vpack.c.bf16 %v383, %v383
      %v400 = vpack.c.bf16 %v384, %v384
      %v401 = vpack.c.bf16 %v385, %v385
      %v402 = vpack.c.bf16 %v386, %v386
      %v403 = vpack.c.bf16 %v387, %v387
      %v404 = vpack.c.bf16 %v388, %v388
      %v405 = vpack.c.bf16 %v389, %v389
      %v406 = vpack.c.bf16 %v390, %v390
      %v407 = vpack.c.bf16 %v391, %v391
      %v408 = vpack.c.bf16 %v392, %v392
      %v409 = vpack.c.bf16 %v393, %v393
      %v410 = vpack.c.bf16 %v394, %v394
      %v411 = vpack.c.bf16 %v395, %v395
      %412 = vst [vmem:[%s201] sm:$0xf] %v396
      %413 = vst [vmem:[%s201 + $0x4] sm:$0xf] %v397
      %414 = vst [vmem:[%s201 + $0x8] sm:$0xf] %v398
      %415 = vst [vmem:[%s201 + $0xc] sm:$0xf] %v399
      %416 = vst [vmem:[%s201 + $0x10] sm:$0xf] %v400
      %417 = vst [vmem:[%s201 + $0x14] sm:$0xf] %v401
      %418 = vst [vmem:[%s201 + $0x18] sm:$0xf] %v402
      %419 = vst [vmem:[%s201 + $0x1c] sm:$0xf] %v403
      %420 = vst [vmem:[%s201 + $0x20] sm:$0xf] %v404
      %421 = vst [vmem:[%s201 + $0x24] sm:$0xf] %v405
      %422 = vst [vmem:[%s201 + $0x28] sm:$0xf] %v406
      %423 = vst [vmem:[%s201 + $0x2c] sm:$0xf] %v407
      %424 = vst [vmem:[%s201 + $0x30] sm:$0xf] %v408
      %425 = vst [vmem:[%s201 + $0x34] sm:$0xf] %v409
      %426 = vst [vmem:[%s201 + $0x38] sm:$0xf] %v410
      %427 = vst [vmem:[%s201 + $0x3c] sm:$0xf] %v411
      %s428 = smul.u32 16, %s18
      %p429 = scmp.lt.s32.totalorder %s17, 3
      %s430 = scalar_select %p429, %s17, 3
      %p431 = scmp.lt.s32.totalorder %s428, 15
      %s432 = scalar_select %p431, %s428, 15
      %s433 = smul.addr %s430, 16
      %s434 = sadd.s32 %s432, %s433
      %s435 = smul.addr %s434, 4
      %s436 = scalar_lea.vmem %s2, %s435
      // Predicated region
      $region29: #{_lambda_.17} parent=27 // pred_check
        %p437 = pneg %p99
      $region30: #{_lambda_.17} parent=27 // pred_check_branch
        %439 = sbr.rel (%p437) target = $region32
      $region31: #{_lambda_.17} parent=27 // pred_region
        %s440 = smul.u32 16, %s18
      $region32: #{_lambda_.17} parent=27 // pred_fallthru
        _
    $region28: #{_lambda_.17} parent=5 // pred_fallthru
      _
    %p441 = scmp.le.s32.totalorder 2, %s8
    // Predicated region
    $region33: #{_lambda_.17} parent=5 // pred_check
      %p442 = pneg %p441
    $region34: #{_lambda_.17} parent=5 // pred_check_branch
      %444 = sbr.rel (%p442) target = $region36
    $region35: #{_lambda_.17} parent=5 // pred_region
      %s445 = ssub.s32 %s8, 2
      // Predicated region
      $region37: #{_lambda_.17} parent=35 // pred_check
        %p446 = pneg %p105
      $region38: #{_lambda_.17} parent=35 // pred_check_branch
        %448 = sbr.rel (%p446) target = $region40
      $region39: #{_lambda_.17} parent=35 // pred_region
        %s449 = smul.u32 16, %s20
        %p450 = scmp.lt.s32.totalorder %s19, 3
        %s451 = scalar_select %p450, %s19, 3
        %p452 = scmp.lt.s32.totalorder %s449, 15
        %s453 = scalar_select %p452, %s449, 15
        %s454 = smul.addr %s451, 16
        %s455 = sadd.s32 %s453, %s454
        %s456 = smul.addr %s455, 4
        %s457 = scalar_lea.vmem %s2, %s456
      $region40: #{_lambda_.17} parent=35 // pred_fallthru
        _
    $region36: #{_lambda_.17} parent=5 // pred_fallthru
      _
  $region6: #{_lambda_.17} parent=0 // loop_footer
    %s12 = sadd.s32 1, %s8
  $region7: #{_lambda_.17} parent=0 // loop_footer_branch
    %7 = sbr.rel target = $region3
  $region8: #{_lambda_.17} parent=0 // loop_exit
    _

</llo_original>
